<compile_context>
chip_gen: v7x
topology: tpu7x:2x2x1
jax: 0.10.0
libtpu: 0.0.40
codegen_flags: <defaults>
</compile_context>

<pallas_src>
import functools
import math

import jax
import jax.numpy as jnp
from jax.experimental import pallas as pl
from jax.experimental.pallas import tpu as pltpu


# ----------------------------- fused ISAB kernel -----------------------------

def _isab_fused_kernel(x_ref, i_ref,
                       wq0_ref, bq0_ref, wk0_ref, bk0_ref, wv0_ref, bv0_ref,
                       wo0_ref, bo0_ref,
                       wq1_ref, bq1_ref, wk1_ref, bk1_ref, wv1_ref, bv1_ref,
                       wo1_ref, bo1_ref,
                       out_ref, *, num_heads, dh, dh_pad, bblk, n, num_inds,
                       mxu_dtype):
    H = num_heads
    dVp = H * dh_pad
    f32 = jnp.float32
    cd = mxu_dtype                       # MXU input dtype (f32 or bf16)

    def mm(a, w):
        # merged 2-D matmul, f32 accumulation on the MXU
        return jnp.dot(a.astype(cd), w, preferred_element_type=f32)

    def split_heads(x2d):
        # merged (rows, H*dh_pad) -> head-major (H, rows, dh_pad); static lane slices
        return jnp.stack([x2d[:, h * dh_pad:(h + 1) * dh_pad] for h in range(H)],
                         axis=0)

    def merge_heads(xh):
        # head-major (H, rows, dh_pad) -> merged (rows, H*dh_pad)
        return jnp.concatenate([xh[h] for h in range(H)], axis=-1)

    def attn_residual(qh, kh, vh):
        # qh: (H, nq, dh_pad), kh/vh: (H, nk, dh_pad); K is pre-scaled by 1/sqrt(dim_V);
        # padded feature lanes are exactly zero so they contribute nothing.
        s = jnp.einsum('hqd,hkd->hqk', qh.astype(cd), kh.astype(cd),
                       preferred_element_type=f32)
        s = s - jnp.max(s, axis=-1, keepdims=True)
        e = jnp.exp(s)
        inv = pl.reciprocal(jnp.sum(e, axis=-1, keepdims=True), approx=False)  # EUP
        av = jnp.einsum('hqk,hkd->hqd', (e * inv).astype(cd), vh.astype(cd),
                        preferred_element_type=f32)
        return qh + av

    xf = x_ref[...].astype(f32)                                # (bblk*n, dim_in)

    # ---- slab-wide merged projections (full 128-lane width, >= bblk*n rows) ----
    k0 = mm(xf, wk0_ref[...]) + bk0_ref[...]                   # scale folded into wk0/bk0
    v0 = mm(xf, wv0_ref[...]) + bv0_ref[...]
    q1 = mm(xf, wq1_ref[...]) + bq1_ref[...]
    q0 = mm(i_ref[...].astype(f32), wq0_ref[...]) + bq0_ref[...]   # (num_inds, dVp)

    k0h, v0h, q1h = split_heads(k0), split_heads(v0), split_heads(q1)
    q0h = split_heads(q0)                                      # (H, num_inds, dh_pad)

    # ---- MAB0 attention per batch element (inducing-point queries are shared) ----
    o0h_parts = []
    for b in range(bblk):                      # tiny static unroll (bblk is capped)
        lo, hi = b * n, (b + 1) * n
        o0h_parts.append(attn_residual(q0h, k0h[:, lo:hi, :], v0h[:, lo:hi, :]))
    o0h = jnp.concatenate(o0h_parts, axis=1) if bblk > 1 else o0h_parts[0]
    o0 = merge_heads(o0h)                                      # (bblk*num_inds, dVp)

    # ---- MAB0 fc_o + residual and MAB1 K/V projections: one slab matmul each ----
    h_all = o0 + jnp.maximum(mm(o0, wo0_ref[...]) + bo0_ref[...], 0.0)
    k1 = mm(h_all, wk1_ref[...]) + bk1_ref[...]                # scale folded into wk1/bk1
    v1 = mm(h_all, wv1_ref[...]) + bv1_ref[...]
    k1h, v1h = split_heads(k1), split_heads(v1)                # (H, bblk*num_inds, dh_pad)

    # ---- MAB1 attention per batch element; H never leaves VMEM ----
    o1h_parts = []
    for b in range(bblk):
        qlo, qhi = b * n, (b + 1) * n
        klo, khi = b * num_inds, (b + 1) * num_inds
        o1h_parts.append(attn_residual(q1h[:, qlo:qhi, :],
                                       k1h[:, klo:khi, :], v1h[:, klo:khi, :]))
    o1h = jnp.concatenate(o1h_parts, axis=1) if bblk > 1 else o1h_parts[0]
    o1 = merge_heads(o1h)                                      # (bblk*n, dVp)

    out_p = o1 + jnp.maximum(mm(o1, wo1_ref[...]) + bo1_ref[...], 0.0)

    # strip the per-head padding in-kernel (no extra HBM de-pad pass in the wrapper)
    if dh_pad == dh:
        out_ref[...] = out_p.astype(out_ref.dtype)
    else:
        out_ref[...] = jnp.concatenate(
            [out_p[:, h * dh_pad:h * dh_pad + dh] for h in range(H)],
            axis=-1).astype(out_ref.dtype)


# ------------------------- parameter packing (wrapper) -------------------------
# Per-head feature padding: original head slice [h*dh:(h+1)*dh] lives at padded
# columns [h*dh_pad : h*dh_pad + dh]; all other padded columns are exactly zero.

def _merge_pack_proj(w, b, H, dh, dh_pad):
    # w: (din, H*dh) original layout -> (din, H*dh_pad) padded-merged; b likewise.
    din = w.shape[0]
    pad = dh_pad - dh
    wp = jnp.pad(w.reshape(din, H, dh), ((0, 0), (0, 0), (0, pad))).reshape(din, H * dh_pad)
    bp = jnp.pad(b.reshape(1, H, dh), ((0, 0), (0, 0), (0, pad))).reshape(1, H * dh_pad)
    return wp, bp


def _merge_pack_from_padded(w, b, H, dh, dh_pad):
    # w: (H*dh, H*dh) original layout; input rows arrive in padded-merged layout
    # inside the kernel -> (H*dh_pad, H*dh_pad) with zero pad rows/cols.
    pad = dh_pad - dh
    wp = jnp.pad(w.reshape(H, dh, H, dh),
                 ((0, 0), (0, pad), (0, 0), (0, pad))).reshape(H * dh_pad, H * dh_pad)
    bp = jnp.pad(b.reshape(1, H, dh), ((0, 0), (0, 0), (0, pad))).reshape(1, H * dh_pad)
    return wp, bp


def _pack_mab0(params, H, dh, dh_pad, scale, wdtype):
    wq, bq, wk, bk, wv, bv, wo, bo = params
    wqp, bqp = _merge_pack_proj(wq, bq, H, dh, dh_pad)
    wkp, bkp = _merge_pack_proj(wk * scale, bk * scale, H, dh, dh_pad)   # fold softmax scale
    wvp, bvp = _merge_pack_proj(wv, bv, H, dh, dh_pad)
    wop, bop = _merge_pack_from_padded(wo, bo, H, dh, dh_pad)
    return (wqp.astype(wdtype), bqp, wkp.astype(wdtype), bkp,
            wvp.astype(wdtype), bvp, wop.astype(wdtype), bop)


def _pack_mab1(params, H, dh, dh_pad, scale, wdtype):
    wq, bq, wk, bk, wv, bv, wo, bo = params
    wqp, bqp = _merge_pack_proj(wq, bq, H, dh, dh_pad)
    wkp, bkp = _merge_pack_from_padded(wk * scale, bk * scale, H, dh, dh_pad)
    wvp, bvp = _merge_pack_from_padded(wv, bv, H, dh, dh_pad)
    wop, bop = _merge_pack_from_padded(wo, bo, H, dh, dh_pad)
    return (wqp.astype(wdtype), bqp, wkp.astype(wdtype), bkp,
            wvp.astype(wdtype), bvp, wop.astype(wdtype), bop)


# --------------------------- bblk / VMEM budgeting ---------------------------

def _vmem_est_bytes(bblk, n, num_inds, dim_in, dVp):
    rows, irows = bblk * n, bblk * num_inds
    slab_io = 2 * rows * (dim_in + dVp)          # double-buffered pipelined in/out (approx)
    temps = 6 * rows * dVp + 6 * irows * dVp     # k0,v0,q1,o1h,o1,out_p / q0,o0,h,k1,v1,...
    return 4 * (slab_io + temps)


def _pick_bblk(B, n, num_inds, dim_in, dVp, *, min_steps=2, max_bblk=8,
               budget_bytes=24 << 20):
    # Largest divisor of B that (a) keeps >= min_steps grid steps (>=2/TC on v7x),
    # (b) fits the VMEM budget, (c) keeps the static per-b unroll tiny.
    best = 1
    for cand in range(1, min(B, max_bblk) + 1):
        if B % cand != 0 or B // cand < min_steps:
            continue
        if _vmem_est_bytes(cand, n, num_inds, dim_in, dVp) > budget_bytes:
            continue
        best = cand
    return best


# ----------------------------- Pallas wrapper -----------------------------

def isab_pallas(X, I, mab0_params, mab1_params, num_heads, *,
                bblk=None, min_steps=2, mxu_dtype=jnp.float32):
    B, N, dim_in = X.shape
    num_inds, dim_out = I.shape
    dim_V = dim_out
    assert dim_V % num_heads == 0
    dh = dim_V // num_heads
    dh_pad = max(dh, -(-128 // num_heads))       # lane-dense padded head width
    dVp = num_heads * dh_pad
    scale = 1.0 / math.sqrt(dim_V)               # PyTorch code scales by sqrt(dim_V)

    p0 = _pack_mab0(mab0_params, num_heads, dh, dh_pad, scale, mxu_dtype)
    p1 = _pack_mab1(mab1_params, num_heads, dh, dh_pad, scale, mxu_dtype)

    if bblk is None:
        bblk = _pick_bblk(B, N, num_inds, dim_in, dVp, min_steps=min_steps)
    assert B % bblk == 0
    grid = (B // bblk,)

    # VMEM limit derived from the slab estimate + double-buffered weights; capped at
    # 64 MiB so the same setting is safe on v7x (raise further on v5e/v6e if needed).
    est = _vmem_est_bytes(bblk, N, num_inds, dim_in, dVp)
    wbytes = 2 * 4 * sum(int(p.size) for p in (*p0, *p1))
    vmem_limit = int(min(64 << 20, max(32 << 20, 2 * (est + wbytes))))

    kernel = functools.partial(
        _isab_fused_kernel, num_heads=num_heads, dh=dh, dh_pad=dh_pad,
        bblk=bblk, n=N, num_inds=num_inds, mxu_dtype=mxu_dtype)

    def _const_spec(shape):
        nd = len(shape)
        return pl.BlockSpec(shape, lambda i, _nd=nd: (0,) * _nd)

    X2 = X.reshape(B * N, dim_in)                # 2-D slab view of the input

    out2 = pl.pallas_call(
        kernel,
        out_shape=jax.ShapeDtypeStruct((B * N, dim_V), X.dtype),
        grid=grid,
        in_specs=[pl.BlockSpec((bblk * N, dim_in), lambda i: (i, 0)),
                  _const_spec(I.shape)]
                 + [_const_spec(p.shape) for p in p0]
                 + [_const_spec(p.shape) for p in p1],
        out_specs=pl.BlockSpec((bblk * N, dim_V), lambda i: (i, 0)),
        compiler_params=pltpu.CompilerParams(
            dimension_semantics=("parallel",),
            vmem_limit_bytes=vmem_limit),
    )(X2, I, *p0, *p1)

    return out2.reshape(B, N, dim_V)


# ----------------------------- parameter setup -----------------------------

def _init_linear(key, dim_in, dim_out):
    kw, kb = jax.random.split(key)
    bound = 1.0 / math.sqrt(dim_in)
    w = jax.random.uniform(kw, (dim_in, dim_out), jnp.float32, -bound, bound)  # W^T
    b = jax.random.uniform(kb, (1, dim_out), jnp.float32, -bound, bound)
    return w, b


def init_mab_params(key, dim_Q, dim_K, dim_V):
    k0, k1, k2, k3 = jax.random.split(key, 4)
    wq, bq = _init_linear(k0, dim_Q, dim_V)
    wk, bk = _init_linear(k1, dim_K, dim_V)
    wv, bv = _init_linear(k2, dim_K, dim_V)
    wo, bo = _init_linear(k3, dim_V, dim_V)
    return (wq, bq, wk, bk, wv, bv, wo, bo)


def init_isab_params(key, dim_in, dim_out, num_inds):
    ki, k0, k1 = jax.random.split(key, 3)
    bound = math.sqrt(6.0 / (num_inds + dim_out))       # xavier_uniform for I
    I = jax.random.uniform(ki, (num_inds, dim_out), jnp.float32, -bound, bound)
    mab0 = init_mab_params(k0, dim_out, dim_in, dim_out)
    mab1 = init_mab_params(k1, dim_in, dim_out, dim_out)
    return I, mab0, mab1


# ----------------------------- pure-JAX reference -----------------------------

def _mab_ref(xq, xk, params, num_heads):
    wq, bq, wk, bk, wv, bv, wo, bo = params
    dim_V = wq.shape[1]
    Q = xq @ wq + bq
    K = xk @ wk + bk
    V = xk @ wv + bv
    Q_ = jnp.concatenate(jnp.split(Q, num_heads, axis=2), axis=0)
    K_ = jnp.concatenate(jnp.split(K, num_heads, axis=2), axis=0)
    V_ = jnp.concatenate(jnp.split(V, num_heads, axis=2), axis=0)
    A = jax.nn.softmax(Q_ @ jnp.swapaxes(K_, 1, 2) / math.sqrt(dim_V), axis=2)
    O = jnp.concatenate(jnp.split(Q_ + A @ V_, num_heads, axis=0), axis=2)
    return O + jax.nn.relu(O @ wo + bo)


def _isab_ref(X, I, mab0_params, mab1_params, num_heads):
    B = X.shape[0]
    I_rep = jnp.broadcast_to(I[None], (B,) + I.shape)
    H = _mab_ref(I_rep, X, mab0_params, num_heads)
    return _mab_ref(X, H, mab1_params, num_heads)


# ----------------------------- main -----------------------------

if __name__ == "__main__":
    # small shapes consistent with ISAB(dim_in, dim_out, num_heads, num_inds)
    B, N = 4, 32
    dim_in, dim_out = 8, 32
    num_heads, num_inds = 4, 16

    key = jax.random.PRNGKey(0)
    kx, kp = jax.random.split(key)
    X = jax.random.normal(kx, (B, N, dim_in), jnp.float32)

    I, mab0_params, mab1_params = init_isab_params(kp, dim_in, dim_out, num_inds)

    # f32 MXU inputs for the accuracy check; pass mxu_dtype=jnp.bfloat16 on v6e/v7x.
    out = isab_pallas(X, I, mab0_params, mab1_params, num_heads)
    out = jax.block_until_ready(out)

    ref = _isab_ref(X, I, mab0_params, mab1_params, num_heads)
    assert out.shape == (B, N, dim_out), out.shape
    # tolerance covers TPU default f32-matmul (bf16-pass) rounding differences between
    # the fused-kernel contraction order and the reference; the softmax reciprocal is exact.
    assert jnp.allclose(out, ref, atol=2e-2, rtol=2e-2), (
        float(jnp.max(jnp.abs(out - ref))))

    print("KERNEL_OK")
</pallas_src>

<mosaic_0001>
module attributes {stable_mosaic.version = 11 : i64} {
  func.func @_isab_fused_kernel(%arg0: i32, %arg1: memref<64x8xf32, #tpu.memory_space<vmem>>, %arg2: memref<16x32xf32, #tpu.memory_space<vmem>>, %arg3: memref<32x128xf32, #tpu.memory_space<vmem>>, %arg4: memref<1x128xf32, #tpu.memory_space<vmem>>, %arg5: memref<8x128xf32, #tpu.memory_space<vmem>>, %arg6: memref<1x128xf32, #tpu.memory_space<vmem>>, %arg7: memref<8x128xf32, #tpu.memory_space<vmem>>, %arg8: memref<1x128xf32, #tpu.memory_space<vmem>>, %arg9: memref<128x128xf32, #tpu.memory_space<vmem>>, %arg10: memref<1x128xf32, #tpu.memory_space<vmem>>, %arg11: memref<8x128xf32, #tpu.memory_space<vmem>>, %arg12: memref<1x128xf32, #tpu.memory_space<vmem>>, %arg13: memref<128x128xf32, #tpu.memory_space<vmem>>, %arg14: memref<1x128xf32, #tpu.memory_space<vmem>>, %arg15: memref<128x128xf32, #tpu.memory_space<vmem>>, %arg16: memref<1x128xf32, #tpu.memory_space<vmem>>, %arg17: memref<128x128xf32, #tpu.memory_space<vmem>>, %arg18: memref<1x128xf32, #tpu.memory_space<vmem>>, %arg19: memref<64x32xf32, #tpu.memory_space<vmem>>) attributes {dimension_semantics = [#tpu.dimension_semantics<parallel>], iteration_bounds = array<i64: 2>, scalar_prefetch = 0 : i64, scratch_operands = 0 : i64, tpu.core_type = #tpu.core_type<tc>, window_params = [{transform_indices = @transform_0, window_bounds = array<i64: 64, 8>}, {pipeline_mode = #tpu.pipeline_mode<synchronous>, transform_indices = @transform_1, window_bounds = array<i64: 16, 32>}, {pipeline_mode = #tpu.pipeline_mode<synchronous>, transform_indices = @transform_2, window_bounds = array<i64: 32, 128>}, {pipeline_mode = #tpu.pipeline_mode<synchronous>, transform_indices = @transform_3, window_bounds = array<i64: 1, 128>}, {pipeline_mode = #tpu.pipeline_mode<synchronous>, transform_indices = @transform_4, window_bounds = array<i64: 8, 128>}, {pipeline_mode = #tpu.pipeline_mode<synchronous>, transform_indices = @transform_5, window_bounds = array<i64: 1, 128>}, {pipeline_mode = #tpu.pipeline_mode<synchronous>, transform_indices = @transform_6, window_bounds = array<i64: 8, 128>}, {pipeline_mode = #tpu.pipeline_mode<synchronous>, transform_indices = @transform_7, window_bounds = array<i64: 1, 128>}, {pipeline_mode = #tpu.pipeline_mode<synchronous>, transform_indices = @transform_8, window_bounds = array<i64: 128, 128>}, {pipeline_mode = #tpu.pipeline_mode<synchronous>, transform_indices = @transform_9, window_bounds = array<i64: 1, 128>}, {pipeline_mode = #tpu.pipeline_mode<synchronous>, transform_indices = @transform_10, window_bounds = array<i64: 8, 128>}, {pipeline_mode = #tpu.pipeline_mode<synchronous>, transform_indices = @transform_11, window_bounds = array<i64: 1, 128>}, {pipeline_mode = #tpu.pipeline_mode<synchronous>, transform_indices = @transform_12, window_bounds = array<i64: 128, 128>}, {pipeline_mode = #tpu.pipeline_mode<synchronous>, transform_indices = @transform_13, window_bounds = array<i64: 1, 128>}, {pipeline_mode = #tpu.pipeline_mode<synchronous>, transform_indices = @transform_14, window_bounds = array<i64: 128, 128>}, {pipeline_mode = #tpu.pipeline_mode<synchronous>, transform_indices = @transform_15, window_bounds = array<i64: 1, 128>}, {pipeline_mode = #tpu.pipeline_mode<synchronous>, transform_indices = @transform_16, window_bounds = array<i64: 128, 128>}, {pipeline_mode = #tpu.pipeline_mode<synchronous>, transform_indices = @transform_17, window_bounds = array<i64: 1, 128>}, {transform_indices = @transform_18, window_bounds = array<i64: 64, 32>}]} {
    %c0 = arith.constant 0 : index
    %c0_0 = arith.constant 0 : index
    %0 = vector.load %arg1[%c0, %c0_0] : memref<64x8xf32, #tpu.memory_space<vmem>>, vector<64x8xf32>
    %c0_1 = arith.constant 0 : index
    %c0_2 = arith.constant 0 : index
    %1 = vector.load %arg5[%c0_1, %c0_2] : memref<8x128xf32, #tpu.memory_space<vmem>>, vector<8x128xf32>
    %cst = arith.constant dense<0.000000e+00> : vector<64x128xf32>
    %2 = tpu.matmul %0, %1, %cst {dimension_numbers = #tpu.dot_dimension_numbers<[1], [0], [0], [1], [0, 0, 1, 1], [], []>} : vector<64x8xf32>, vector<8x128xf32>, vector<64x128xf32> -> vector<64x128xf32>
    %c0_3 = arith.constant 0 : index
    %c0_4 = arith.constant 0 : index
    %3 = vector.load %arg6[%c0_3, %c0_4] : memref<1x128xf32, #tpu.memory_space<vmem>>, vector<1x128xf32>
    %4 = vector.broadcast %3 : vector<1x128xf32> to vector<64x128xf32>
    %5 = arith.addf %2, %4 : vector<64x128xf32>
    %c0_5 = arith.constant 0 : index
    %c0_6 = arith.constant 0 : index
    %6 = vector.load %arg7[%c0_5, %c0_6] : memref<8x128xf32, #tpu.memory_space<vmem>>, vector<8x128xf32>
    %cst_7 = arith.constant dense<0.000000e+00> : vector<64x128xf32>
    %7 = tpu.matmul %0, %6, %cst_7 {dimension_numbers = #tpu.dot_dimension_numbers<[1], [0], [0], [1], [0, 0, 1, 1], [], []>} : vector<64x8xf32>, vector<8x128xf32>, vector<64x128xf32> -> vector<64x128xf32>
    %c0_8 = arith.constant 0 : index
    %c0_9 = arith.constant 0 : index
    %8 = vector.load %arg8[%c0_8, %c0_9] : memref<1x128xf32, #tpu.memory_space<vmem>>, vector<1x128xf32>
    %9 = vector.broadcast %8 : vector<1x128xf32> to vector<64x128xf32>
    %10 = arith.addf %7, %9 : vector<64x128xf32>
    %c0_10 = arith.constant 0 : index
    %c0_11 = arith.constant 0 : index
    %11 = vector.load %arg11[%c0_10, %c0_11] : memref<8x128xf32, #tpu.memory_space<vmem>>, vector<8x128xf32>
    %cst_12 = arith.constant dense<0.000000e+00> : vector<64x128xf32>
    %12 = tpu.matmul %0, %11, %cst_12 {dimension_numbers = #tpu.dot_dimension_numbers<[1], [0], [0], [1], [0, 0, 1, 1], [], []>} : vector<64x8xf32>, vector<8x128xf32>, vector<64x128xf32> -> vector<64x128xf32>
    %c0_13 = arith.constant 0 : index
    %c0_14 = arith.constant 0 : index
    %13 = vector.load %arg12[%c0_13, %c0_14] : memref<1x128xf32, #tpu.memory_space<vmem>>, vector<1x128xf32>
    %14 = vector.broadcast %13 : vector<1x128xf32> to vector<64x128xf32>
    %15 = arith.addf %12, %14 : vector<64x128xf32>
    %c0_15 = arith.constant 0 : index
    %c0_16 = arith.constant 0 : index
    %16 = vector.load %arg2[%c0_15, %c0_16] : memref<16x32xf32, #tpu.memory_space<vmem>>, vector<16x32xf32>
    %c0_17 = arith.constant 0 : index
    %c0_18 = arith.constant 0 : index
    %17 = vector.load %arg3[%c0_17, %c0_18] : memref<32x128xf32, #tpu.memory_space<vmem>>, vector<32x128xf32>
    %cst_19 = arith.constant dense<0.000000e+00> : vector<16x128xf32>
    %18 = tpu.matmul %16, %17, %cst_19 {dimension_numbers = #tpu.dot_dimension_numbers<[1], [0], [0], [1], [0, 0, 1, 1], [], []>} : vector<16x32xf32>, vector<32x128xf32>, vector<16x128xf32> -> vector<16x128xf32>
    %c0_20 = arith.constant 0 : index
    %c0_21 = arith.constant 0 : index
    %19 = vector.load %arg4[%c0_20, %c0_21] : memref<1x128xf32, #tpu.memory_space<vmem>>, vector<1x128xf32>
    %20 = vector.broadcast %19 : vector<1x128xf32> to vector<16x128xf32>
    %21 = arith.addf %18, %20 : vector<16x128xf32>
    %22 = vector.extract_strided_slice %5 {offsets = [0, 0], sizes = [64, 32], strides = [1, 1]} : vector<64x128xf32> to vector<64x32xf32>
    %23 = vector.extract_strided_slice %5 {offsets = [0, 32], sizes = [64, 32], strides = [1, 1]} : vector<64x128xf32> to vector<64x32xf32>
    %24 = vector.extract_strided_slice %5 {offsets = [0, 64], sizes = [64, 32], strides = [1, 1]} : vector<64x128xf32> to vector<64x32xf32>
    %25 = vector.extract_strided_slice %5 {offsets = [0, 96], sizes = [64, 32], strides = [1, 1]} : vector<64x128xf32> to vector<64x32xf32>
    %26 = vector.shape_cast %22 : vector<64x32xf32> to vector<1x64x32xf32>
    %27 = vector.shape_cast %23 : vector<64x32xf32> to vector<1x64x32xf32>
    %28 = vector.shape_cast %24 : vector<64x32xf32> to vector<1x64x32xf32>
    %29 = vector.shape_cast %25 : vector<64x32xf32> to vector<1x64x32xf32>
    %30 = tpu.concatenate %26, %27, %28, %29 in 0 : vector<1x64x32xf32>, vector<1x64x32xf32>, vector<1x64x32xf32>, vector<1x64x32xf32> -> vector<4x64x32xf32>
    %31 = vector.extract_strided_slice %10 {offsets = [0, 0], sizes = [64, 32], strides = [1, 1]} : vector<64x128xf32> to vector<64x32xf32>
    %32 = vector.extract_strided_slice %10 {offsets = [0, 32], sizes = [64, 32], strides = [1, 1]} : vector<64x128xf32> to vector<64x32xf32>
    %33 = vector.extract_strided_slice %10 {offsets = [0, 64], sizes = [64, 32], strides = [1, 1]} : vector<64x128xf32> to vector<64x32xf32>
    %34 = vector.extract_strided_slice %10 {offsets = [0, 96], sizes = [64, 32], strides = [1, 1]} : vector<64x128xf32> to vector<64x32xf32>
    %35 = vector.shape_cast %31 : vector<64x32xf32> to vector<1x64x32xf32>
    %36 = vector.shape_cast %32 : vector<64x32xf32> to vector<1x64x32xf32>
    %37 = vector.shape_cast %33 : vector<64x32xf32> to vector<1x64x32xf32>
    %38 = vector.shape_cast %34 : vector<64x32xf32> to vector<1x64x32xf32>
    %39 = tpu.concatenate %35, %36, %37, %38 in 0 : vector<1x64x32xf32>, vector<1x64x32xf32>, vector<1x64x32xf32>, vector<1x64x32xf32> -> vector<4x64x32xf32>
    %40 = vector.extract_strided_slice %15 {offsets = [0, 0], sizes = [64, 32], strides = [1, 1]} : vector<64x128xf32> to vector<64x32xf32>
    %41 = vector.extract_strided_slice %15 {offsets = [0, 32], sizes = [64, 32], strides = [1, 1]} : vector<64x128xf32> to vector<64x32xf32>
    %42 = vector.extract_strided_slice %15 {offsets = [0, 64], sizes = [64, 32], strides = [1, 1]} : vector<64x128xf32> to vector<64x32xf32>
    %43 = vector.extract_strided_slice %15 {offsets = [0, 96], sizes = [64, 32], strides = [1, 1]} : vector<64x128xf32> to vector<64x32xf32>
    %44 = vector.shape_cast %40 : vector<64x32xf32> to vector<1x64x32xf32>
    %45 = vector.shape_cast %41 : vector<64x32xf32> to vector<1x64x32xf32>
    %46 = vector.shape_cast %42 : vector<64x32xf32> to vector<1x64x32xf32>
    %47 = vector.shape_cast %43 : vector<64x32xf32> to vector<1x64x32xf32>
    %48 = tpu.concatenate %44, %45, %46, %47 in 0 : vector<1x64x32xf32>, vector<1x64x32xf32>, vector<1x64x32xf32>, vector<1x64x32xf32> -> vector<4x64x32xf32>
    %49 = vector.extract_strided_slice %21 {offsets = [0, 0], sizes = [16, 32], strides = [1, 1]} : vector<16x128xf32> to vector<16x32xf32>
    %50 = vector.extract_strided_slice %21 {offsets = [0, 32], sizes = [16, 32], strides = [1, 1]} : vector<16x128xf32> to vector<16x32xf32>
    %51 = vector.extract_strided_slice %21 {offsets = [0, 64], sizes = [16, 32], strides = [1, 1]} : vector<16x128xf32> to vector<16x32xf32>
    %52 = vector.extract_strided_slice %21 {offsets = [0, 96], sizes = [16, 32], strides = [1, 1]} : vector<16x128xf32> to vector<16x32xf32>
    %53 = vector.shape_cast %49 : vector<16x32xf32> to vector<1x16x32xf32>
    %54 = vector.shape_cast %50 : vector<16x32xf32> to vector<1x16x32xf32>
    %55 = vector.shape_cast %51 : vector<16x32xf32> to vector<1x16x32xf32>
    %56 = vector.shape_cast %52 : vector<16x32xf32> to vector<1x16x32xf32>
    %57 = tpu.concatenate %53, %54, %55, %56 in 0 : vector<1x16x32xf32>, vector<1x16x32xf32>, vector<1x16x32xf32>, vector<1x16x32xf32> -> vector<4x16x32xf32>
    %58 = vector.extract_strided_slice %30 {offsets = [0, 0, 0], sizes = [4, 32, 32], strides = [1, 1, 1]} : vector<4x64x32xf32> to vector<4x32x32xf32>
    %59 = vector.extract_strided_slice %39 {offsets = [0, 0, 0], sizes = [4, 32, 32], strides = [1, 1, 1]} : vector<4x64x32xf32> to vector<4x32x32xf32>
    "tpu.trace_start"() <{level = 10 : i32, message = "hqd,hkd->hqk"}> : () -> ()
    %cst_22 = arith.constant dense<0.000000e+00> : vector<4x16x32xf32>
    %60 = tpu.matmul %57, %58, %cst_22 {dimension_numbers = #tpu.dot_dimension_numbers<[2], [2], [1], [1], [0, 0, 0, 1, 1, 1], [0], [0]>} : vector<4x16x32xf32>, vector<4x32x32xf32>, vector<4x16x32xf32> -> vector<4x16x32xf32>
    "tpu.trace_stop"() : () -> ()
    %cst_23 = arith.constant dense<0xFF800000> : vector<4x16xf32>
    %61 = vector.multi_reduction <maximumf>, %60, %cst_23 [2] : vector<4x16x32xf32> to vector<4x16xf32>
    %62 = vector.shape_cast %61 : vector<4x16xf32> to vector<4x16x1xf32>
    %63 = vector.broadcast %62 : vector<4x16x1xf32> to vector<4x16x32xf32>
    %64 = arith.subf %60, %63 : vector<4x16x32xf32>
    %65 = math.exp %64 : vector<4x16x32xf32>
    %cst_24 = arith.constant dense<0.000000e+00> : vector<4x16xf32>
    %66 = vector.multi_reduction <add>, %65, %cst_24 [2] : vector<4x16x32xf32> to vector<4x16xf32>
    %67 = vector.shape_cast %66 : vector<4x16xf32> to vector<4x16x1xf32>
    %68 = tpu.reciprocal %67 : vector<4x16x1xf32> -> vector<4x16x1xf32>
    %69 = vector.broadcast %68 : vector<4x16x1xf32> to vector<4x16x32xf32>
    %70 = arith.mulf %65, %69 : vector<4x16x32xf32>
    "tpu.trace_start"() <{level = 10 : i32, message = "hqk,hkd->hqd"}> : () -> ()
    %cst_25 = arith.constant dense<0.000000e+00> : vector<4x16x32xf32>
    %71 = tpu.matmul %70, %59, %cst_25 {dimension_numbers = #tpu.dot_dimension_numbers<[2], [1], [1], [2], [0, 0, 0, 1, 1, 2], [0], [0]>} : vector<4x16x32xf32>, vector<4x32x32xf32>, vector<4x16x32xf32> -> vector<4x16x32xf32>
    "tpu.trace_stop"() : () -> ()
    %72 = arith.addf %57, %71 : vector<4x16x32xf32>
    %73 = vector.extract_strided_slice %30 {offsets = [0, 32, 0], sizes = [4, 32, 32], strides = [1, 1, 1]} : vector<4x64x32xf32> to vector<4x32x32xf32>
    %74 = vector.extract_strided_slice %39 {offsets = [0, 32, 0], sizes = [4, 32, 32], strides = [1, 1, 1]} : vector<4x64x32xf32> to vector<4x32x32xf32>
    "tpu.trace_start"() <{level = 10 : i32, message = "hqd,hkd->hqk"}> : () -> ()
    %cst_26 = arith.constant dense<0.000000e+00> : vector<4x16x32xf32>
    %75 = tpu.matmul %57, %73, %cst_26 {dimension_numbers = #tpu.dot_dimension_numbers<[2], [2], [1], [1], [0, 0, 0, 1, 1, 1], [0], [0]>} : vector<4x16x32xf32>, vector<4x32x32xf32>, vector<4x16x32xf32> -> vector<4x16x32xf32>
    "tpu.trace_stop"() : () -> ()
    %cst_27 = arith.constant dense<0xFF800000> : vector<4x16xf32>
    %76 = vector.multi_reduction <maximumf>, %75, %cst_27 [2] : vector<4x16x32xf32> to vector<4x16xf32>
    %77 = vector.shape_cast %76 : vector<4x16xf32> to vector<4x16x1xf32>
    %78 = vector.broadcast %77 : vector<4x16x1xf32> to vector<4x16x32xf32>
    %79 = arith.subf %75, %78 : vector<4x16x32xf32>
    %80 = math.exp %79 : vector<4x16x32xf32>
    %cst_28 = arith.constant dense<0.000000e+00> : vector<4x16xf32>
    %81 = vector.multi_reduction <add>, %80, %cst_28 [2] : vector<4x16x32xf32> to vector<4x16xf32>
    %82 = vector.shape_cast %81 : vector<4x16xf32> to vector<4x16x1xf32>
    %83 = tpu.reciprocal %82 : vector<4x16x1xf32> -> vector<4x16x1xf32>
    %84 = vector.broadcast %83 : vector<4x16x1xf32> to vector<4x16x32xf32>
    %85 = arith.mulf %80, %84 : vector<4x16x32xf32>
    "tpu.trace_start"() <{level = 10 : i32, message = "hqk,hkd->hqd"}> : () -> ()
    %cst_29 = arith.constant dense<0.000000e+00> : vector<4x16x32xf32>
    %86 = tpu.matmul %85, %74, %cst_29 {dimension_numbers = #tpu.dot_dimension_numbers<[2], [1], [1], [2], [0, 0, 0, 1, 1, 2], [0], [0]>} : vector<4x16x32xf32>, vector<4x32x32xf32>, vector<4x16x32xf32> -> vector<4x16x32xf32>
    "tpu.trace_stop"() : () -> ()
    %87 = arith.addf %57, %86 : vector<4x16x32xf32>
    %88 = tpu.concatenate %72, %87 in 1 : vector<4x16x32xf32>, vector<4x16x32xf32> -> vector<4x32x32xf32>
    %89 = vector.extract_strided_slice %88 {offsets = [0, 0, 0], sizes = [1, 32, 32], strides = [1, 1, 1]} : vector<4x32x32xf32> to vector<1x32x32xf32>
    %90 = vector.shape_cast %89 : vector<1x32x32xf32> to vector<32x32xf32>
    %91 = vector.extract_strided_slice %88 {offsets = [1, 0, 0], sizes = [1, 32, 32], strides = [1, 1, 1]} : vector<4x32x32xf32> to vector<1x32x32xf32>
    %92 = vector.shape_cast %91 : vector<1x32x32xf32> to vector<32x32xf32>
    %93 = vector.extract_strided_slice %88 {offsets = [2, 0, 0], sizes = [1, 32, 32], strides = [1, 1, 1]} : vector<4x32x32xf32> to vector<1x32x32xf32>
    %94 = vector.shape_cast %93 : vector<1x32x32xf32> to vector<32x32xf32>
    %95 = vector.extract_strided_slice %88 {offsets = [3, 0, 0], sizes = [1, 32, 32], strides = [1, 1, 1]} : vector<4x32x32xf32> to vector<1x32x32xf32>
    %96 = vector.shape_cast %95 : vector<1x32x32xf32> to vector<32x32xf32>
    %97 = tpu.concatenate %90, %92, %94, %96 in 1 : vector<32x32xf32>, vector<32x32xf32>, vector<32x32xf32>, vector<32x32xf32> -> vector<32x128xf32>
    %c0_30 = arith.constant 0 : index
    %c0_31 = arith.constant 0 : index
    %98 = vector.load %arg9[%c0_30, %c0_31] : memref<128x128xf32, #tpu.memory_space<vmem>>, vector<128x128xf32>
    %cst_32 = arith.constant dense<0.000000e+00> : vector<32x128xf32>
    %99 = tpu.matmul %97, %98, %cst_32 {dimension_numbers = #tpu.dot_dimension_numbers<[1], [0], [0], [1], [0, 0, 1, 1], [], []>} : vector<32x128xf32>, vector<128x128xf32>, vector<32x128xf32> -> vector<32x128xf32>
    %c0_33 = arith.constant 0 : index
    %c0_34 = arith.constant 0 : index
    %100 = vector.load %arg10[%c0_33, %c0_34] : memref<1x128xf32, #tpu.memory_space<vmem>>, vector<1x128xf32>
    %101 = vector.broadcast %100 : vector<1x128xf32> to vector<32x128xf32>
    %102 = arith.addf %99, %101 : vector<32x128xf32>
    %cst_35 = arith.constant 0.000000e+00 : f32
    %103 = vector.broadcast %cst_35 : f32 to vector<32x128xf32>
    %104 = arith.maximumf %102, %103 : vector<32x128xf32>
    %105 = arith.addf %97, %104 : vector<32x128xf32>
    %c0_36 = arith.constant 0 : index
    %c0_37 = arith.constant 0 : index
    %106 = vector.load %arg13[%c0_36, %c0_37] : memref<128x128xf32, #tpu.memory_space<vmem>>, vector<128x128xf32>
    %cst_38 = arith.constant dense<0.000000e+00> : vector<32x128xf32>
    %107 = tpu.matmul %105, %106, %cst_38 {dimension_numbers = #tpu.dot_dimension_numbers<[1], [0], [0], [1], [0, 0, 1, 1], [], []>} : vector<32x128xf32>, vector<128x128xf32>, vector<32x128xf32> -> vector<32x128xf32>
    %c0_39 = arith.constant 0 : index
    %c0_40 = arith.constant 0 : index
    %108 = vector.load %arg14[%c0_39, %c0_40] : memref<1x128xf32, #tpu.memory_space<vmem>>, vector<1x128xf32>
    %109 = vector.broadcast %108 : vector<1x128xf32> to vector<32x128xf32>
    %110 = arith.addf %107, %109 : vector<32x128xf32>
    %c0_41 = arith.constant 0 : index
    %c0_42 = arith.constant 0 : index
    %111 = vector.load %arg15[%c0_41, %c0_42] : memref<128x128xf32, #tpu.memory_space<vmem>>, vector<128x128xf32>
    %cst_43 = arith.constant dense<0.000000e+00> : vector<32x128xf32>
    %112 = tpu.matmul %105, %111, %cst_43 {dimension_numbers = #tpu.dot_dimension_numbers<[1], [0], [0], [1], [0, 0, 1, 1], [], []>} : vector<32x128xf32>, vector<128x128xf32>, vector<32x128xf32> -> vector<32x128xf32>
    %c0_44 = arith.constant 0 : index
    %c0_45 = arith.constant 0 : index
    %113 = vector.load %arg16[%c0_44, %c0_45] : memref<1x128xf32, #tpu.memory_space<vmem>>, vector<1x128xf32>
    %114 = vector.broadcast %113 : vector<1x128xf32> to vector<32x128xf32>
    %115 = arith.addf %112, %114 : vector<32x128xf32>
    %116 = vector.extract_strided_slice %110 {offsets = [0, 0], sizes = [32, 32], strides = [1, 1]} : vector<32x128xf32> to vector<32x32xf32>
    %117 = vector.extract_strided_slice %110 {offsets = [0, 32], sizes = [32, 32], strides = [1, 1]} : vector<32x128xf32> to vector<32x32xf32>
    %118 = vector.extract_strided_slice %110 {offsets = [0, 64], sizes = [32, 32], strides = [1, 1]} : vector<32x128xf32> to vector<32x32xf32>
    %119 = vector.extract_strided_slice %110 {offsets = [0, 96], sizes = [32, 32], strides = [1, 1]} : vector<32x128xf32> to vector<32x32xf32>
    %120 = vector.shape_cast %116 : vector<32x32xf32> to vector<1x32x32xf32>
    %121 = vector.shape_cast %117 : vector<32x32xf32> to vector<1x32x32xf32>
    %122 = vector.shape_cast %118 : vector<32x32xf32> to vector<1x32x32xf32>
    %123 = vector.shape_cast %119 : vector<32x32xf32> to vector<1x32x32xf32>
    %124 = tpu.concatenate %120, %121, %122, %123 in 0 : vector<1x32x32xf32>, vector<1x32x32xf32>, vector<1x32x32xf32>, vector<1x32x32xf32> -> vector<4x32x32xf32>
    %125 = vector.extract_strided_slice %115 {offsets = [0, 0], sizes = [32, 32], strides = [1, 1]} : vector<32x128xf32> to vector<32x32xf32>
    %126 = vector.extract_strided_slice %115 {offsets = [0, 32], sizes = [32, 32], strides = [1, 1]} : vector<32x128xf32> to vector<32x32xf32>
    %127 = vector.extract_strided_slice %115 {offsets = [0, 64], sizes = [32, 32], strides = [1, 1]} : vector<32x128xf32> to vector<32x32xf32>
    %128 = vector.extract_strided_slice %115 {offsets = [0, 96], sizes = [32, 32], strides = [1, 1]} : vector<32x128xf32> to vector<32x32xf32>
    %129 = vector.shape_cast %125 : vector<32x32xf32> to vector<1x32x32xf32>
    %130 = vector.shape_cast %126 : vector<32x32xf32> to vector<1x32x32xf32>
    %131 = vector.shape_cast %127 : vector<32x32xf32> to vector<1x32x32xf32>
    %132 = vector.shape_cast %128 : vector<32x32xf32> to vector<1x32x32xf32>
    %133 = tpu.concatenate %129, %130, %131, %132 in 0 : vector<1x32x32xf32>, vector<1x32x32xf32>, vector<1x32x32xf32>, vector<1x32x32xf32> -> vector<4x32x32xf32>
    %134 = vector.extract_strided_slice %48 {offsets = [0, 0, 0], sizes = [4, 32, 32], strides = [1, 1, 1]} : vector<4x64x32xf32> to vector<4x32x32xf32>
    %135 = vector.extract_strided_slice %124 {offsets = [0, 0, 0], sizes = [4, 16, 32], strides = [1, 1, 1]} : vector<4x32x32xf32> to vector<4x16x32xf32>
    %136 = vector.extract_strided_slice %133 {offsets = [0, 0, 0], sizes = [4, 16, 32], strides = [1, 1, 1]} : vector<4x32x32xf32> to vector<4x16x32xf32>
    "tpu.trace_start"() <{level = 10 : i32, message = "hqd,hkd->hqk"}> : () -> ()
    %cst_46 = arith.constant dense<0.000000e+00> : vector<4x32x16xf32>
    %137 = tpu.matmul %134, %135, %cst_46 {dimension_numbers = #tpu.dot_dimension_numbers<[2], [2], [1], [1], [0, 0, 0, 1, 1, 1], [0], [0]>} : vector<4x32x32xf32>, vector<4x16x32xf32>, vector<4x32x16xf32> -> vector<4x32x16xf32>
    "tpu.trace_stop"() : () -> ()
    %cst_47 = arith.constant dense<0xFF800000> : vector<4x32xf32>
    %138 = vector.multi_reduction <maximumf>, %137, %cst_47 [2] : vector<4x32x16xf32> to vector<4x32xf32>
    %139 = vector.shape_cast %138 : vector<4x32xf32> to vector<4x32x1xf32>
    %140 = vector.broadcast %139 : vector<4x32x1xf32> to vector<4x32x16xf32>
    %141 = arith.subf %137, %140 : vector<4x32x16xf32>
    %142 = math.exp %141 : vector<4x32x16xf32>
    %cst_48 = arith.constant dense<0.000000e+00> : vector<4x32xf32>
    %143 = vector.multi_reduction <add>, %142, %cst_48 [2] : vector<4x32x16xf32> to vector<4x32xf32>
    %144 = vector.shape_cast %143 : vector<4x32xf32> to vector<4x32x1xf32>
    %145 = tpu.reciprocal %144 : vector<4x32x1xf32> -> vector<4x32x1xf32>
    %146 = vector.broadcast %145 : vector<4x32x1xf32> to vector<4x32x16xf32>
    %147 = arith.mulf %142, %146 : vector<4x32x16xf32>
    "tpu.trace_start"() <{level = 10 : i32, message = "hqk,hkd->hqd"}> : () -> ()
    %cst_49 = arith.constant dense<0.000000e+00> : vector<4x32x32xf32>
    %148 = tpu.matmul %147, %136, %cst_49 {dimension_numbers = #tpu.dot_dimension_numbers<[2], [1], [1], [2], [0, 0, 0, 1, 1, 2], [0], [0]>} : vector<4x32x16xf32>, vector<4x16x32xf32>, vector<4x32x32xf32> -> vector<4x32x32xf32>
    "tpu.trace_stop"() : () -> ()
    %149 = arith.addf %134, %148 : vector<4x32x32xf32>
    %150 = vector.extract_strided_slice %48 {offsets = [0, 32, 0], sizes = [4, 32, 32], strides = [1, 1, 1]} : vector<4x64x32xf32> to vector<4x32x32xf32>
    %151 = vector.extract_strided_slice %124 {offsets = [0, 16, 0], sizes = [4, 16, 32], strides = [1, 1, 1]} : vector<4x32x32xf32> to vector<4x16x32xf32>
    %152 = vector.extract_strided_slice %133 {offsets = [0, 16, 0], sizes = [4, 16, 32], strides = [1, 1, 1]} : vector<4x32x32xf32> to vector<4x16x32xf32>
    "tpu.trace_start"() <{level = 10 : i32, message = "hqd,hkd->hqk"}> : () -> ()
    %cst_50 = arith.constant dense<0.000000e+00> : vector<4x32x16xf32>
    %153 = tpu.matmul %150, %151, %cst_50 {dimension_numbers = #tpu.dot_dimension_numbers<[2], [2], [1], [1], [0, 0, 0, 1, 1, 1], [0], [0]>} : vector<4x32x32xf32>, vector<4x16x32xf32>, vector<4x32x16xf32> -> vector<4x32x16xf32>
    "tpu.trace_stop"() : () -> ()
    %cst_51 = arith.constant dense<0xFF800000> : vector<4x32xf32>
    %154 = vector.multi_reduction <maximumf>, %153, %cst_51 [2] : vector<4x32x16xf32> to vector<4x32xf32>
    %155 = vector.shape_cast %154 : vector<4x32xf32> to vector<4x32x1xf32>
    %156 = vector.broadcast %155 : vector<4x32x1xf32> to vector<4x32x16xf32>
    %157 = arith.subf %153, %156 : vector<4x32x16xf32>
    %158 = math.exp %157 : vector<4x32x16xf32>
    %cst_52 = arith.constant dense<0.000000e+00> : vector<4x32xf32>
    %159 = vector.multi_reduction <add>, %158, %cst_52 [2] : vector<4x32x16xf32> to vector<4x32xf32>
    %160 = vector.shape_cast %159 : vector<4x32xf32> to vector<4x32x1xf32>
    %161 = tpu.reciprocal %160 : vector<4x32x1xf32> -> vector<4x32x1xf32>
    %162 = vector.broadcast %161 : vector<4x32x1xf32> to vector<4x32x16xf32>
    %163 = arith.mulf %158, %162 : vector<4x32x16xf32>
    "tpu.trace_start"() <{level = 10 : i32, message = "hqk,hkd->hqd"}> : () -> ()
    %cst_53 = arith.constant dense<0.000000e+00> : vector<4x32x32xf32>
    %164 = tpu.matmul %163, %152, %cst_53 {dimension_numbers = #tpu.dot_dimension_numbers<[2], [1], [1], [2], [0, 0, 0, 1, 1, 2], [0], [0]>} : vector<4x32x16xf32>, vector<4x16x32xf32>, vector<4x32x32xf32> -> vector<4x32x32xf32>
    "tpu.trace_stop"() : () -> ()
    %165 = arith.addf %150, %164 : vector<4x32x32xf32>
    %166 = tpu.concatenate %149, %165 in 1 : vector<4x32x32xf32>, vector<4x32x32xf32> -> vector<4x64x32xf32>
    %167 = vector.extract_strided_slice %166 {offsets = [0, 0, 0], sizes = [1, 64, 32], strides = [1, 1, 1]} : vector<4x64x32xf32> to vector<1x64x32xf32>
    %168 = vector.shape_cast %167 : vector<1x64x32xf32> to vector<64x32xf32>
    %169 = vector.extract_strided_slice %166 {offsets = [1, 0, 0], sizes = [1, 64, 32], strides = [1, 1, 1]} : vector<4x64x32xf32> to vector<1x64x32xf32>
    %170 = vector.shape_cast %169 : vector<1x64x32xf32> to vector<64x32xf32>
    %171 = vector.extract_strided_slice %166 {offsets = [2, 0, 0], sizes = [1, 64, 32], strides = [1, 1, 1]} : vector<4x64x32xf32> to vector<1x64x32xf32>
    %172 = vector.shape_cast %171 : vector<1x64x32xf32> to vector<64x32xf32>
    %173 = vector.extract_strided_slice %166 {offsets = [3, 0, 0], sizes = [1, 64, 32], strides = [1, 1, 1]} : vector<4x64x32xf32> to vector<1x64x32xf32>
    %174 = vector.shape_cast %173 : vector<1x64x32xf32> to vector<64x32xf32>
    %175 = tpu.concatenate %168, %170, %172, %174 in 1 : vector<64x32xf32>, vector<64x32xf32>, vector<64x32xf32>, vector<64x32xf32> -> vector<64x128xf32>
    %c0_54 = arith.constant 0 : index
    %c0_55 = arith.constant 0 : index
    %176 = vector.load %arg17[%c0_54, %c0_55] : memref<128x128xf32, #tpu.memory_space<vmem>>, vector<128x128xf32>
    %cst_56 = arith.constant dense<0.000000e+00> : vector<64x128xf32>
    %177 = tpu.matmul %175, %176, %cst_56 {dimension_numbers = #tpu.dot_dimension_numbers<[1], [0], [0], [1], [0, 0, 1, 1], [], []>} : vector<64x128xf32>, vector<128x128xf32>, vector<64x128xf32> -> vector<64x128xf32>
    %c0_57 = arith.constant 0 : index
    %c0_58 = arith.constant 0 : index
    %178 = vector.load %arg18[%c0_57, %c0_58] : memref<1x128xf32, #tpu.memory_space<vmem>>, vector<1x128xf32>
    %179 = vector.broadcast %178 : vector<1x128xf32> to vector<64x128xf32>
    %180 = arith.addf %177, %179 : vector<64x128xf32>
    %cst_59 = arith.constant 0.000000e+00 : f32
    %181 = vector.broadcast %cst_59 : f32 to vector<64x128xf32>
    %182 = arith.maximumf %180, %181 : vector<64x128xf32>
    %183 = arith.addf %175, %182 : vector<64x128xf32>
    %184 = vector.extract_strided_slice %183 {offsets = [0, 0], sizes = [64, 8], strides = [1, 1]} : vector<64x128xf32> to vector<64x8xf32>
    %185 = vector.extract_strided_slice %183 {offsets = [0, 32], sizes = [64, 8], strides = [1, 1]} : vector<64x128xf32> to vector<64x8xf32>
    %186 = vector.extract_strided_slice %183 {offsets = [0, 64], sizes = [64, 8], strides = [1, 1]} : vector<64x128xf32> to vector<64x8xf32>
    %187 = vector.extract_strided_slice %183 {offsets = [0, 96], sizes = [64, 8], strides = [1, 1]} : vector<64x128xf32> to vector<64x8xf32>
    %188 = tpu.concatenate %184, %185, %186, %187 in 1 : vector<64x8xf32>, vector<64x8xf32>, vector<64x8xf32>, vector<64x8xf32> -> vector<64x32xf32>
    %c0_60 = arith.constant 0 : index
    %c0_61 = arith.constant 0 : index
    %189 = vector.load %arg19[%c0_60, %c0_61] : memref<64x32xf32, #tpu.memory_space<vmem>>, vector<64x32xf32>
    tpu.vector_store %arg19[%c0_60, %c0_61], %188 {strides = array<i32>} : memref<64x32xf32, #tpu.memory_space<vmem>>, vector<64x32xf32>,
    return
  }
  func.func @transform_0(%arg0: i32) -> (i32, i32) {
    %c0_i32 = arith.constant 0 : i32
    %c0_i32_0 = arith.constant 0 : i32
    return %arg0, %c0_i32 : i32, i32
  }
  func.func @transform_1(%arg0: i32) -> (i32, i32) {
    %c0_i32 = arith.constant 0 : i32
    %c0_i32_0 = arith.constant 0 : i32
    %c0_i32_1 = arith.constant 0 : i32
    return %c0_i32, %c0_i32_0 : i32, i32
  }
  func.func @transform_2(%arg0: i32) -> (i32, i32) {
    %c0_i32 = arith.constant 0 : i32
    %c0_i32_0 = arith.constant 0 : i32
    %c0_i32_1 = arith.constant 0 : i32
    return %c0_i32, %c0_i32_0 : i32, i32
  }
  func.func @transform_3(%arg0: i32) -> (i32, i32) {
    %c0_i32 = arith.constant 0 : i32
    %c0_i32_0 = arith.constant 0 : i32
    %c0_i32_1 = arith.constant 0 : i32
    return %c0_i32, %c0_i32_0 : i32, i32
  }
  func.func @transform_4(%arg0: i32) -> (i32, i32) {
    %c0_i32 = arith.constant 0 : i32
    %c0_i32_0 = arith.constant 0 : i32
    %c0_i32_1 = arith.constant 0 : i32
    return %c0_i32, %c0_i32_0 : i32, i32
  }
  func.func @transform_5(%arg0: i32) -> (i32, i32) {
    %c0_i32 = arith.constant 0 : i32
    %c0_i32_0 = arith.constant 0 : i32
    %c0_i32_1 = arith.constant 0 : i32
    return %c0_i32, %c0_i32_0 : i32, i32
  }
  func.func @transform_6(%arg0: i32) -> (i32, i32) {
    %c0_i32 = arith.constant 0 : i32
    %c0_i32_0 = arith.constant 0 : i32
    %c0_i32_1 = arith.constant 0 : i32
    return %c0_i32, %c0_i32_0 : i32, i32
  }
  func.func @transform_7(%arg0: i32) -> (i32, i32) {
    %c0_i32 = arith.constant 0 : i32
    %c0_i32_0 = arith.constant 0 : i32
    %c0_i32_1 = arith.constant 0 : i32
    return %c0_i32, %c0_i32_0 : i32, i32
  }
  func.func @transform_8(%arg0: i32) -> (i32, i32) {
    %c0_i32 = arith.constant 0 : i32
    %c0_i32_0 = arith.constant 0 : i32
    %c0_i32_1 = arith.constant 0 : i32
    return %c0_i32, %c0_i32_0 : i32, i32
  }
  func.func @transform_9(%arg0: i32) -> (i32, i32) {
    %c0_i32 = arith.constant 0 : i32
    %c0_i32_0 = arith.constant 0 : i32
    %c0_i32_1 = arith.constant 0 : i32
    return %c0_i32, %c0_i32_0 : i32, i32
  }
  func.func @transform_10(%arg0: i32) -> (i32, i32) {
    %c0_i32 = arith.constant 0 : i32
    %c0_i32_0 = arith.constant 0 : i32
    %c0_i32_1 = arith.constant 0 : i32
    return %c0_i32, %c0_i32_0 : i32, i32
  }
  func.func @transform_11(%arg0: i32) -> (i32, i32) {
    %c0_i32 = arith.constant 0 : i32
    %c0_i32_0 = arith.constant 0 : i32
    %c0_i32_1 = arith.constant 0 : i32
    return %c0_i32, %c0_i32_0 : i32, i32
  }
  func.func @transform_12(%arg0: i32) -> (i32, i32) {
    %c0_i32 = arith.constant 0 : i32
    %c0_i32_0 = arith.constant 0 : i32
    %c0_i32_1 = arith.constant 0 : i32
    return %c0_i32, %c0_i32_0 : i32, i32
  }
  func.func @transform_13(%arg0: i32) -> (i32, i32) {
    %c0_i32 = arith.constant 0 : i32
    %c0_i32_0 = arith.constant 0 : i32
    %c0_i32_1 = arith.constant 0 : i32
    return %c0_i32, %c0_i32_0 : i32, i32
  }
  func.func @transform_14(%arg0: i32) -> (i32, i32) {
    %c0_i32 = arith.constant 0 : i32
    %c0_i32_0 = arith.constant 0 : i32
    %c0_i32_1 = arith.constant 0 : i32
    return %c0_i32, %c0_i32_0 : i32, i32
  }
  func.func @transform_15(%arg0: i32) -> (i32, i32) {
    %c0_i32 = arith.constant 0 : i32
    %c0_i32_0 = arith.constant 0 : i32
    %c0_i32_1 = arith.constant 0 : i32
    return %c0_i32, %c0_i32_0 : i32, i32
  }
  func.func @transform_16(%arg0: i32) -> (i32, i32) {
    %c0_i32 = arith.constant 0 : i32
    %c0_i32_0 = arith.constant 0 : i32
    %c0_i32_1 = arith.constant 0 : i32
    return %c0_i32, %c0_i32_0 : i32, i32
  }
  func.func @transform_17(%arg0: i32) -> (i32, i32) {
    %c0_i32 = arith.constant 0 : i32
    %c0_i32_0 = arith.constant 0 : i32
    %c0_i32_1 = arith.constant 0 : i32
    return %c0_i32, %c0_i32_0 : i32, i32
  }
  func.func @transform_18(%arg0: i32) -> (i32, i32) {
    %c0_i32 = arith.constant 0 : i32
    %c0_i32_0 = arith.constant 0 : i32
    return %arg0, %c0_i32 : i32, i32
  }
}

</mosaic_0001>

<llo_original>
// kernel: tpu_custom_call.1
$region0: #{tpu_custom_call.1}
  #allocation0 [shape = 'u32[]', space=smem, size = 0x4, offset = 0x4, fixed_abs, tag = 'smem constant byte address 0x4 - core index']
  #allocation1 [shape = 'u32[144,128]{1,0:T(1,128)}', space=vmem, size = 0x12000, scoped, tag = 'internal scratch']
  %s0 = inlined_call_operand.vmem [shape: f32[128,8], index: 0, kind: input, shape index: {}]
  %s1 = inlined_call_operand.hbm [shape: f32[16,32], index: 1, kind: input, shape index: {}]
  %s2 = inlined_call_operand.vmem [shape: f32[32,128], index: 2, kind: input, shape index: {}]
  %s3 = inlined_call_operand.vmem [shape: f32[1,128], index: 3, kind: input, shape index: {}]
  %s4 = inlined_call_operand.hbm [shape: f32[8,128], index: 4, kind: input, shape index: {}]
  %s5 = inlined_call_operand.vmem [shape: f32[1,128], index: 5, kind: input, shape index: {}]
  %s6 = inlined_call_operand.hbm [shape: f32[8,128], index: 6, kind: input, shape index: {}]
  %s7 = inlined_call_operand.hbm [shape: f32[1,128], index: 7, kind: input, shape index: {}]
  %s8 = inlined_call_operand.vmem [shape: f32[128,128], index: 8, kind: input, shape index: {}]
  %s9 = inlined_call_operand.hbm [shape: f32[1,128], index: 9, kind: input, shape index: {}]
  %s10 = inlined_call_operand.vmem [shape: f32[8,128], index: 10, kind: input, shape index: {}]
  %s11 = inlined_call_operand.vmem [shape: f32[1,128], index: 11, kind: input, shape index: {}]
  %s12 = inlined_call_operand.hbm [shape: f32[128,128], index: 12, kind: input, shape index: {}]
  %s13 = inlined_call_operand.vmem [shape: f32[1,128], index: 13, kind: input, shape index: {}]
  %s14 = inlined_call_operand.hbm [shape: f32[128,128], index: 14, kind: input, shape index: {}]
  %s15 = inlined_call_operand.vmem [shape: f32[1,128], index: 15, kind: input, shape index: {}]
  %s16 = inlined_call_operand.hbm [shape: f32[128,128], index: 16, kind: input, shape index: {}]
  %s17 = inlined_call_operand.vmem [shape: f32[1,128], index: 17, kind: input, shape index: {}]
  %s18 = inlined_call_operand.vmem [shape: f32[128,32], index: 18, kind: output, shape index: {}]
  %s19 = sld [smem:[#allocation0]]
  $region137: #{tpu_custom_call.1} parent=0
    _
  %s21 = ssub.s32 1, %s19
  %s22 = scalar_select 0, %s21, %s19
  $region1: #{tpu_custom_call.1} parent=0
    #allocation2 [shape = 'u8[8192]{0}', space=vmem, size = 0x2000, scoped, tag = 'input window, operand 1, single buffered']
    #allocation3 [shape = 's32[2]{0}', space=sflag, size = 0x8, scoped, tag = 'scoped memory for tpu_custom_call.1']
    #allocation4 [shape = 'u8[4096]{0}', space=vmem, size = 0x1000, scoped, tag = 'input window, operand 4, single buffered']
    #allocation5 [shape = 's32[1]{0}', space=sflag, size = 0x4, scoped, tag = 'scoped memory for tpu_custom_call.1']
    #allocation6 [shape = 'u8[4096]{0}', space=vmem, size = 0x1000, scoped, tag = 'input window, operand 6, single buffered']
    #allocation7 [shape = 'u8[512]{0}', space=vmem, size = 0x400, scoped, tag = 'input window, operand 7, single buffered']
    #allocation8 [shape = 's32[1]{0}', space=sflag, size = 0x4, scoped, tag = 'scoped memory for tpu_custom_call.1']
    #allocation9 [shape = 'u8[512]{0}', space=vmem, size = 0x400, scoped, tag = 'input window, operand 9, single buffered']
    #allocation10 [shape = 'u8[65536]{0}', space=vmem, size = 0x10000, scoped, tag = 'input window, operand 12, single buffered']
    #allocation11 [shape = 's32[1]{0}', space=sflag, size = 0x4, scoped, tag = 'scoped memory for tpu_custom_call.1']
    #allocation12 [shape = 'u8[65536]{0}', space=vmem, size = 0x10000, scoped, tag = 'input window, operand 14, single buffered']
    #allocation13 [shape = 'u8[65536]{0}', space=vmem, size = 0x10000, scoped, tag = 'input window, operand 16, single buffered']
    #allocation14 [shape = 's32[1]{0}', space=sflag, size = 0x4, scoped, tag = 'scoped memory for tpu_custom_call.1']
    %23 = vsyncpa [#allocation3], 0
    %24 = vsyncpa [#allocation5], 0
    %25 = vsyncpa [#allocation8], 0
    %26 = vsyncpa [#allocation11], 0
    %27 = vsyncpa [#allocation14], 0
    loop: start=0, step=1, limit=4
    $region2: #{tpu_custom_call.1} parent=1 // loop_pre_header
      _
    $region3: #{tpu_custom_call.1} parent=1 // loop_header
      %s29 = sphi 0, %s33
      %p30 = scmp.ge.s32.totalorder %s29, 4
      %s39 = sphi 0, %s41
      %s42 = sphi 0, %s39
      %s43 = sphi 0, %s42
      %s59 = sphi 0, %s43
      %s63 = sphi 0, %s63
      %s65 = sphi 0, %s63
      %s66 = sphi 0, %s65
      %s80 = sphi 0, %s66
      %s84 = sphi 0, %s84
      %s86 = sphi 0, %s84
      %s87 = sphi 0, %s86
      %s101 = sphi 0, %s87
      %s105 = sphi 0, %s105
      %s107 = sphi 0, %s105
      %s108 = sphi 0, %s107
      %s122 = sphi 0, %s108
      %s126 = sphi 0, %s126
      %s128 = sphi 0, %s126
      %s129 = sphi 0, %s128
      %s143 = sphi 0, %s129
      %s147 = sphi 0, %s147
      %s149 = sphi 0, %s147
      %s150 = sphi 0, %s149
      %s164 = sphi 0, %s150
      %s168 = sphi 0, %s168
      %s170 = sphi 0, %s168
      %s171 = sphi 0, %s170
      %s185 = sphi 0, %s171
      %s189 = sphi 0, %s189
      %s191 = sphi 0, %s189
      %s192 = sphi 0, %s191
      %s206 = sphi 0, %s192
      %s210 = sphi 0, %s210
      %s212 = sphi 0, %s210
      %s213 = sphi 0, %s212
      %s227 = sphi 0, %s213
      %s231 = sphi 0, %s231
      %s233 = sphi 0, %s231
      %s234 = sphi 0, %s233
      %s248 = sphi 0, %s234
      %s252 = sphi 0, %s252
      %s254 = sphi 0, %s252
      %s255 = sphi 0, %s254
      %s269 = sphi 0, %s255
      %s273 = sphi 0, %s273
      %s275 = sphi 0, %s273
      %s276 = sphi 0, %s275
      %s290 = sphi 0, %s276
      %s294 = sphi 0, %s294
      %s296 = sphi 0, %s294
      %s297 = sphi 0, %s296
      %s311 = sphi 0, %s297
      %s315 = sphi 0, %s315
      %s317 = sphi 0, %s315
      %s318 = sphi 0, %s317
      %s332 = sphi 0, %s318
      %s336 = sphi 0, %s336
      %s338 = sphi 0, %s336
      %s339 = sphi 0, %s338
      %s353 = sphi 0, %s339
      %s357 = sphi 0, %s357
      %s359 = sphi 0, %s357
      %s360 = sphi 0, %s359
      %s374 = sphi 0, %s360
      %s378 = sphi 0, %s378
      %s380 = sphi 0, %s378
      %s381 = sphi 0, %s380
      %s395 = sphi 0, %s381
      %s399 = sphi 0, %s399
      %s401 = sphi 0, %s399
      %s402 = sphi 0, %s401
      %s416 = sphi 0, %s402
      %s422 = sphi 0, %s424
      %s425 = sphi 0, %s422
      %s426 = sphi 0, %s425
      %s442 = sphi 0, %s426
    $region4: #{tpu_custom_call.1} parent=1 // loop_header_branch
      %32 = sbr.rel (%p30) target = $region8
    $region5: #{tpu_custom_call.1} parent=1 // loop_body
      %s34 = ssub.s32 %s29, 1
      %s35 = ssub.s32 %s29, 2
      %s36 = sadd.s32 %s29, 1
      %s37 = ssub.s32 %s29, %s36
      %p38 = scmp.eq.s32.totalorder %s37, 0
      %s40 = sadd.s32 %s39, 1
      %s41 = scalar_select %p38, %s39, %s40
      %p44 = pneg %p38
      %p45 = scmp.eq.s32.totalorder %s29, 1
      %p46 = por %p44, %p45
      %p47 = scmp.ne.s32.totalorder %s39, %s42
      %p48 = scmp.eq.s32.totalorder %s29, 0
      %p49 = por %p47, %p48
      %p50 = scmp.ne.s32.totalorder %s39, %s42
      %p51 = scmp.eq.s32.totalorder %s34, 1
      %p52 = por %p50, %p51
      %p53 = scmp.ne.s32.totalorder %s42, %s43
      %p54 = scmp.eq.s32.totalorder %s34, 0
      %p55 = por %p53, %p54
      %p56 = scmp.ne.s32.totalorder %s42, %s43
      %p57 = scmp.eq.s32.totalorder %s35, 1
      %p58 = por %p56, %p57
      %p60 = scmp.ne.s32.totalorder %s43, %s59
      %p61 = scmp.eq.s32.totalorder %s35, 0
      %p62 = por %p60, %p61
      %s64 = sadd.s32 %s63, 1
      %p67 = scmp.eq.s32.totalorder %s29, 1
      %p68 = scmp.ne.s32.totalorder %s63, %s65
      %p69 = scmp.eq.s32.totalorder %s29, 0
      %p70 = por %p68, %p69
      %p71 = scmp.ne.s32.totalorder %s63, %s65
      %p72 = scmp.eq.s32.totalorder %s34, 1
      %p73 = por %p71, %p72
      %p74 = scmp.ne.s32.totalorder %s65, %s66
      %p75 = scmp.eq.s32.totalorder %s34, 0
      %p76 = por %p74, %p75
      %p77 = scmp.ne.s32.totalorder %s65, %s66
      %p78 = scmp.eq.s32.totalorder %s35, 1
      %p79 = por %p77, %p78
      %p81 = scmp.ne.s32.totalorder %s66, %s80
      %p82 = scmp.eq.s32.totalorder %s35, 0
      %p83 = por %p81, %p82
      %s85 = sadd.s32 %s84, 1
      %p88 = scmp.eq.s32.totalorder %s29, 1
      %p89 = scmp.ne.s32.totalorder %s84, %s86
      %p90 = scmp.eq.s32.totalorder %s29, 0
      %p91 = por %p89, %p90
      %p92 = scmp.ne.s32.totalorder %s84, %s86
      %p93 = scmp.eq.s32.totalorder %s34, 1
      %p94 = por %p92, %p93
      %p95 = scmp.ne.s32.totalorder %s86, %s87
      %p96 = scmp.eq.s32.totalorder %s34, 0
      %p97 = por %p95, %p96
      %p98 = scmp.ne.s32.totalorder %s86, %s87
      %p99 = scmp.eq.s32.totalorder %s35, 1
      %p100 = por %p98, %p99
      %p102 = scmp.ne.s32.totalorder %s87, %s101
      %p103 = scmp.eq.s32.totalorder %s35, 0
      %p104 = por %p102, %p103
      %s106 = sadd.s32 %s105, 1
      %p109 = scmp.eq.s32.totalorder %s29, 1
      %p110 = scmp.ne.s32.totalorder %s105, %s107
      %p111 = scmp.eq.s32.totalorder %s29, 0
      %p112 = por %p110, %p111
      %p113 = scmp.ne.s32.totalorder %s105, %s107
      %p114 = scmp.eq.s32.totalorder %s34, 1
      %p115 = por %p113, %p114
      %p116 = scmp.ne.s32.totalorder %s107, %s108
      %p117 = scmp.eq.s32.totalorder %s34, 0
      %p118 = por %p116, %p117
      %p119 = scmp.ne.s32.totalorder %s107, %s108
      %p120 = scmp.eq.s32.totalorder %s35, 1
      %p121 = por %p119, %p120
      %p123 = scmp.ne.s32.totalorder %s108, %s122
      %p124 = scmp.eq.s32.totalorder %s35, 0
      %p125 = por %p123, %p124
      %s127 = sadd.s32 %s126, 1
      %p130 = scmp.eq.s32.totalorder %s29, 1
      %p131 = scmp.ne.s32.totalorder %s126, %s128
      %p132 = scmp.eq.s32.totalorder %s29, 0
      %p133 = por %p131, %p132
      %p134 = scmp.ne.s32.totalorder %s126, %s128
      %p135 = scmp.eq.s32.totalorder %s34, 1
      %p136 = por %p134, %p135
      %p137 = scmp.ne.s32.totalorder %s128, %s129
      %p138 = scmp.eq.s32.totalorder %s34, 0
      %p139 = por %p137, %p138
      %p140 = scmp.ne.s32.totalorder %s128, %s129
      %p141 = scmp.eq.s32.totalorder %s35, 1
      %p142 = por %p140, %p141
      %p144 = scmp.ne.s32.totalorder %s129, %s143
      %p145 = scmp.eq.s32.totalorder %s35, 0
      %p146 = por %p144, %p145
      %s148 = sadd.s32 %s147, 1
      %p151 = scmp.eq.s32.totalorder %s29, 1
      %p152 = scmp.ne.s32.totalorder %s147, %s149
      %p153 = scmp.eq.s32.totalorder %s29, 0
      %p154 = por %p152, %p153
      %p155 = scmp.ne.s32.totalorder %s147, %s149
      %p156 = scmp.eq.s32.totalorder %s34, 1
      %p157 = por %p155, %p156
      %p158 = scmp.ne.s32.totalorder %s149, %s150
      %p159 = scmp.eq.s32.totalorder %s34, 0
      %p160 = por %p158, %p159
      %p161 = scmp.ne.s32.totalorder %s149, %s150
      %p162 = scmp.eq.s32.totalorder %s35, 1
      %p163 = por %p161, %p162
      %p165 = scmp.ne.s32.totalorder %s150, %s164
      %p166 = scmp.eq.s32.totalorder %s35, 0
      %p167 = por %p165, %p166
      %s169 = sadd.s32 %s168, 1
      %p172 = scmp.eq.s32.totalorder %s29, 1
      %p173 = scmp.ne.s32.totalorder %s168, %s170
      %p174 = scmp.eq.s32.totalorder %s29, 0
      %p175 = por %p173, %p174
      %p176 = scmp.ne.s32.totalorder %s168, %s170
      %p177 = scmp.eq.s32.totalorder %s34, 1
      %p178 = por %p176, %p177
      %p179 = scmp.ne.s32.totalorder %s170, %s171
      %p180 = scmp.eq.s32.totalorder %s34, 0
      %p181 = por %p179, %p180
      %p182 = scmp.ne.s32.totalorder %s170, %s171
      %p183 = scmp.eq.s32.totalorder %s35, 1
      %p184 = por %p182, %p183
      %p186 = scmp.ne.s32.totalorder %s171, %s185
      %p187 = scmp.eq.s32.totalorder %s35, 0
      %p188 = por %p186, %p187
      %s190 = sadd.s32 %s189, 1
      %p193 = scmp.eq.s32.totalorder %s29, 1
      %p194 = scmp.ne.s32.totalorder %s189, %s191
      %p195 = scmp.eq.s32.totalorder %s29, 0
      %p196 = por %p194, %p195
      %p197 = scmp.ne.s32.totalorder %s189, %s191
      %p198 = scmp.eq.s32.totalorder %s34, 1
      %p199 = por %p197, %p198
      %p200 = scmp.ne.s32.totalorder %s191, %s192
      %p201 = scmp.eq.s32.totalorder %s34, 0
      %p202 = por %p200, %p201
      %p203 = scmp.ne.s32.totalorder %s191, %s192
      %p204 = scmp.eq.s32.totalorder %s35, 1
      %p205 = por %p203, %p204
      %p207 = scmp.ne.s32.totalorder %s192, %s206
      %p208 = scmp.eq.s32.totalorder %s35, 0
      %p209 = por %p207, %p208
      %s211 = sadd.s32 %s210, 1
      %p214 = scmp.eq.s32.totalorder %s29, 1
      %p215 = scmp.ne.s32.totalorder %s210, %s212
      %p216 = scmp.eq.s32.totalorder %s29, 0
      %p217 = por %p215, %p216
      %p218 = scmp.ne.s32.totalorder %s210, %s212
      %p219 = scmp.eq.s32.totalorder %s34, 1
      %p220 = por %p218, %p219
      %p221 = scmp.ne.s32.totalorder %s212, %s213
      %p222 = scmp.eq.s32.totalorder %s34, 0
      %p223 = por %p221, %p222
      %p224 = scmp.ne.s32.totalorder %s212, %s213
      %p225 = scmp.eq.s32.totalorder %s35, 1
      %p226 = por %p224, %p225
      %p228 = scmp.ne.s32.totalorder %s213, %s227
      %p229 = scmp.eq.s32.totalorder %s35, 0
      %p230 = por %p228, %p229
      %s232 = sadd.s32 %s231, 1
      %p235 = scmp.eq.s32.totalorder %s29, 1
      %p236 = scmp.ne.s32.totalorder %s231, %s233
      %p237 = scmp.eq.s32.totalorder %s29, 0
      %p238 = por %p236, %p237
      %p239 = scmp.ne.s32.totalorder %s231, %s233
      %p240 = scmp.eq.s32.totalorder %s34, 1
      %p241 = por %p239, %p240
      %p242 = scmp.ne.s32.totalorder %s233, %s234
      %p243 = scmp.eq.s32.totalorder %s34, 0
      %p244 = por %p242, %p243
      %p245 = scmp.ne.s32.totalorder %s233, %s234
      %p246 = scmp.eq.s32.totalorder %s35, 1
      %p247 = por %p245, %p246
      %p249 = scmp.ne.s32.totalorder %s234, %s248
      %p250 = scmp.eq.s32.totalorder %s35, 0
      %p251 = por %p249, %p250
      %s253 = sadd.s32 %s252, 1
      %p256 = scmp.eq.s32.totalorder %s29, 1
      %p257 = scmp.ne.s32.totalorder %s252, %s254
      %p258 = scmp.eq.s32.totalorder %s29, 0
      %p259 = por %p257, %p258
      %p260 = scmp.ne.s32.totalorder %s252, %s254
      %p261 = scmp.eq.s32.totalorder %s34, 1
      %p262 = por %p260, %p261
      %p263 = scmp.ne.s32.totalorder %s254, %s255
      %p264 = scmp.eq.s32.totalorder %s34, 0
      %p265 = por %p263, %p264
      %p266 = scmp.ne.s32.totalorder %s254, %s255
      %p267 = scmp.eq.s32.totalorder %s35, 1
      %p268 = por %p266, %p267
      %p270 = scmp.ne.s32.totalorder %s255, %s269
      %p271 = scmp.eq.s32.totalorder %s35, 0
      %p272 = por %p270, %p271
      %s274 = sadd.s32 %s273, 1
      %p277 = scmp.eq.s32.totalorder %s29, 1
      %p278 = scmp.ne.s32.totalorder %s273, %s275
      %p279 = scmp.eq.s32.totalorder %s29, 0
      %p280 = por %p278, %p279
      %p281 = scmp.ne.s32.totalorder %s273, %s275
      %p282 = scmp.eq.s32.totalorder %s34, 1
      %p283 = por %p281, %p282
      %p284 = scmp.ne.s32.totalorder %s275, %s276
      %p285 = scmp.eq.s32.totalorder %s34, 0
      %p286 = por %p284, %p285
      %p287 = scmp.ne.s32.totalorder %s275, %s276
      %p288 = scmp.eq.s32.totalorder %s35, 1
      %p289 = por %p287, %p288
      %p291 = scmp.ne.s32.totalorder %s276, %s290
      %p292 = scmp.eq.s32.totalorder %s35, 0
      %p293 = por %p291, %p292
      %s295 = sadd.s32 %s294, 1
      %p298 = scmp.eq.s32.totalorder %s29, 1
      %p299 = scmp.ne.s32.totalorder %s294, %s296
      %p300 = scmp.eq.s32.totalorder %s29, 0
      %p301 = por %p299, %p300
      %p302 = scmp.ne.s32.totalorder %s294, %s296
      %p303 = scmp.eq.s32.totalorder %s34, 1
      %p304 = por %p302, %p303
      %p305 = scmp.ne.s32.totalorder %s296, %s297
      %p306 = scmp.eq.s32.totalorder %s34, 0
      %p307 = por %p305, %p306
      %p308 = scmp.ne.s32.totalorder %s296, %s297
      %p309 = scmp.eq.s32.totalorder %s35, 1
      %p310 = por %p308, %p309
      %p312 = scmp.ne.s32.totalorder %s297, %s311
      %p313 = scmp.eq.s32.totalorder %s35, 0
      %p314 = por %p312, %p313
      %s316 = sadd.s32 %s315, 1
      %p319 = scmp.eq.s32.totalorder %s29, 1
      %p320 = scmp.ne.s32.totalorder %s315, %s317
      %p321 = scmp.eq.s32.totalorder %s29, 0
      %p322 = por %p320, %p321
      %p323 = scmp.ne.s32.totalorder %s315, %s317
      %p324 = scmp.eq.s32.totalorder %s34, 1
      %p325 = por %p323, %p324
      %p326 = scmp.ne.s32.totalorder %s317, %s318
      %p327 = scmp.eq.s32.totalorder %s34, 0
      %p328 = por %p326, %p327
      %p329 = scmp.ne.s32.totalorder %s317, %s318
      %p330 = scmp.eq.s32.totalorder %s35, 1
      %p331 = por %p329, %p330
      %p333 = scmp.ne.s32.totalorder %s318, %s332
      %p334 = scmp.eq.s32.totalorder %s35, 0
      %p335 = por %p333, %p334
      %s337 = sadd.s32 %s336, 1
      %p340 = scmp.eq.s32.totalorder %s29, 1
      %p341 = scmp.ne.s32.totalorder %s336, %s338
      %p342 = scmp.eq.s32.totalorder %s29, 0
      %p343 = por %p341, %p342
      %p344 = scmp.ne.s32.totalorder %s336, %s338
      %p345 = scmp.eq.s32.totalorder %s34, 1
      %p346 = por %p344, %p345
      %p347 = scmp.ne.s32.totalorder %s338, %s339
      %p348 = scmp.eq.s32.totalorder %s34, 0
      %p349 = por %p347, %p348
      %p350 = scmp.ne.s32.totalorder %s338, %s339
      %p351 = scmp.eq.s32.totalorder %s35, 1
      %p352 = por %p350, %p351
      %p354 = scmp.ne.s32.totalorder %s339, %s353
      %p355 = scmp.eq.s32.totalorder %s35, 0
      %p356 = por %p354, %p355
      %s358 = sadd.s32 %s357, 1
      %p361 = scmp.eq.s32.totalorder %s29, 1
      %p362 = scmp.ne.s32.totalorder %s357, %s359
      %p363 = scmp.eq.s32.totalorder %s29, 0
      %p364 = por %p362, %p363
      %p365 = scmp.ne.s32.totalorder %s357, %s359
      %p366 = scmp.eq.s32.totalorder %s34, 1
      %p367 = por %p365, %p366
      %p368 = scmp.ne.s32.totalorder %s359, %s360
      %p369 = scmp.eq.s32.totalorder %s34, 0
      %p370 = por %p368, %p369
      %p371 = scmp.ne.s32.totalorder %s359, %s360
      %p372 = scmp.eq.s32.totalorder %s35, 1
      %p373 = por %p371, %p372
      %p375 = scmp.ne.s32.totalorder %s360, %s374
      %p376 = scmp.eq.s32.totalorder %s35, 0
      %p377 = por %p375, %p376
      %s379 = sadd.s32 %s378, 1
      %p382 = scmp.eq.s32.totalorder %s29, 1
      %p383 = scmp.ne.s32.totalorder %s378, %s380
      %p384 = scmp.eq.s32.totalorder %s29, 0
      %p385 = por %p383, %p384
      %p386 = scmp.ne.s32.totalorder %s378, %s380
      %p387 = scmp.eq.s32.totalorder %s34, 1
      %p388 = por %p386, %p387
      %p389 = scmp.ne.s32.totalorder %s380, %s381
      %p390 = scmp.eq.s32.totalorder %s34, 0
      %p391 = por %p389, %p390
      %p392 = scmp.ne.s32.totalorder %s380, %s381
      %p393 = scmp.eq.s32.totalorder %s35, 1
      %p394 = por %p392, %p393
      %p396 = scmp.ne.s32.totalorder %s381, %s395
      %p397 = scmp.eq.s32.totalorder %s35, 0
      %p398 = por %p396, %p397
      %s400 = sadd.s32 %s399, 1
      %p403 = scmp.eq.s32.totalorder %s29, 1
      %p404 = scmp.ne.s32.totalorder %s399, %s401
      %p405 = scmp.eq.s32.totalorder %s29, 0
      %p406 = por %p404, %p405
      %p407 = scmp.ne.s32.totalorder %s399, %s401
      %p408 = scmp.eq.s32.totalorder %s34, 1
      %p409 = por %p407, %p408
      %p410 = scmp.ne.s32.totalorder %s401, %s402
      %p411 = scmp.eq.s32.totalorder %s34, 0
      %p412 = por %p410, %p411
      %p413 = scmp.ne.s32.totalorder %s401, %s402
      %p414 = scmp.eq.s32.totalorder %s35, 1
      %p415 = por %p413, %p414
      %p417 = scmp.ne.s32.totalorder %s402, %s416
      %p418 = scmp.eq.s32.totalorder %s35, 0
      %p419 = por %p417, %p418
      %s420 = ssub.s32 %s29, %s36
      %p421 = scmp.eq.s32.totalorder %s420, 0
      %s423 = sadd.s32 %s422, 1
      %s424 = scalar_select %p421, %s422, %s423
      %p427 = pneg %p421
      %p428 = scmp.eq.s32.totalorder %s29, 1
      %p429 = por %p427, %p428
      %p430 = scmp.ne.s32.totalorder %s422, %s425
      %p431 = scmp.eq.s32.totalorder %s29, 0
      %p432 = por %p430, %p431
      %p433 = scmp.ne.s32.totalorder %s422, %s425
      %p434 = scmp.eq.s32.totalorder %s34, 1
      %p435 = por %p433, %p434
      %p436 = scmp.ne.s32.totalorder %s425, %s426
      %p437 = scmp.eq.s32.totalorder %s34, 0
      %p438 = por %p436, %p437
      %p439 = scmp.ne.s32.totalorder %s425, %s426
      %p440 = scmp.eq.s32.totalorder %s35, 1
      %p441 = por %p439, %p440
      %p443 = scmp.ne.s32.totalorder %s426, %s442
      %p444 = scmp.eq.s32.totalorder %s35, 0
      %p445 = por %p443, %p444
      %p446 = scmp.le.s32.totalorder 1, %s29
      %p447 = scmp.lt.s32.totalorder %s29, 3
      %p448 = pnand %p446, %p447
      %p449 = pneg %p448
      // Predicated region
      $region9: #{tpu_custom_call.1} parent=5 // pred_check
        _
      $region10: #{tpu_custom_call.1} parent=5 // pred_check_branch
        %451 = sbr.rel (%p448) target = $region12
      $region11: #{tpu_custom_call.1} parent=5 // pred_region
        %s452 = ssub.s32 %s29, 1
        // Predicated region
        $region13: #{tpu_custom_call.1} parent=11 // pred_check
          %p453 = pneg %p76
        $region14: #{tpu_custom_call.1} parent=11 // pred_check_branch
          %455 = sbr.rel (%p453) target = $region16
        $region15: #{tpu_custom_call.1} parent=11 // pred_region
          %s457 = ssub.s32 256, 256
          %458 = vsyncadd [#allocation3], %s457
          %s459 = sshll.u32 [#allocation2], 4
          %s460 = int_to_ptr.vmem [resolvable:$true] %s459
          %465 = dma.hbm_to_vmem [thread:$0]  %s1, 256, %s460, [#allocation3], 128, 128, 8
        $region16: #{tpu_custom_call.1} parent=11 // pred_fallthru
          _
        // Predicated region
        $region17: #{tpu_custom_call.1} parent=11 // pred_check
          %p466 = pneg %p97
        $region18: #{tpu_custom_call.1} parent=11 // pred_check_branch
          %468 = sbr.rel (%p466) target = $region20
        $region19: #{tpu_custom_call.1} parent=11 // pred_region
          _
        $region20: #{tpu_custom_call.1} parent=11 // pred_fallthru
          _
        // Predicated region
        $region21: #{tpu_custom_call.1} parent=11 // pred_check
          %p469 = pneg %p118
        $region22: #{tpu_custom_call.1} parent=11 // pred_check_branch
          %471 = sbr.rel (%p469) target = $region24
        $region23: #{tpu_custom_call.1} parent=11 // pred_region
          _
        $region24: #{tpu_custom_call.1} parent=11 // pred_fallthru
          _
        // Predicated region
        $region25: #{tpu_custom_call.1} parent=11 // pred_check
          %p472 = pneg %p139
        $region26: #{tpu_custom_call.1} parent=11 // pred_check_branch
          %474 = sbr.rel (%p472) target = $region28
        $region27: #{tpu_custom_call.1} parent=11 // pred_region
          %s476 = ssub.s32 128, 128
          %477 = vsyncadd [#allocation5], %s476
          %s479 = sshll.u32 [#allocation4], 4
          %s480 = int_to_ptr.vmem [resolvable:$true] %s479
          %482 = dma.hbm_to_vmem [thread:$0]  %s4, 128, %s480, [#allocation5]
        $region28: #{tpu_custom_call.1} parent=11 // pred_fallthru
          _
        // Predicated region
        $region29: #{tpu_custom_call.1} parent=11 // pred_check
          %p483 = pneg %p160
        $region30: #{tpu_custom_call.1} parent=11 // pred_check_branch
          %485 = sbr.rel (%p483) target = $region32
        $region31: #{tpu_custom_call.1} parent=11 // pred_region
          _
        $region32: #{tpu_custom_call.1} parent=11 // pred_fallthru
          _
        // Predicated region
        $region33: #{tpu_custom_call.1} parent=11 // pred_check
          %p486 = pneg %p181
        $region34: #{tpu_custom_call.1} parent=11 // pred_check_branch
          %488 = sbr.rel (%p486) target = $region36
        $region35: #{tpu_custom_call.1} parent=11 // pred_region
          %s490 = ssub.s32 128, 128
          %491 = vsyncadd [#allocation5], %s490
          %s493 = sshll.u32 [#allocation6], 4
          %s494 = int_to_ptr.vmem [resolvable:$true] %s493
          %496 = dma.hbm_to_vmem [thread:$0]  %s6, 128, %s494, [#allocation5]
        $region36: #{tpu_custom_call.1} parent=11 // pred_fallthru
          _
        // Predicated region
        $region37: #{tpu_custom_call.1} parent=11 // pred_check
          %p497 = pneg %p202
        $region38: #{tpu_custom_call.1} parent=11 // pred_check_branch
          %499 = sbr.rel (%p497) target = $region40
        $region39: #{tpu_custom_call.1} parent=11 // pred_region
          %s501 = ssub.s32 16, 16
          %502 = vsyncadd [#allocation8], %s501
          %s504 = sshll.u32 [#allocation7], 4
          %s505 = int_to_ptr.vmem [resolvable:$true] %s504
          %507 = dma.hbm_to_vmem [thread:$0]  %s7, 16, %s505, [#allocation8]
        $region40: #{tpu_custom_call.1} parent=11 // pred_fallthru
          _
        // Predicated region
        $region41: #{tpu_custom_call.1} parent=11 // pred_check
          %p508 = pneg %p223
        $region42: #{tpu_custom_call.1} parent=11 // pred_check_branch
          %510 = sbr.rel (%p508) target = $region44
        $region43: #{tpu_custom_call.1} parent=11 // pred_region
          _
        $region44: #{tpu_custom_call.1} parent=11 // pred_fallthru
          _
        // Predicated region
        $region45: #{tpu_custom_call.1} parent=11 // pred_check
          %p511 = pneg %p244
        $region46: #{tpu_custom_call.1} parent=11 // pred_check_branch
          %513 = sbr.rel (%p511) target = $region48
        $region47: #{tpu_custom_call.1} parent=11 // pred_region
          %s515 = ssub.s32 16, 16
          %516 = vsyncadd [#allocation8], %s515
          %s518 = sshll.u32 [#allocation9], 4
          %s519 = int_to_ptr.vmem [resolvable:$true] %s518
          %521 = dma.hbm_to_vmem [thread:$0]  %s9, 16, %s519, [#allocation8]
        $region48: #{tpu_custom_call.1} parent=11 // pred_fallthru
          _
        // Predicated region
        $region49: #{tpu_custom_call.1} parent=11 // pred_check
          %p522 = pneg %p265
        $region50: #{tpu_custom_call.1} parent=11 // pred_check_branch
          %524 = sbr.rel (%p522) target = $region52
        $region51: #{tpu_custom_call.1} parent=11 // pred_region
          _
        $region52: #{tpu_custom_call.1} parent=11 // pred_fallthru
          _
        // Predicated region
        $region53: #{tpu_custom_call.1} parent=11 // pred_check
          %p525 = pneg %p286
        $region54: #{tpu_custom_call.1} parent=11 // pred_check_branch
          %527 = sbr.rel (%p525) target = $region56
        $region55: #{tpu_custom_call.1} parent=11 // pred_region
          _
        $region56: #{tpu_custom_call.1} parent=11 // pred_fallthru
          _
        // Predicated region
        $region57: #{tpu_custom_call.1} parent=11 // pred_check
          %p528 = pneg %p307
        $region58: #{tpu_custom_call.1} parent=11 // pred_check_branch
          %530 = sbr.rel (%p528) target = $region60
        $region59: #{tpu_custom_call.1} parent=11 // pred_region
          %s532 = ssub.s32 2048, 2048
          %533 = vsyncadd [#allocation11], %s532
          %s534 = sshll.u32 [#allocation10], 4
          %s535 = int_to_ptr.vmem [resolvable:$true] %s534
          %540 = dma.hbm_to_vmem [thread:$0]  %s12, 2048, %s535, [#allocation11], 128, 128, 8
        $region60: #{tpu_custom_call.1} parent=11 // pred_fallthru
          _
        // Predicated region
        $region61: #{tpu_custom_call.1} parent=11 // pred_check
          %p541 = pneg %p328
        $region62: #{tpu_custom_call.1} parent=11 // pred_check_branch
          %543 = sbr.rel (%p541) target = $region64
        $region63: #{tpu_custom_call.1} parent=11 // pred_region
          _
        $region64: #{tpu_custom_call.1} parent=11 // pred_fallthru
          _
        // Predicated region
        $region65: #{tpu_custom_call.1} parent=11 // pred_check
          %p544 = pneg %p349
        $region66: #{tpu_custom_call.1} parent=11 // pred_check_branch
          %546 = sbr.rel (%p544) target = $region68
        $region67: #{tpu_custom_call.1} parent=11 // pred_region
          %s548 = ssub.s32 2048, 2048
          %549 = vsyncadd [#allocation11], %s548
          %s550 = sshll.u32 [#allocation12], 4
          %s551 = int_to_ptr.vmem [resolvable:$true] %s550
          %556 = dma.hbm_to_vmem [thread:$0]  %s14, 2048, %s551, [#allocation11], 128, 128, 8
        $region68: #{tpu_custom_call.1} parent=11 // pred_fallthru
          _
        // Predicated region
        $region69: #{tpu_custom_call.1} parent=11 // pred_check
          %p557 = pneg %p370
        $region70: #{tpu_custom_call.1} parent=11 // pred_check_branch
          %559 = sbr.rel (%p557) target = $region72
        $region71: #{tpu_custom_call.1} parent=11 // pred_region
          _
        $region72: #{tpu_custom_call.1} parent=11 // pred_fallthru
          _
        // Predicated region
        $region73: #{tpu_custom_call.1} parent=11 // pred_check
          %p560 = pneg %p391
        $region74: #{tpu_custom_call.1} parent=11 // pred_check_branch
          %562 = sbr.rel (%p560) target = $region76
        $region75: #{tpu_custom_call.1} parent=11 // pred_region
          %s564 = ssub.s32 2048, 2048
          %565 = vsyncadd [#allocation14], %s564
          %s566 = sshll.u32 [#allocation13], 4
          %s567 = int_to_ptr.vmem [resolvable:$true] %s566
          %572 = dma.hbm_to_vmem [thread:$0]  %s16, 2048, %s567, [#allocation14], 128, 128, 8
        $region76: #{tpu_custom_call.1} parent=11 // pred_fallthru
          _
        // Predicated region
        $region77: #{tpu_custom_call.1} parent=11 // pred_check
          %p573 = pneg %p412
        $region78: #{tpu_custom_call.1} parent=11 // pred_check_branch
          %575 = sbr.rel (%p573) target = $region80
        $region79: #{tpu_custom_call.1} parent=11 // pred_region
          _
        $region80: #{tpu_custom_call.1} parent=11 // pred_fallthru
          _
      $region12: #{tpu_custom_call.1} parent=5 // pred_fallthru
        _
      %p576 = scmp.lt.s32.totalorder %s29, 2
      // Predicated region
      $region81: #{tpu_custom_call.1} parent=5 // pred_check
        %p577 = pneg %p576
      $region82: #{tpu_custom_call.1} parent=5 // pred_check_branch
        %579 = sbr.rel (%p577) target = $region84
      $region83: #{tpu_custom_call.1} parent=5 // pred_region
        // Predicated region
        $region85: #{tpu_custom_call.1} parent=83 // pred_check
          %p580 = pneg %p49
        $region86: #{tpu_custom_call.1} parent=83 // pred_check_branch
          %582 = sbr.rel (%p580) target = $region88
        $region87: #{tpu_custom_call.1} parent=83 // pred_region
          %s583 = smul.u32 8, %s29
          %p584 = scmp.lt.s32.totalorder %s583, 15
          %s585 = scalar_select %p584, %s583, 15
          %s586 = smul.addr %s585, 8
          %s587 = scalar_lea.vmem %s0, %s586
          %s588 = smul.u32 8, %s29
        $region88: #{tpu_custom_call.1} parent=83 // pred_fallthru
          _
      $region84: #{tpu_custom_call.1} parent=5 // pred_fallthru
        _
      %p589 = scmp.le.s32.totalorder 1, %s29
      %p590 = scmp.lt.s32.totalorder %s29, 3
      %p591 = pnand %p589, %p590
      %p592 = pneg %p591
      // Predicated region
      $region89: #{tpu_custom_call.1} parent=5 // pred_check
        _
      $region90: #{tpu_custom_call.1} parent=5 // pred_check_branch
        %594 = sbr.rel (%p591) target = $region92
      $region91: #{tpu_custom_call.1} parent=5 // pred_region
        %s595 = ssub.s32 %s29, 1
        // Predicated region
        $region93: #{tpu_custom_call.1} parent=91 // pred_check
          %p596 = pneg %p76
        $region94: #{tpu_custom_call.1} parent=91 // pred_check_branch
          %598 = sbr.rel (%p596) target = $region96
        $region95: #{tpu_custom_call.1} parent=91 // pred_region
          %599 = dma.done [#allocation3], 256
        $region96: #{tpu_custom_call.1} parent=91 // pred_fallthru
          _
        // Predicated region
        $region97: #{tpu_custom_call.1} parent=91 // pred_check
          %p600 = pneg %p139
        $region98: #{tpu_custom_call.1} parent=91 // pred_check_branch
          %602 = sbr.rel (%p600) target = $region100
        $region99: #{tpu_custom_call.1} parent=91 // pred_region
          %603 = dma.done [#allocation5], 128
        $region100: #{tpu_custom_call.1} parent=91 // pred_fallthru
          _
        // Predicated region
        $region101: #{tpu_custom_call.1} parent=91 // pred_check
          %p604 = pneg %p181
        $region102: #{tpu_custom_call.1} parent=91 // pred_check_branch
          %606 = sbr.rel (%p604) target = $region104
        $region103: #{tpu_custom_call.1} parent=91 // pred_region
          %607 = dma.done [#allocation5], 128
        $region104: #{tpu_custom_call.1} parent=91 // pred_fallthru
          _
        // Predicated region
        $region105: #{tpu_custom_call.1} parent=91 // pred_check
          %p608 = pneg %p202
        $region106: #{tpu_custom_call.1} parent=91 // pred_check_branch
          %610 = sbr.rel (%p608) target = $region108
        $region107: #{tpu_custom_call.1} parent=91 // pred_region
          %611 = dma.done [#allocation8], 16
        $region108: #{tpu_custom_call.1} parent=91 // pred_fallthru
          _
        // Predicated region
        $region109: #{tpu_custom_call.1} parent=91 // pred_check
          %p612 = pneg %p244
        $region110: #{tpu_custom_call.1} parent=91 // pred_check_branch
          %614 = sbr.rel (%p612) target = $region112
        $region111: #{tpu_custom_call.1} parent=91 // pred_region
          %615 = dma.done [#allocation8], 16
        $region112: #{tpu_custom_call.1} parent=91 // pred_fallthru
          _
        // Predicated region
        $region113: #{tpu_custom_call.1} parent=91 // pred_check
          %p616 = pneg %p307
        $region114: #{tpu_custom_call.1} parent=91 // pred_check_branch
          %618 = sbr.rel (%p616) target = $region116
        $region115: #{tpu_custom_call.1} parent=91 // pred_region
          %619 = dma.done [#allocation11], 2048
        $region116: #{tpu_custom_call.1} parent=91 // pred_fallthru
          _
        // Predicated region
        $region117: #{tpu_custom_call.1} parent=91 // pred_check
          %p620 = pneg %p349
        $region118: #{tpu_custom_call.1} parent=91 // pred_check_branch
          %622 = sbr.rel (%p620) target = $region120
        $region119: #{tpu_custom_call.1} parent=91 // pred_region
          %623 = dma.done [#allocation11], 2048
        $region120: #{tpu_custom_call.1} parent=91 // pred_fallthru
          _
        // Predicated region
        $region121: #{tpu_custom_call.1} parent=91 // pred_check
          %p624 = pneg %p391
        $region122: #{tpu_custom_call.1} parent=91 // pred_check_branch
          %626 = sbr.rel (%p624) target = $region124
        $region123: #{tpu_custom_call.1} parent=91 // pred_region
          %627 = dma.done [#allocation14], 2048
        $region124: #{tpu_custom_call.1} parent=91 // pred_fallthru
          _
        %s628 = smul.u32 8, %s34
        %p629 = scmp.lt.s32.totalorder %s628, 15
        %s630 = scalar_select %p629, %s628, 15
        %s631 = smul.addr %s630, 8
        %s632 = scalar_lea.vmem %s0, %s631
        %p633 = pneg %p55
        %p634 = pneg %p52
        %p635 = pneg %p76
        %p636 = pneg %p73
        %p637 = pneg %p97
        %p638 = pneg %p94
        %p639 = pneg %p118
        %p640 = pneg %p115
        %p641 = pneg %p139
        %p642 = pneg %p136
        %p643 = pneg %p160
        %p644 = pneg %p157
        %p645 = pneg %p181
        %p646 = pneg %p178
        %p647 = pneg %p202
        %p648 = pneg %p199
        %p649 = pneg %p223
        %p650 = pneg %p220
        %p651 = pneg %p244
        %p652 = pneg %p241
        %p653 = pneg %p265
        %p654 = pneg %p262
        %p655 = pneg %p286
        %p656 = pneg %p283
        %p657 = pneg %p307
        %p658 = pneg %p304
        %p659 = pneg %p328
        %p660 = pneg %p325
        %p661 = pneg %p349
        %p662 = pneg %p346
        %p663 = pneg %p370
        %p664 = pneg %p367
        %p665 = pneg %p391
        %p666 = pneg %p388
        %p667 = pneg %p412
        %p668 = pneg %p409
        %p669 = pneg %p438
        %p670 = pneg %p435
        %s671 = smul.u32 8, %s34
        %p672 = scmp.lt.s32.totalorder %s671, 15
        %s673 = scalar_select %p672, %s671, 15
        %s674 = smul.addr %s673, 8
        %s675 = scalar_lea.vmem %s18, %s674
        %s676 = smul.u32 8, %s34
        %p677 = scmp.lt.s32.totalorder %s676, 15
        %s678 = scalar_select %p677, %s676, 15
        %s679 = smul.addr %s678, 8
        %s680 = scalar_lea.vmem %s0, %s679
        %s681 = smul.u32 8, %s34
        %s682 = smul.u32 8, %s34
        %p683 = scmp.lt.s32.totalorder %s682, 15
        %s684 = scalar_select %p683, %s682, 15
        %s685 = smul.addr %s684, 8
        %s686 = scalar_lea.vmem %s18, %s685
        %s687 = smul.u32 8, %s34
        %v688 = vld [vmem:[%s680] sm:$0xff]
        %v689 = vld [vmem:[%s680 + $0x8] sm:$0xff]
        %v690 = vld [vmem:[%s680 + $0x10] sm:$0xff]
        %v691 = vld [vmem:[%s680 + $0x18] sm:$0xff]
        %v692 = vld [vmem:[%s680 + $0x20] sm:$0xff]
        %v693 = vld [vmem:[%s680 + $0x28] sm:$0xff]
        %v694 = vld [vmem:[%s680 + $0x30] sm:$0xff]
        %v695 = vld [vmem:[%s680 + $0x38] sm:$0xff]
        %v696 = vld [vmem:[#allocation4] sm:$0xff]
        %v697 = vld [vmem:[%s5] sm:$0x1]
        %v699 = vlaneseq
        %v700 = vshrl.u32 %v699, 7
        %v701 = vsub.s32 0, %v700
        %v702 = vrot.slane %v697, %v701
        %vm704 = vcmask 64512
        %v706 = vsel %vm704, %v688, 0
        %v709 = vsel %vm704, %v689, 0
        %v712 = vsel %vm704, %v690, 0
        %v715 = vsel %vm704, %v691, 0
        %v718 = vsel %vm704, %v692, 0
        %v721 = vsel %vm704, %v693, 0
        %v724 = vsel %vm704, %v694, 0
        %v727 = vsel %vm704, %v695, 0
        %729 = vmatprep.subr.mxu0 0.0
        %730 = vmatpush1.msra.mxu0 %v696
        %731 = vmatprep.subr.mxu0 0.0
        %732 = vmatpush1.msra.mxu0 0.0
        %733 = vmatprep.subr.mxu0 0.0
        %734 = vmatpush1.msra.mxu0 0.0
        %735 = vmatprep.subr.mxu0 0.0
        %736 = vmatpush1.msra.mxu0 0.0
        %737 = vmatprep.subr.mxu0 0.0
        %738 = vmatpush1.msra.mxu0 0.0
        %739 = vmatprep.subr.mxu0 0.0
        %740 = vmatpush1.msra.mxu0 0.0
        %741 = vmatprep.subr.mxu0 0.0
        %742 = vmatpush1.msra.mxu0 0.0
        %743 = vmatprep.subr.mxu0 0.0
        %744 = vmatpush1.msra.mxu0 0.0
        %745 = vmatprep.subr.mxu0 0.0
        %746 = vmatpush1.msra.mxu0 0.0
        %747 = vmatprep.subr.mxu0 0.0
        %748 = vmatpush1.msra.mxu0 0.0
        %749 = vmatprep.subr.mxu0 0.0
        %750 = vmatpush1.msra.mxu0 0.0
        %751 = vmatprep.subr.mxu0 0.0
        %752 = vmatpush1.msra.mxu0 0.0
        %753 = vmatprep.subr.mxu0 0.0
        %754 = vmatpush1.msra.mxu0 0.0
        %755 = vmatprep.subr.mxu0 0.0
        %756 = vmatpush1.msra.mxu0 0.0
        %757 = vmatprep.subr.mxu0 0.0
        %758 = vmatpush1.msra.mxu0 0.0
        %759 = vmatprep.subr.mxu0 0.0
        %760 = vmatpush1.msra.mxu0 0.0
        %761 = vmatprep.subr.mxu0 0.0
        %762 = vmatpush1.msra.mxu0 0.0
        %763 = vmatprep.subr.mxu0 0.0
        %764 = vmatpush1.msra.mxu0 0.0
        %765 = vmatprep.subr.mxu0 0.0
        %766 = vmatpush1.msra.mxu0 0.0
        %767 = vmatprep.subr.mxu0 0.0
        %768 = vmatpush1.msra.mxu0 0.0
        %769 = vmatprep.subr.mxu0 0.0
        %770 = vmatpush1.msra.mxu0 0.0
        %771 = vmatprep.subr.mxu0 0.0
        %772 = vmatpush1.msra.mxu0 0.0
        %773 = vmatprep.subr.mxu0 0.0
        %774 = vmatpush1.msra.mxu0 0.0
        %775 = vmatprep.subr.mxu0 0.0
        %776 = vmatpush1.msra.mxu0 0.0
        %777 = vmatprep.subr.mxu0 0.0
        %778 = vmatpush1.msra.mxu0 0.0
        %779 = vmatprep.subr.mxu0 0.0
        %780 = vmatpush1.msra.mxu0 0.0
        %781 = vmatprep.subr.mxu0 0.0
        %782 = vmatpush1.msra.mxu0 0.0
        %783 = vmatprep.subr.mxu0 0.0
        %784 = vmatpush1.msra.mxu0 0.0
        %785 = vmatprep.subr.mxu0 0.0
        %786 = vmatpush1.msra.mxu0 0.0
        %787 = vmatprep.subr.mxu0 0.0
        %788 = vmatpush1.msra.mxu0 0.0
        %789 = vmatprep.subr.mxu0 0.0
        %790 = vmatpush1.msra.mxu0 0.0
        %791 = vmatprep.subr.mxu0 0.0
        %792 = vmatpush1.msra.mxu0 0.0
        %793 = vmatprep.mubr.f32.mxu0 0.0
        %794 = vmatmul.mubr.f32.gmra.mrb[0].mxu0 %v706
        %v795 = vpop.f32.mrb[0].mxu0
        %v796 = vadd.f32 %v702, %v795
        %v797 = vpop.f32.mrb[0].mxu0
        %798 = vmatprep.mubr.f32.mxu0 0.0
        %799 = vmatmul.mubr.f32.gmra.mrb[0].mxu0 %v709
        %v800 = vpop.f32.mrb[0].mxu0
        %v801 = vadd.f32 %v702, %v800
        %v802 = vpop.f32.mrb[0].mxu0
        %803 = vmatprep.mubr.f32.mxu0 0.0
        %804 = vmatmul.mubr.f32.gmra.mrb[0].mxu0 %v712
        %v805 = vpop.f32.mrb[0].mxu0
        %v806 = vadd.f32 %v702, %v805
        %v807 = vpop.f32.mrb[0].mxu0
        %808 = vmatprep.mubr.f32.mxu0 0.0
        %809 = vmatmul.mubr.f32.gmra.mrb[0].mxu0 %v715
        %v810 = vpop.f32.mrb[0].mxu0
        %v811 = vadd.f32 %v702, %v810
        %v812 = vpop.f32.mrb[0].mxu0
        %813 = vmatprep.mubr.f32.mxu0 0.0
        %814 = vmatmul.mubr.f32.gmra.mrb[0].mxu0 %v718
        %v815 = vpop.f32.mrb[0].mxu0
        %v816 = vadd.f32 %v702, %v815
        %v817 = vpop.f32.mrb[0].mxu0
        %818 = vmatprep.mubr.f32.mxu0 0.0
        %819 = vmatmul.mubr.f32.gmra.mrb[0].mxu0 %v721
        %v820 = vpop.f32.mrb[0].mxu0
        %v821 = vadd.f32 %v702, %v820
        %v822 = vpop.f32.mrb[0].mxu0
        %823 = vmatprep.mubr.f32.mxu0 0.0
        %824 = vmatmul.mubr.f32.gmra.mrb[0].mxu0 %v724
        %v825 = vpop.f32.mrb[0].mxu0
        %v826 = vadd.f32 %v702, %v825
        %v827 = vpop.f32.mrb[0].mxu0
        %828 = vmatprep.mubr.f32.mxu0 0.0
        %829 = vmatmul.mubr.f32.gmra.mrb[0].mxu0 %v727
        %v830 = vpop.f32.mrb[0].mxu0
        %v831 = vadd.f32 %v702, %v830
        %v832 = vpop.f32.mrb[0].mxu0
        %833 = vdwg.mxu0
        %v834 = vld [vmem:[#allocation6] sm:$0xff]
        %v835 = vld [vmem:[#allocation7] sm:$0x1]
        %v837 = vlaneseq
        %v838 = vshrl.u32 %v837, 7
        %v839 = vsub.s32 0, %v838
        %v840 = vrot.slane %v835, %v839
        %842 = vmatprep.subr.mxu0 0.0
        %843 = vmatpush1.msra.mxu0 %v834
        %844 = vmatprep.subr.mxu0 0.0
        %845 = vmatpush1.msra.mxu0 0.0
        %846 = vmatprep.subr.mxu0 0.0
        %847 = vmatpush1.msra.mxu0 0.0
        %848 = vmatprep.subr.mxu0 0.0
        %849 = vmatpush1.msra.mxu0 0.0
        %850 = vmatprep.subr.mxu0 0.0
        %851 = vmatpush1.msra.mxu0 0.0
        %852 = vmatprep.subr.mxu0 0.0
        %853 = vmatpush1.msra.mxu0 0.0
        %854 = vmatprep.subr.mxu0 0.0
        %855 = vmatpush1.msra.mxu0 0.0
        %856 = vmatprep.subr.mxu0 0.0
        %857 = vmatpush1.msra.mxu0 0.0
        %858 = vmatprep.subr.mxu0 0.0
        %859 = vmatpush1.msra.mxu0 0.0
        %860 = vmatprep.subr.mxu0 0.0
        %861 = vmatpush1.msra.mxu0 0.0
        %862 = vmatprep.subr.mxu0 0.0
        %863 = vmatpush1.msra.mxu0 0.0
        %864 = vmatprep.subr.mxu0 0.0
        %865 = vmatpush1.msra.mxu0 0.0
        %866 = vmatprep.subr.mxu0 0.0
        %867 = vmatpush1.msra.mxu0 0.0
        %868 = vmatprep.subr.mxu0 0.0
        %869 = vmatpush1.msra.mxu0 0.0
        %870 = vmatprep.subr.mxu0 0.0
        %871 = vmatpush1.msra.mxu0 0.0
        %872 = vmatprep.subr.mxu0 0.0
        %873 = vmatpush1.msra.mxu0 0.0
        %874 = vmatprep.subr.mxu0 0.0
        %875 = vmatpush1.msra.mxu0 0.0
        %876 = vmatprep.subr.mxu0 0.0
        %877 = vmatpush1.msra.mxu0 0.0
        %878 = vmatprep.subr.mxu0 0.0
        %879 = vmatpush1.msra.mxu0 0.0
        %880 = vmatprep.subr.mxu0 0.0
        %881 = vmatpush1.msra.mxu0 0.0
        %882 = vmatprep.subr.mxu0 0.0
        %883 = vmatpush1.msra.mxu0 0.0
        %884 = vmatprep.subr.mxu0 0.0
        %885 = vmatpush1.msra.mxu0 0.0
        %886 = vmatprep.subr.mxu0 0.0
        %887 = vmatpush1.msra.mxu0 0.0
        %888 = vmatprep.subr.mxu0 0.0
        %889 = vmatpush1.msra.mxu0 0.0
        %890 = vmatprep.subr.mxu0 0.0
        %891 = vmatpush1.msra.mxu0 0.0
        %892 = vmatprep.subr.mxu0 0.0
        %893 = vmatpush1.msra.mxu0 0.0
        %894 = vmatprep.subr.mxu0 0.0
        %895 = vmatpush1.msra.mxu0 0.0
        %896 = vmatprep.subr.mxu0 0.0
        %897 = vmatpush1.msra.mxu0 0.0
        %898 = vmatprep.subr.mxu0 0.0
        %899 = vmatpush1.msra.mxu0 0.0
        %900 = vmatprep.subr.mxu0 0.0
        %901 = vmatpush1.msra.mxu0 0.0
        %902 = vmatprep.subr.mxu0 0.0
        %903 = vmatpush1.msra.mxu0 0.0
        %904 = vmatprep.subr.mxu0 0.0
        %905 = vmatpush1.msra.mxu0 0.0
        %906 = vmatprep.mubr.f32.mxu0 0.0
        %907 = vmatmul.mubr.f32.gmra.mrb[0].mxu0 %v706
        %v908 = vpop.f32.mrb[0].mxu0
        %v909 = vadd.f32 %v840, %v908
        %v910 = vpop.f32.mrb[0].mxu0
        %911 = vmatprep.mubr.f32.mxu0 0.0
        %912 = vmatmul.mubr.f32.gmra.mrb[0].mxu0 %v709
        %v913 = vpop.f32.mrb[0].mxu0
        %v914 = vadd.f32 %v840, %v913
        %v915 = vpop.f32.mrb[0].mxu0
        %916 = vmatprep.mubr.f32.mxu0 0.0
        %917 = vmatmul.mubr.f32.gmra.mrb[0].mxu0 %v712
        %v918 = vpop.f32.mrb[0].mxu0
        %v919 = vadd.f32 %v840, %v918
        %v920 = vpop.f32.mrb[0].mxu0
        %921 = vmatprep.mubr.f32.mxu0 0.0
        %922 = vmatmul.mubr.f32.gmra.mrb[0].mxu0 %v715
        %v923 = vpop.f32.mrb[0].mxu0
        %v924 = vadd.f32 %v840, %v923
        %v925 = vpop.f32.mrb[0].mxu0
        %926 = vmatprep.mubr.f32.mxu0 0.0
        %927 = vmatmul.mubr.f32.gmra.mrb[0].mxu0 %v718
        %v928 = vpop.f32.mrb[0].mxu0
        %v929 = vadd.f32 %v840, %v928
        %v930 = vpop.f32.mrb[0].mxu0
        %931 = vmatprep.mubr.f32.mxu0 0.0
        %932 = vmatmul.mubr.f32.gmra.mrb[0].mxu0 %v721
        %v933 = vpop.f32.mrb[0].mxu0
        %v934 = vadd.f32 %v840, %v933
        %v935 = vpop.f32.mrb[0].mxu0
        %936 = vmatprep.mubr.f32.mxu0 0.0
        %937 = vmatmul.mubr.f32.gmra.mrb[0].mxu0 %v724
        %v938 = vpop.f32.mrb[0].mxu0
        %v939 = vadd.f32 %v840, %v938
        %v940 = vpop.f32.mrb[0].mxu0
        %941 = vmatprep.mubr.f32.mxu0 0.0
        %942 = vmatmul.mubr.f32.gmra.mrb[0].mxu0 %v727
        %v943 = vpop.f32.mrb[0].mxu0
        %v944 = vadd.f32 %v840, %v943
        %v945 = vpop.f32.mrb[0].mxu0
        %946 = vdwg.mxu0
        %v947 = vld [vmem:[%s10] sm:$0xff]
        %v948 = vld [vmem:[%s11] sm:$0x1]
        %v950 = vlaneseq
        %v951 = vshrl.u32 %v950, 7
        %v952 = vsub.s32 0, %v951
        %v953 = vrot.slane %v948, %v952
        %955 = vmatprep.subr.mxu0 0.0
        %956 = vmatpush1.msra.mxu0 %v947
        %957 = vmatprep.subr.mxu0 0.0
        %958 = vmatpush1.msra.mxu0 0.0
        %959 = vmatprep.subr.mxu0 0.0
        %960 = vmatpush1.msra.mxu0 0.0
        %961 = vmatprep.subr.mxu0 0.0
        %962 = vmatpush1.msra.mxu0 0.0
        %963 = vmatprep.subr.mxu0 0.0
        %964 = vmatpush1.msra.mxu0 0.0
        %965 = vmatprep.subr.mxu0 0.0
        %966 = vmatpush1.msra.mxu0 0.0
        %967 = vmatprep.subr.mxu0 0.0
        %968 = vmatpush1.msra.mxu0 0.0
        %969 = vmatprep.subr.mxu0 0.0
        %970 = vmatpush1.msra.mxu0 0.0
        %971 = vmatprep.subr.mxu0 0.0
        %972 = vmatpush1.msra.mxu0 0.0
        %973 = vmatprep.subr.mxu0 0.0
        %974 = vmatpush1.msra.mxu0 0.0
        %975 = vmatprep.subr.mxu0 0.0
        %976 = vmatpush1.msra.mxu0 0.0
        %977 = vmatprep.subr.mxu0 0.0
        %978 = vmatpush1.msra.mxu0 0.0
        %979 = vmatprep.subr.mxu0 0.0
        %980 = vmatpush1.msra.mxu0 0.0
        %981 = vmatprep.subr.mxu0 0.0
        %982 = vmatpush1.msra.mxu0 0.0
        %983 = vmatprep.subr.mxu0 0.0
        %984 = vmatpush1.msra.mxu0 0.0
        %985 = vmatprep.subr.mxu0 0.0
        %986 = vmatpush1.msra.mxu0 0.0
        %987 = vmatprep.subr.mxu0 0.0
        %988 = vmatpush1.msra.mxu0 0.0
        %989 = vmatprep.subr.mxu0 0.0
        %990 = vmatpush1.msra.mxu0 0.0
        %991 = vmatprep.subr.mxu0 0.0
        %992 = vmatpush1.msra.mxu0 0.0
        %993 = vmatprep.subr.mxu0 0.0
        %994 = vmatpush1.msra.mxu0 0.0
        %995 = vmatprep.subr.mxu0 0.0
        %996 = vmatpush1.msra.mxu0 0.0
        %997 = vmatprep.subr.mxu0 0.0
        %998 = vmatpush1.msra.mxu0 0.0
        %999 = vmatprep.subr.mxu0 0.0
        %1000 = vmatpush1.msra.mxu0 0.0
        %1001 = vmatprep.subr.mxu0 0.0
        %1002 = vmatpush1.msra.mxu0 0.0
        %1003 = vmatprep.subr.mxu0 0.0
        %1004 = vmatpush1.msra.mxu0 0.0
        %1005 = vmatprep.subr.mxu0 0.0
        %1006 = vmatpush1.msra.mxu0 0.0
        %1007 = vmatprep.subr.mxu0 0.0
        %1008 = vmatpush1.msra.mxu0 0.0
        %1009 = vmatprep.subr.mxu0 0.0
        %1010 = vmatpush1.msra.mxu0 0.0
        %1011 = vmatprep.subr.mxu0 0.0
        %1012 = vmatpush1.msra.mxu0 0.0
        %1013 = vmatprep.subr.mxu0 0.0
        %1014 = vmatpush1.msra.mxu0 0.0
        %1015 = vmatprep.subr.mxu0 0.0
        %1016 = vmatpush1.msra.mxu0 0.0
        %1017 = vmatprep.subr.mxu0 0.0
        %1018 = vmatpush1.msra.mxu0 0.0
        %1019 = vmatprep.mubr.f32.mxu0 0.0
        %1020 = vmatmul.mubr.f32.gmra.mrb[0].mxu0 %v706
        %v1021 = vpop.f32.mrb[0].mxu0
        %v1022 = vadd.f32 %v953, %v1021
        %v1023 = vpop.f32.mrb[0].mxu0
        %1024 = vmatprep.mubr.f32.mxu0 0.0
        %1025 = vmatmul.mubr.f32.gmra.mrb[0].mxu0 %v709
        %v1026 = vpop.f32.mrb[0].mxu0
        %v1027 = vadd.f32 %v953, %v1026
        %v1028 = vpop.f32.mrb[0].mxu0
        %1029 = vmatprep.mubr.f32.mxu0 0.0
        %1030 = vmatmul.mubr.f32.gmra.mrb[0].mxu0 %v712
        %v1031 = vpop.f32.mrb[0].mxu0
        %v1032 = vadd.f32 %v953, %v1031
        %v1033 = vpop.f32.mrb[0].mxu0
        %1034 = vmatprep.mubr.f32.mxu0 0.0
        %1035 = vmatmul.mubr.f32.gmra.mrb[0].mxu0 %v715
        %v1036 = vpop.f32.mrb[0].mxu0
        %v1037 = vadd.f32 %v953, %v1036
        %v1038 = vpop.f32.mrb[0].mxu0
        %1039 = vmatprep.mubr.f32.mxu0 0.0
        %1040 = vmatmul.mubr.f32.gmra.mrb[0].mxu0 %v718
        %v1041 = vpop.f32.mrb[0].mxu0
        %v1042 = vadd.f32 %v953, %v1041
        %v1043 = vpop.f32.mrb[0].mxu0
        %1044 = vmatprep.mubr.f32.mxu0 0.0
        %1045 = vmatmul.mubr.f32.gmra.mrb[0].mxu0 %v721
        %v1046 = vpop.f32.mrb[0].mxu0
        %v1047 = vadd.f32 %v953, %v1046
        %v1048 = vpop.f32.mrb[0].mxu0
        %1049 = vmatprep.mubr.f32.mxu0 0.0
        %1050 = vmatmul.mubr.f32.gmra.mrb[0].mxu0 %v724
        %v1051 = vpop.f32.mrb[0].mxu0
        %v1052 = vadd.f32 %v953, %v1051
        %v1053 = vpop.f32.mrb[0].mxu0
        %1054 = vmatprep.mubr.f32.mxu0 0.0
        %1055 = vmatmul.mubr.f32.gmra.mrb[0].mxu0 %v727
        %v1056 = vpop.f32.mrb[0].mxu0
        %v1057 = vadd.f32 %v953, %v1056
        %v1058 = vpop.f32.mrb[0].mxu0
        %1059 = vdwg.mxu0
        %v1060 = vld [vmem:[#allocation2] sm:$0xff]
        %v1061 = vld [vmem:[#allocation2 + $0x8] sm:$0xff]
        %v1062 = vld [vmem:[%s2] sm:$0xff]
        %v1063 = vld [vmem:[%s2 + $0x8] sm:$0xff]
        %v1064 = vld [vmem:[%s2 + $0x10] sm:$0xff]
        %v1065 = vld [vmem:[%s2 + $0x18] sm:$0xff]
        %v1066 = vld [vmem:[%s3] sm:$0x1]
        %v1068 = vlaneseq
        %v1069 = vshrl.u32 %v1068, 7
        %v1070 = vsub.s32 0, %v1069
        %v1071 = vrot.slane %v1066, %v1070
        %vm1073 = vcmask 261120
        %v1075 = vsel %vm1073, %v1060, 0
        %v1078 = vsel %vm1073, %v1061, 0
        %1080 = vmatprep.subr.mxu0 0.0
        %1081 = vmatpush1.msra.mxu0 %v1062
        %1082 = vmatprep.subr.mxu0 0.0
        %1083 = vmatpush1.msra.mxu0 %v1063
        %1084 = vmatprep.subr.mxu0 0.0
        %1085 = vmatpush1.msra.mxu0 %v1064
        %1086 = vmatprep.subr.mxu0 0.0
        %1087 = vmatpush1.msra.mxu0 %v1065
        %1088 = vmatprep.subr.mxu0 0.0
        %1089 = vmatpush1.msra.mxu0 0.0
        %1090 = vmatprep.subr.mxu0 0.0
        %1091 = vmatpush1.msra.mxu0 0.0
        %1092 = vmatprep.subr.mxu0 0.0
        %1093 = vmatpush1.msra.mxu0 0.0
        %1094 = vmatprep.subr.mxu0 0.0
        %1095 = vmatpush1.msra.mxu0 0.0
        %1096 = vmatprep.subr.mxu0 0.0
        %1097 = vmatpush1.msra.mxu0 0.0
        %1098 = vmatprep.subr.mxu0 0.0
        %1099 = vmatpush1.msra.mxu0 0.0
        %1100 = vmatprep.subr.mxu0 0.0
        %1101 = vmatpush1.msra.mxu0 0.0
        %1102 = vmatprep.subr.mxu0 0.0
        %1103 = vmatpush1.msra.mxu0 0.0
        %1104 = vmatprep.subr.mxu0 0.0
        %1105 = vmatpush1.msra.mxu0 0.0
        %1106 = vmatprep.subr.mxu0 0.0
        %1107 = vmatpush1.msra.mxu0 0.0
        %1108 = vmatprep.subr.mxu0 0.0
        %1109 = vmatpush1.msra.mxu0 0.0
        %1110 = vmatprep.subr.mxu0 0.0
        %1111 = vmatpush1.msra.mxu0 0.0
        %1112 = vmatprep.subr.mxu0 0.0
        %1113 = vmatpush1.msra.mxu0 0.0
        %1114 = vmatprep.subr.mxu0 0.0
        %1115 = vmatpush1.msra.mxu0 0.0
        %1116 = vmatprep.subr.mxu0 0.0
        %1117 = vmatpush1.msra.mxu0 0.0
        %1118 = vmatprep.subr.mxu0 0.0
        %1119 = vmatpush1.msra.mxu0 0.0
        %1120 = vmatprep.subr.mxu0 0.0
        %1121 = vmatpush1.msra.mxu0 0.0
        %1122 = vmatprep.subr.mxu0 0.0
        %1123 = vmatpush1.msra.mxu0 0.0
        %1124 = vmatprep.subr.mxu0 0.0
        %1125 = vmatpush1.msra.mxu0 0.0
        %1126 = vmatprep.subr.mxu0 0.0
        %1127 = vmatpush1.msra.mxu0 0.0
        %1128 = vmatprep.subr.mxu0 0.0
        %1129 = vmatpush1.msra.mxu0 0.0
        %1130 = vmatprep.subr.mxu0 0.0
        %1131 = vmatpush1.msra.mxu0 0.0
        %1132 = vmatprep.subr.mxu0 0.0
        %1133 = vmatpush1.msra.mxu0 0.0
        %1134 = vmatprep.subr.mxu0 0.0
        %1135 = vmatpush1.msra.mxu0 0.0
        %1136 = vmatprep.subr.mxu0 0.0
        %1137 = vmatpush1.msra.mxu0 0.0
        %1138 = vmatprep.subr.mxu0 0.0
        %1139 = vmatpush1.msra.mxu0 0.0
        %1140 = vmatprep.subr.mxu0 0.0
        %1141 = vmatpush1.msra.mxu0 0.0
        %1142 = vmatprep.subr.mxu0 0.0
        %1143 = vmatpush1.msra.mxu0 0.0
        %1144 = vmatprep.mubr.f32.mxu0 0.0
        %1145 = vmatmul.mubr.f32.gmra.mrb[0].mxu0 %v1075
        %v1146 = vpop.f32.mrb[0].mxu0
        %v1147 = vadd.f32 %v1071, %v1146
        %v1148 = vpop.f32.mrb[0].mxu0
        %1149 = vmatprep.mubr.f32.mxu0 0.0
        %1150 = vmatmul.mubr.f32.gmra.mrb[0].mxu0 %v1078
        %v1151 = vpop.f32.mrb[0].mxu0
        %v1152 = vadd.f32 %v1071, %v1151
        %v1153 = vpop.f32.mrb[0].mxu0
        %1154 = vdwg.mxu0
        %1163 = vrot.lane.b32.xlu0 %v796, 96
        %v1164 = vpop.permute.xlu0 %1163
        %1165 = vrot.lane.b32.xlu0 %v801, 96
        %v1166 = vpop.permute.xlu0 %1165
        %1167 = vrot.lane.b32.xlu0 %v806, 96
        %v1168 = vpop.permute.xlu0 %1167
        %1169 = vrot.lane.b32.xlu0 %v811, 96
        %v1170 = vpop.permute.xlu0 %1169
        %1171 = vrot.lane.b32.xlu0 %v816, 96
        %v1172 = vpop.permute.xlu0 %1171
        %1173 = vrot.lane.b32.xlu0 %v821, 96
        %v1174 = vpop.permute.xlu0 %1173
        %1175 = vrot.lane.b32.xlu0 %v826, 96
        %v1176 = vpop.permute.xlu0 %1175
        %1177 = vrot.lane.b32.xlu0 %v831, 96
        %v1178 = vpop.permute.xlu0 %1177
        %1179 = vrot.lane.b32.xlu0 %v796, 64
        %v1180 = vpop.permute.xlu0 %1179
        %1181 = vrot.lane.b32.xlu0 %v801, 64
        %v1182 = vpop.permute.xlu0 %1181
        %1183 = vrot.lane.b32.xlu0 %v806, 64
        %v1184 = vpop.permute.xlu0 %1183
        %1185 = vrot.lane.b32.xlu0 %v811, 64
        %v1186 = vpop.permute.xlu0 %1185
        %1187 = vrot.lane.b32.xlu0 %v816, 64
        %v1188 = vpop.permute.xlu0 %1187
        %1189 = vrot.lane.b32.xlu0 %v821, 64
        %v1190 = vpop.permute.xlu0 %1189
        %1191 = vrot.lane.b32.xlu0 %v826, 64
        %v1192 = vpop.permute.xlu0 %1191
        %1193 = vrot.lane.b32.xlu0 %v831, 64
        %v1194 = vpop.permute.xlu0 %1193
        %1195 = vrot.lane.b32.xlu0 %v796, 32
        %v1196 = vpop.permute.xlu0 %1195
        %1197 = vrot.lane.b32.xlu0 %v801, 32
        %v1198 = vpop.permute.xlu0 %1197
        %1199 = vrot.lane.b32.xlu0 %v806, 32
        %v1200 = vpop.permute.xlu0 %1199
        %1201 = vrot.lane.b32.xlu0 %v811, 32
        %v1202 = vpop.permute.xlu0 %1201
        %1203 = vrot.lane.b32.xlu0 %v816, 32
        %v1204 = vpop.permute.xlu0 %1203
        %1205 = vrot.lane.b32.xlu0 %v821, 32
        %v1206 = vpop.permute.xlu0 %1205
        %1207 = vrot.lane.b32.xlu0 %v826, 32
        %v1208 = vpop.permute.xlu0 %1207
        %1209 = vrot.lane.b32.xlu0 %v831, 32
        %v1210 = vpop.permute.xlu0 %1209
        %1219 = vrot.lane.b32.xlu0 %v909, 96
        %v1220 = vpop.permute.xlu0 %1219
        %1221 = vrot.lane.b32.xlu0 %v914, 96
        %v1222 = vpop.permute.xlu0 %1221
        %1223 = vrot.lane.b32.xlu0 %v919, 96
        %v1224 = vpop.permute.xlu0 %1223
        %1225 = vrot.lane.b32.xlu0 %v924, 96
        %v1226 = vpop.permute.xlu0 %1225
        %1227 = vrot.lane.b32.xlu0 %v929, 96
        %v1228 = vpop.permute.xlu0 %1227
        %1229 = vrot.lane.b32.xlu0 %v934, 96
        %v1230 = vpop.permute.xlu0 %1229
        %1231 = vrot.lane.b32.xlu0 %v939, 96
        %v1232 = vpop.permute.xlu0 %1231
        %1233 = vrot.lane.b32.xlu0 %v944, 96
        %v1234 = vpop.permute.xlu0 %1233
        %1243 = vrot.lane.b32.xlu0 %v909, 64
        %v1244 = vpop.permute.xlu0 %1243
        %1245 = vrot.lane.b32.xlu0 %v914, 64
        %v1246 = vpop.permute.xlu0 %1245
        %1247 = vrot.lane.b32.xlu0 %v919, 64
        %v1248 = vpop.permute.xlu0 %1247
        %1249 = vrot.lane.b32.xlu0 %v924, 64
        %v1250 = vpop.permute.xlu0 %1249
        %1251 = vrot.lane.b32.xlu0 %v929, 64
        %v1252 = vpop.permute.xlu0 %1251
        %1253 = vrot.lane.b32.xlu0 %v934, 64
        %v1254 = vpop.permute.xlu0 %1253
        %1255 = vrot.lane.b32.xlu0 %v939, 64
        %v1256 = vpop.permute.xlu0 %1255
        %1257 = vrot.lane.b32.xlu0 %v944, 64
        %v1258 = vpop.permute.xlu0 %1257
        %1267 = vrot.lane.b32.xlu0 %v909, 32
        %v1268 = vpop.permute.xlu0 %1267
        %1269 = vrot.lane.b32.xlu0 %v914, 32
        %v1270 = vpop.permute.xlu0 %1269
        %1271 = vrot.lane.b32.xlu0 %v919, 32
        %v1272 = vpop.permute.xlu0 %1271
        %1273 = vrot.lane.b32.xlu0 %v924, 32
        %v1274 = vpop.permute.xlu0 %1273
        %1275 = vrot.lane.b32.xlu0 %v929, 32
        %v1276 = vpop.permute.xlu0 %1275
        %1277 = vrot.lane.b32.xlu0 %v934, 32
        %v1278 = vpop.permute.xlu0 %1277
        %1279 = vrot.lane.b32.xlu0 %v939, 32
        %v1280 = vpop.permute.xlu0 %1279
        %1281 = vrot.lane.b32.xlu0 %v944, 32
        %v1282 = vpop.permute.xlu0 %1281
        %1299 = vrot.lane.b32.xlu0 %v1022, 96
        %v1300 = vpop.permute.xlu0 %1299
        %1301 = vrot.lane.b32.xlu0 %v1027, 96
        %v1302 = vpop.permute.xlu0 %1301
        %1303 = vrot.lane.b32.xlu0 %v1032, 96
        %v1304 = vpop.permute.xlu0 %1303
        %1305 = vrot.lane.b32.xlu0 %v1037, 96
        %v1306 = vpop.permute.xlu0 %1305
        %1307 = vrot.lane.b32.xlu0 %v1042, 96
        %v1308 = vpop.permute.xlu0 %1307
        %1309 = vrot.lane.b32.xlu0 %v1047, 96
        %v1310 = vpop.permute.xlu0 %1309
        %1311 = vrot.lane.b32.xlu0 %v1052, 96
        %v1312 = vpop.permute.xlu0 %1311
        %1313 = vrot.lane.b32.xlu0 %v1057, 96
        %v1314 = vpop.permute.xlu0 %1313
        %1323 = vrot.lane.b32.xlu0 %v1022, 64
        %v1324 = vpop.permute.xlu0 %1323
        %1325 = vrot.lane.b32.xlu0 %v1027, 64
        %v1326 = vpop.permute.xlu0 %1325
        %1327 = vrot.lane.b32.xlu0 %v1032, 64
        %v1328 = vpop.permute.xlu0 %1327
        %1329 = vrot.lane.b32.xlu0 %v1037, 64
        %v1330 = vpop.permute.xlu0 %1329
        %1331 = vrot.lane.b32.xlu0 %v1042, 64
        %v1332 = vpop.permute.xlu0 %1331
        %1333 = vrot.lane.b32.xlu0 %v1047, 64
        %v1334 = vpop.permute.xlu0 %1333
        %1335 = vrot.lane.b32.xlu0 %v1052, 64
        %v1336 = vpop.permute.xlu0 %1335
        %1337 = vrot.lane.b32.xlu0 %v1057, 64
        %v1338 = vpop.permute.xlu0 %1337
        %1347 = vrot.lane.b32.xlu0 %v1022, 32
        %v1348 = vpop.permute.xlu0 %1347
        %1349 = vrot.lane.b32.xlu0 %v1027, 32
        %v1350 = vpop.permute.xlu0 %1349
        %1351 = vrot.lane.b32.xlu0 %v1032, 32
        %v1352 = vpop.permute.xlu0 %1351
        %1353 = vrot.lane.b32.xlu0 %v1037, 32
        %v1354 = vpop.permute.xlu0 %1353
        %1355 = vrot.lane.b32.xlu0 %v1042, 32
        %v1356 = vpop.permute.xlu0 %1355
        %1357 = vrot.lane.b32.xlu0 %v1047, 32
        %v1358 = vpop.permute.xlu0 %1357
        %1359 = vrot.lane.b32.xlu0 %v1052, 32
        %v1360 = vpop.permute.xlu0 %1359
        %1361 = vrot.lane.b32.xlu0 %v1057, 32
        %v1362 = vpop.permute.xlu0 %1361
        %1373 = vrot.lane.b32.xlu0 %v1147, 96
        %v1374 = vpop.permute.xlu0 %1373
        %1375 = vrot.lane.b32.xlu0 %v1152, 96
        %v1376 = vpop.permute.xlu0 %1375
        %1379 = vrot.lane.b32.xlu0 %v1147, 64
        %v1380 = vpop.permute.xlu0 %1379
        %1381 = vrot.lane.b32.xlu0 %v1152, 64
        %v1382 = vpop.permute.xlu0 %1381
        %1385 = vrot.lane.b32.xlu0 %v1147, 32
        %v1386 = vpop.permute.xlu0 %1385
        %1387 = vrot.lane.b32.xlu0 %v1152, 32
        %v1388 = vpop.permute.xlu0 %1387
        %v1391 = vsel %vm1073, %v1147, 0
        %v1393 = vsel %vm1073, %v1152, 0
        %v1395 = vsel %vm1073, %v796, 0
        %v1397 = vsel %vm1073, %v801, 0
        %v1399 = vsel %vm1073, %v806, 0
        %v1401 = vsel %vm1073, %v811, 0
        %1403 = vmatprep.subr.mxu0 0.0
        %1404 = vmatpush1.xpose.msra.mxu0 %v1395
        %1405 = vmatprep.subr.mxu0 0.0
        %1406 = vmatpush1.xpose.msra.mxu0 %v1397
        %1407 = vmatprep.subr.mxu0 0.0
        %1408 = vmatpush1.xpose.msra.mxu0 %v1399
        %1409 = vmatprep.subr.mxu0 0.0
        %1410 = vmatpush1.xpose.msra.mxu0 %v1401
        %1411 = vmatprep.subr.mxu0 0.0
        %1412 = vmatpush1.xpose.msra.mxu0 0.0
        %1413 = vmatprep.subr.mxu0 0.0
        %1414 = vmatpush1.xpose.msra.mxu0 0.0
        %1415 = vmatprep.subr.mxu0 0.0
        %1416 = vmatpush1.xpose.msra.mxu0 0.0
        %1417 = vmatprep.subr.mxu0 0.0
        %1418 = vmatpush1.xpose.msra.mxu0 0.0
        %1419 = vmatprep.subr.mxu0 0.0
        %1420 = vmatpush1.xpose.msra.mxu0 0.0
        %1421 = vmatprep.subr.mxu0 0.0
        %1422 = vmatpush1.xpose.msra.mxu0 0.0
        %1423 = vmatprep.subr.mxu0 0.0
        %1424 = vmatpush1.xpose.msra.mxu0 0.0
        %1425 = vmatprep.subr.mxu0 0.0
        %1426 = vmatpush1.xpose.msra.mxu0 0.0
        %1427 = vmatprep.subr.mxu0 0.0
        %1428 = vmatpush1.xpose.msra.mxu0 0.0
        %1429 = vmatprep.subr.mxu0 0.0
        %1430 = vmatpush1.xpose.msra.mxu0 0.0
        %1431 = vmatprep.subr.mxu0 0.0
        %1432 = vmatpush1.xpose.msra.mxu0 0.0
        %1433 = vmatprep.subr.mxu0 0.0
        %1434 = vmatpush1.xpose.msra.mxu0 0.0
        %1435 = vmatprep.subr.mxu0 0.0
        %1436 = vmatpush1.xpose.msra.mxu0 0.0
        %1437 = vmatprep.subr.mxu0 0.0
        %1438 = vmatpush1.xpose.msra.mxu0 0.0
        %1439 = vmatprep.subr.mxu0 0.0
        %1440 = vmatpush1.xpose.msra.mxu0 0.0
        %1441 = vmatprep.subr.mxu0 0.0
        %1442 = vmatpush1.xpose.msra.mxu0 0.0
        %1443 = vmatprep.subr.mxu0 0.0
        %1444 = vmatpush1.xpose.msra.mxu0 0.0
        %1445 = vmatprep.subr.mxu0 0.0
        %1446 = vmatpush1.xpose.msra.mxu0 0.0
        %1447 = vmatprep.subr.mxu0 0.0
        %1448 = vmatpush1.xpose.msra.mxu0 0.0
        %1449 = vmatprep.subr.mxu0 0.0
        %1450 = vmatpush1.xpose.msra.mxu0 0.0
        %1451 = vmatprep.subr.mxu0 0.0
        %1452 = vmatpush1.xpose.msra.mxu0 0.0
        %1453 = vmatprep.subr.mxu0 0.0
        %1454 = vmatpush1.xpose.msra.mxu0 0.0
        %1455 = vmatprep.subr.mxu0 0.0
        %1456 = vmatpush1.xpose.msra.mxu0 0.0
        %1457 = vmatprep.subr.mxu0 0.0
        %1458 = vmatpush1.xpose.msra.mxu0 0.0
        %1459 = vmatprep.subr.mxu0 0.0
        %1460 = vmatpush1.xpose.msra.mxu0 0.0
        %1461 = vmatprep.subr.mxu0 0.0
        %1462 = vmatpush1.xpose.msra.mxu0 0.0
        %1463 = vmatprep.subr.mxu0 0.0
        %1464 = vmatpush1.xpose.msra.mxu0 0.0
        %1465 = vmatprep.subr.mxu0 0.0
        %1466 = vmatpush1.xpose.msra.mxu0 0.0
        %1467 = vmatprep.mubr.f32.mxu0 0.0
        %1468 = vmatmul.mubr.f32.gmra.mrb[0].mxu0 %v1391
        %v1469 = vpop.f32.mrb[0].mxu0
        %v1470 = vadd.f32 0.0, %v1469
        %v1471 = vpop.f32.mrb[0].mxu0
        %1472 = vmatprep.mubr.f32.mxu0 0.0
        %1473 = vmatmul.mubr.f32.gmra.mrb[0].mxu0 %v1393
        %v1474 = vpop.f32.mrb[0].mxu0
        %v1475 = vadd.f32 0.0, %v1474
        %v1476 = vpop.f32.mrb[0].mxu0
        %1477 = vdwg.mxu0
        %v1478 = vsel %vm1073, %v1374, 0
        %v1480 = vsel %vm1073, %v1376, 0
        %v1482 = vsel %vm1073, %v1164, 0
        %v1484 = vsel %vm1073, %v1166, 0
        %v1486 = vsel %vm1073, %v1168, 0
        %v1488 = vsel %vm1073, %v1170, 0
        %1490 = vmatprep.subr.mxu0 0.0
        %1491 = vmatpush1.xpose.msra.mxu0 %v1482
        %1492 = vmatprep.subr.mxu0 0.0
        %1493 = vmatpush1.xpose.msra.mxu0 %v1484
        %1494 = vmatprep.subr.mxu0 0.0
        %1495 = vmatpush1.xpose.msra.mxu0 %v1486
        %1496 = vmatprep.subr.mxu0 0.0
        %1497 = vmatpush1.xpose.msra.mxu0 %v1488
        %1498 = vmatprep.subr.mxu0 0.0
        %1499 = vmatpush1.xpose.msra.mxu0 0.0
        %1500 = vmatprep.subr.mxu0 0.0
        %1501 = vmatpush1.xpose.msra.mxu0 0.0
        %1502 = vmatprep.subr.mxu0 0.0
        %1503 = vmatpush1.xpose.msra.mxu0 0.0
        %1504 = vmatprep.subr.mxu0 0.0
        %1505 = vmatpush1.xpose.msra.mxu0 0.0
        %1506 = vmatprep.subr.mxu0 0.0
        %1507 = vmatpush1.xpose.msra.mxu0 0.0
        %1508 = vmatprep.subr.mxu0 0.0
        %1509 = vmatpush1.xpose.msra.mxu0 0.0
        %1510 = vmatprep.subr.mxu0 0.0
        %1511 = vmatpush1.xpose.msra.mxu0 0.0
        %1512 = vmatprep.subr.mxu0 0.0
        %1513 = vmatpush1.xpose.msra.mxu0 0.0
        %1514 = vmatprep.subr.mxu0 0.0
        %1515 = vmatpush1.xpose.msra.mxu0 0.0
        %1516 = vmatprep.subr.mxu0 0.0
        %1517 = vmatpush1.xpose.msra.mxu0 0.0
        %1518 = vmatprep.subr.mxu0 0.0
        %1519 = vmatpush1.xpose.msra.mxu0 0.0
        %1520 = vmatprep.subr.mxu0 0.0
        %1521 = vmatpush1.xpose.msra.mxu0 0.0
        %1522 = vmatprep.subr.mxu0 0.0
        %1523 = vmatpush1.xpose.msra.mxu0 0.0
        %1524 = vmatprep.subr.mxu0 0.0
        %1525 = vmatpush1.xpose.msra.mxu0 0.0
        %1526 = vmatprep.subr.mxu0 0.0
        %1527 = vmatpush1.xpose.msra.mxu0 0.0
        %1528 = vmatprep.subr.mxu0 0.0
        %1529 = vmatpush1.xpose.msra.mxu0 0.0
        %1530 = vmatprep.subr.mxu0 0.0
        %1531 = vmatpush1.xpose.msra.mxu0 0.0
        %1532 = vmatprep.subr.mxu0 0.0
        %1533 = vmatpush1.xpose.msra.mxu0 0.0
        %1534 = vmatprep.subr.mxu0 0.0
        %1535 = vmatpush1.xpose.msra.mxu0 0.0
        %1536 = vmatprep.subr.mxu0 0.0
        %1537 = vmatpush1.xpose.msra.mxu0 0.0
        %1538 = vmatprep.subr.mxu0 0.0
        %1539 = vmatpush1.xpose.msra.mxu0 0.0
        %1540 = vmatprep.subr.mxu0 0.0
        %1541 = vmatpush1.xpose.msra.mxu0 0.0
        %1542 = vmatprep.subr.mxu0 0.0
        %1543 = vmatpush1.xpose.msra.mxu0 0.0
        %1544 = vmatprep.subr.mxu0 0.0
        %1545 = vmatpush1.xpose.msra.mxu0 0.0
        %1546 = vmatprep.subr.mxu0 0.0
        %1547 = vmatpush1.xpose.msra.mxu0 0.0
        %1548 = vmatprep.subr.mxu0 0.0
        %1549 = vmatpush1.xpose.msra.mxu0 0.0
        %1550 = vmatprep.subr.mxu0 0.0
        %1551 = vmatpush1.xpose.msra.mxu0 0.0
        %1552 = vmatprep.subr.mxu0 0.0
        %1553 = vmatpush1.xpose.msra.mxu0 0.0
        %1554 = vmatprep.mubr.f32.mxu0 0.0
        %1555 = vmatmul.mubr.f32.gmra.mrb[0].mxu0 %v1478
        %v1556 = vpop.f32.mrb[0].mxu0
        %v1557 = vadd.f32 0.0, %v1556
        %v1558 = vpop.f32.mrb[0].mxu0
        %1559 = vmatprep.mubr.f32.mxu0 0.0
        %1560 = vmatmul.mubr.f32.gmra.mrb[0].mxu0 %v1480
        %v1561 = vpop.f32.mrb[0].mxu0
        %v1562 = vadd.f32 0.0, %v1561
        %v1563 = vpop.f32.mrb[0].mxu0
        %1564 = vdwg.mxu0
        %v1565 = vsel %vm1073, %v1380, 0
        %v1567 = vsel %vm1073, %v1382, 0
        %v1569 = vsel %vm1073, %v1180, 0
        %v1571 = vsel %vm1073, %v1182, 0
        %v1573 = vsel %vm1073, %v1184, 0
        %v1575 = vsel %vm1073, %v1186, 0
        %1577 = vmatprep.subr.mxu0 0.0
        %1578 = vmatpush1.xpose.msra.mxu0 %v1569
        %1579 = vmatprep.subr.mxu0 0.0
        %1580 = vmatpush1.xpose.msra.mxu0 %v1571
        %1581 = vmatprep.subr.mxu0 0.0
        %1582 = vmatpush1.xpose.msra.mxu0 %v1573
        %1583 = vmatprep.subr.mxu0 0.0
        %1584 = vmatpush1.xpose.msra.mxu0 %v1575
        %1585 = vmatprep.subr.mxu0 0.0
        %1586 = vmatpush1.xpose.msra.mxu0 0.0
        %1587 = vmatprep.subr.mxu0 0.0
        %1588 = vmatpush1.xpose.msra.mxu0 0.0
        %1589 = vmatprep.subr.mxu0 0.0
        %1590 = vmatpush1.xpose.msra.mxu0 0.0
        %1591 = vmatprep.subr.mxu0 0.0
        %1592 = vmatpush1.xpose.msra.mxu0 0.0
        %1593 = vmatprep.subr.mxu0 0.0
        %1594 = vmatpush1.xpose.msra.mxu0 0.0
        %1595 = vmatprep.subr.mxu0 0.0
        %1596 = vmatpush1.xpose.msra.mxu0 0.0
        %1597 = vmatprep.subr.mxu0 0.0
        %1598 = vmatpush1.xpose.msra.mxu0 0.0
        %1599 = vmatprep.subr.mxu0 0.0
        %1600 = vmatpush1.xpose.msra.mxu0 0.0
        %1601 = vmatprep.subr.mxu0 0.0
        %1602 = vmatpush1.xpose.msra.mxu0 0.0
        %1603 = vmatprep.subr.mxu0 0.0
        %1604 = vmatpush1.xpose.msra.mxu0 0.0
        %1605 = vmatprep.subr.mxu0 0.0
        %1606 = vmatpush1.xpose.msra.mxu0 0.0
        %1607 = vmatprep.subr.mxu0 0.0
        %1608 = vmatpush1.xpose.msra.mxu0 0.0
        %1609 = vmatprep.subr.mxu0 0.0
        %1610 = vmatpush1.xpose.msra.mxu0 0.0
        %1611 = vmatprep.subr.mxu0 0.0
        %1612 = vmatpush1.xpose.msra.mxu0 0.0
        %1613 = vmatprep.subr.mxu0 0.0
        %1614 = vmatpush1.xpose.msra.mxu0 0.0
        %1615 = vmatprep.subr.mxu0 0.0
        %1616 = vmatpush1.xpose.msra.mxu0 0.0
        %1617 = vmatprep.subr.mxu0 0.0
        %1618 = vmatpush1.xpose.msra.mxu0 0.0
        %1619 = vmatprep.subr.mxu0 0.0
        %1620 = vmatpush1.xpose.msra.mxu0 0.0
        %1621 = vmatprep.subr.mxu0 0.0
        %1622 = vmatpush1.xpose.msra.mxu0 0.0
        %1623 = vmatprep.subr.mxu0 0.0
        %1624 = vmatpush1.xpose.msra.mxu0 0.0
        %1625 = vmatprep.subr.mxu0 0.0
        %1626 = vmatpush1.xpose.msra.mxu0 0.0
        %1627 = vmatprep.subr.mxu0 0.0
        %1628 = vmatpush1.xpose.msra.mxu0 0.0
        %1629 = vmatprep.subr.mxu0 0.0
        %1630 = vmatpush1.xpose.msra.mxu0 0.0
        %1631 = vmatprep.subr.mxu0 0.0
        %1632 = vmatpush1.xpose.msra.mxu0 0.0
        %1633 = vmatprep.subr.mxu0 0.0
        %1634 = vmatpush1.xpose.msra.mxu0 0.0
        %1635 = vmatprep.subr.mxu0 0.0
        %1636 = vmatpush1.xpose.msra.mxu0 0.0
        %1637 = vmatprep.subr.mxu0 0.0
        %1638 = vmatpush1.xpose.msra.mxu0 0.0
        %1639 = vmatprep.subr.mxu0 0.0
        %1640 = vmatpush1.xpose.msra.mxu0 0.0
        %1641 = vmatprep.mubr.f32.mxu0 0.0
        %1642 = vmatmul.mubr.f32.gmra.mrb[0].mxu0 %v1565
        %v1643 = vpop.f32.mrb[0].mxu0
        %v1644 = vadd.f32 0.0, %v1643
        %v1645 = vpop.f32.mrb[0].mxu0
        %1646 = vmatprep.mubr.f32.mxu0 0.0
        %1647 = vmatmul.mubr.f32.gmra.mrb[0].mxu0 %v1567
        %v1648 = vpop.f32.mrb[0].mxu0
        %v1649 = vadd.f32 0.0, %v1648
        %v1650 = vpop.f32.mrb[0].mxu0
        %1651 = vdwg.mxu0
        %v1652 = vsel %vm1073, %v1386, 0
        %v1654 = vsel %vm1073, %v1388, 0
        %v1656 = vsel %vm1073, %v1196, 0
        %v1658 = vsel %vm1073, %v1198, 0
        %v1660 = vsel %vm1073, %v1200, 0
        %v1662 = vsel %vm1073, %v1202, 0
        %1664 = vmatprep.subr.mxu0 0.0
        %1665 = vmatpush1.xpose.msra.mxu0 %v1656
        %1666 = vmatprep.subr.mxu0 0.0
        %1667 = vmatpush1.xpose.msra.mxu0 %v1658
        %1668 = vmatprep.subr.mxu0 0.0
        %1669 = vmatpush1.xpose.msra.mxu0 %v1660
        %1670 = vmatprep.subr.mxu0 0.0
        %1671 = vmatpush1.xpose.msra.mxu0 %v1662
        %1672 = vmatprep.subr.mxu0 0.0
        %1673 = vmatpush1.xpose.msra.mxu0 0.0
        %1674 = vmatprep.subr.mxu0 0.0
        %1675 = vmatpush1.xpose.msra.mxu0 0.0
        %1676 = vmatprep.subr.mxu0 0.0
        %1677 = vmatpush1.xpose.msra.mxu0 0.0
        %1678 = vmatprep.subr.mxu0 0.0
        %1679 = vmatpush1.xpose.msra.mxu0 0.0
        %1680 = vmatprep.subr.mxu0 0.0
        %1681 = vmatpush1.xpose.msra.mxu0 0.0
        %1682 = vmatprep.subr.mxu0 0.0
        %1683 = vmatpush1.xpose.msra.mxu0 0.0
        %1684 = vmatprep.subr.mxu0 0.0
        %1685 = vmatpush1.xpose.msra.mxu0 0.0
        %1686 = vmatprep.subr.mxu0 0.0
        %1687 = vmatpush1.xpose.msra.mxu0 0.0
        %1688 = vmatprep.subr.mxu0 0.0
        %1689 = vmatpush1.xpose.msra.mxu0 0.0
        %1690 = vmatprep.subr.mxu0 0.0
        %1691 = vmatpush1.xpose.msra.mxu0 0.0
        %1692 = vmatprep.subr.mxu0 0.0
        %1693 = vmatpush1.xpose.msra.mxu0 0.0
        %1694 = vmatprep.subr.mxu0 0.0
        %1695 = vmatpush1.xpose.msra.mxu0 0.0
        %1696 = vmatprep.subr.mxu0 0.0
        %1697 = vmatpush1.xpose.msra.mxu0 0.0
        %1698 = vmatprep.subr.mxu0 0.0
        %1699 = vmatpush1.xpose.msra.mxu0 0.0
        %1700 = vmatprep.subr.mxu0 0.0
        %1701 = vmatpush1.xpose.msra.mxu0 0.0
        %1702 = vmatprep.subr.mxu0 0.0
        %1703 = vmatpush1.xpose.msra.mxu0 0.0
        %1704 = vmatprep.subr.mxu0 0.0
        %1705 = vmatpush1.xpose.msra.mxu0 0.0
        %1706 = vmatprep.subr.mxu0 0.0
        %1707 = vmatpush1.xpose.msra.mxu0 0.0
        %1708 = vmatprep.subr.mxu0 0.0
        %1709 = vmatpush1.xpose.msra.mxu0 0.0
        %1710 = vmatprep.subr.mxu0 0.0
        %1711 = vmatpush1.xpose.msra.mxu0 0.0
        %1712 = vmatprep.subr.mxu0 0.0
        %1713 = vmatpush1.xpose.msra.mxu0 0.0
        %1714 = vmatprep.subr.mxu0 0.0
        %1715 = vmatpush1.xpose.msra.mxu0 0.0
        %1716 = vmatprep.subr.mxu0 0.0
        %1717 = vmatpush1.xpose.msra.mxu0 0.0
        %1718 = vmatprep.subr.mxu0 0.0
        %1719 = vmatpush1.xpose.msra.mxu0 0.0
        %1720 = vmatprep.subr.mxu0 0.0
        %1721 = vmatpush1.xpose.msra.mxu0 0.0
        %1722 = vmatprep.subr.mxu0 0.0
        %1723 = vmatpush1.xpose.msra.mxu0 0.0
        %1724 = vmatprep.subr.mxu0 0.0
        %1725 = vmatpush1.xpose.msra.mxu0 0.0
        %1726 = vmatprep.subr.mxu0 0.0
        %1727 = vmatpush1.xpose.msra.mxu0 0.0
        %1728 = vmatprep.mubr.f32.mxu0 0.0
        %1729 = vmatmul.mubr.f32.gmra.mrb[0].mxu0 %v1652
        %v1730 = vpop.f32.mrb[0].mxu0
        %v1731 = vadd.f32 0.0, %v1730
        %v1732 = vpop.f32.mrb[0].mxu0
        %1733 = vmatprep.mubr.f32.mxu0 0.0
        %1734 = vmatmul.mubr.f32.gmra.mrb[0].mxu0 %v1654
        %v1735 = vpop.f32.mrb[0].mxu0
        %v1736 = vadd.f32 0.0, %v1735
        %v1737 = vpop.f32.mrb[0].mxu0
        %1738 = vdwg.mxu0
        %v1739 = vsel %vm1073, %v1470, -inf
        %1740 = vmax.xlane.f32.xlu0 %v1739
        %v1741 = vpop.xlane.xlu0 %1740
        %v1742 = vsel %vm1073, %v1475, -inf
        %1743 = vmax.xlane.f32.xlu0 %v1742
        %v1744 = vpop.xlane.xlu0 %1743
        %v1745 = vsel %vm1073, %v1557, -inf
        %1746 = vmax.xlane.f32.xlu0 %v1745
        %v1747 = vpop.xlane.xlu0 %1746
        %v1748 = vsel %vm1073, %v1562, -inf
        %1749 = vmax.xlane.f32.xlu0 %v1748
        %v1750 = vpop.xlane.xlu0 %1749
        %v1751 = vsel %vm1073, %v1644, -inf
        %1752 = vmax.xlane.f32.xlu0 %v1751
        %v1753 = vpop.xlane.xlu0 %1752
        %v1754 = vsel %vm1073, %v1649, -inf
        %1755 = vmax.xlane.f32.xlu0 %v1754
        %v1756 = vpop.xlane.xlu0 %1755
        %v1757 = vsel %vm1073, %v1731, -inf
        %1758 = vmax.xlane.f32.xlu0 %v1757
        %v1759 = vpop.xlane.xlu0 %1758
        %v1760 = vsel %vm1073, %v1736, -inf
        %1761 = vmax.xlane.f32.xlu0 %v1760
        %v1762 = vpop.xlane.xlu0 %1761
        %v1763 = vsub.f32 %v1470, %v1741
        %v1764 = vsub.f32 %v1475, %v1744
        %v1765 = vsub.f32 %v1557, %v1747
        %v1766 = vsub.f32 %v1562, %v1750
        %v1767 = vsub.f32 %v1644, %v1753
        %v1768 = vsub.f32 %v1649, %v1756
        %v1769 = vsub.f32 %v1731, %v1759
        %v1770 = vsub.f32 %v1736, %v1762
        %v1771 = vmul.f32 %v1763, 1.442695
        %v1772 = vpow.pop %v1771
        %v1773 = vmul.f32 %v1764, 1.442695
        %v1774 = vpow.pop %v1773
        %v1775 = vmul.f32 %v1765, 1.442695
        %v1776 = vpow.pop %v1775
        %v1777 = vmul.f32 %v1766, 1.442695
        %v1778 = vpow.pop %v1777
        %v1779 = vmul.f32 %v1767, 1.442695
        %v1780 = vpow.pop %v1779
        %v1781 = vmul.f32 %v1768, 1.442695
        %v1782 = vpow.pop %v1781
        %v1783 = vmul.f32 %v1769, 1.442695
        %v1784 = vpow.pop %v1783
        %v1785 = vmul.f32 %v1770, 1.442695
        %v1786 = vpow.pop %v1785
        %v1787 = vsel %vm1073, %v1772, 0.0
        %1788 = vadd.xlane.f32.xlu0 %v1787
        %v1789 = vpop.xlane.xlu0 %1788
        %v1790 = vsel %vm1073, %v1774, 0.0
        %1791 = vadd.xlane.f32.xlu0 %v1790
        %v1792 = vpop.xlane.xlu0 %1791
        %v1793 = vsel %vm1073, %v1776, 0.0
        %1794 = vadd.xlane.f32.xlu0 %v1793
        %v1795 = vpop.xlane.xlu0 %1794
        %v1796 = vsel %vm1073, %v1778, 0.0
        %1797 = vadd.xlane.f32.xlu0 %v1796
        %v1798 = vpop.xlane.xlu0 %1797
        %v1799 = vsel %vm1073, %v1780, 0.0
        %1800 = vadd.xlane.f32.xlu0 %v1799
        %v1801 = vpop.xlane.xlu0 %1800
        %v1802 = vsel %vm1073, %v1782, 0.0
        %1803 = vadd.xlane.f32.xlu0 %v1802
        %v1804 = vpop.xlane.xlu0 %1803
        %v1805 = vsel %vm1073, %v1784, 0.0
        %1806 = vadd.xlane.f32.xlu0 %v1805
        %v1807 = vpop.xlane.xlu0 %1806
        %v1808 = vsel %vm1073, %v1786, 0.0
        %1809 = vadd.xlane.f32.xlu0 %v1808
        %v1810 = vpop.xlane.xlu0 %1809
        %v1811 = vrcp.pop %v1789
        %v1812 = vrcp.pop %v1792
        %v1813 = vrcp.pop %v1795
        %v1814 = vrcp.pop %v1798
        %v1815 = vrcp.pop %v1801
        %v1816 = vrcp.pop %v1804
        %v1817 = vrcp.pop %v1807
        %v1818 = vrcp.pop %v1810
        %v1819 = vmul.f32 %v1772, %v1811
        %v1820 = vmul.f32 %v1774, %v1812
        %v1821 = vmul.f32 %v1776, %v1813
        %v1822 = vmul.f32 %v1778, %v1814
        %v1823 = vmul.f32 %v1780, %v1815
        %v1824 = vmul.f32 %v1782, %v1816
        %v1825 = vmul.f32 %v1784, %v1817
        %v1826 = vmul.f32 %v1786, %v1818
        %v1828 = vsel %vm1073, %v1819, 0
        %v1831 = vsel %vm1073, %v1820, 0
        %1833 = vmatprep.subr.mxu0 0.0
        %1834 = vmatpush1.msra.mxu0 %v909
        %1835 = vmatprep.subr.mxu0 0.0
        %1836 = vmatpush1.msra.mxu0 %v914
        %1837 = vmatprep.subr.mxu0 0.0
        %1838 = vmatpush1.msra.mxu0 %v919
        %1839 = vmatprep.subr.mxu0 0.0
        %1840 = vmatpush1.msra.mxu0 %v924
        %1841 = vmatprep.subr.mxu0 0.0
        %1842 = vmatpush1.msra.mxu0 0.0
        %1843 = vmatprep.subr.mxu0 0.0
        %1844 = vmatpush1.msra.mxu0 0.0
        %1845 = vmatprep.subr.mxu0 0.0
        %1846 = vmatpush1.msra.mxu0 0.0
        %1847 = vmatprep.subr.mxu0 0.0
        %1848 = vmatpush1.msra.mxu0 0.0
        %1849 = vmatprep.subr.mxu0 0.0
        %1850 = vmatpush1.msra.mxu0 0.0
        %1851 = vmatprep.subr.mxu0 0.0
        %1852 = vmatpush1.msra.mxu0 0.0
        %1853 = vmatprep.subr.mxu0 0.0
        %1854 = vmatpush1.msra.mxu0 0.0
        %1855 = vmatprep.subr.mxu0 0.0
        %1856 = vmatpush1.msra.mxu0 0.0
        %1857 = vmatprep.subr.mxu0 0.0
        %1858 = vmatpush1.msra.mxu0 0.0
        %1859 = vmatprep.subr.mxu0 0.0
        %1860 = vmatpush1.msra.mxu0 0.0
        %1861 = vmatprep.subr.mxu0 0.0
        %1862 = vmatpush1.msra.mxu0 0.0
        %1863 = vmatprep.subr.mxu0 0.0
        %1864 = vmatpush1.msra.mxu0 0.0
        %1865 = vmatprep.subr.mxu0 0.0
        %1866 = vmatpush1.msra.mxu0 0.0
        %1867 = vmatprep.subr.mxu0 0.0
        %1868 = vmatpush1.msra.mxu0 0.0
        %1869 = vmatprep.subr.mxu0 0.0
        %1870 = vmatpush1.msra.mxu0 0.0
        %1871 = vmatprep.subr.mxu0 0.0
        %1872 = vmatpush1.msra.mxu0 0.0
        %1873 = vmatprep.subr.mxu0 0.0
        %1874 = vmatpush1.msra.mxu0 0.0
        %1875 = vmatprep.subr.mxu0 0.0
        %1876 = vmatpush1.msra.mxu0 0.0
        %1877 = vmatprep.subr.mxu0 0.0
        %1878 = vmatpush1.msra.mxu0 0.0
        %1879 = vmatprep.subr.mxu0 0.0
        %1880 = vmatpush1.msra.mxu0 0.0
        %1881 = vmatprep.subr.mxu0 0.0
        %1882 = vmatpush1.msra.mxu0 0.0
        %1883 = vmatprep.subr.mxu0 0.0
        %1884 = vmatpush1.msra.mxu0 0.0
        %1885 = vmatprep.subr.mxu0 0.0
        %1886 = vmatpush1.msra.mxu0 0.0
        %1887 = vmatprep.subr.mxu0 0.0
        %1888 = vmatpush1.msra.mxu0 0.0
        %1889 = vmatprep.subr.mxu0 0.0
        %1890 = vmatpush1.msra.mxu0 0.0
        %1891 = vmatprep.subr.mxu0 0.0
        %1892 = vmatpush1.msra.mxu0 0.0
        %1893 = vmatprep.subr.mxu0 0.0
        %1894 = vmatpush1.msra.mxu0 0.0
        %1895 = vmatprep.subr.mxu0 0.0
        %1896 = vmatpush1.msra.mxu0 0.0
        %1897 = vmatprep.mubr.f32.mxu0 0.0
        %1898 = vmatmul.mubr.f32.gmra.mrb[0].mxu0 %v1828
        %v1899 = vpop.f32.mrb[0].mxu0
        %v1900 = vadd.f32 0.0, %v1899
        %v1901 = vpop.f32.mrb[0].mxu0
        %1902 = vmatprep.mubr.f32.mxu0 0.0
        %1903 = vmatmul.mubr.f32.gmra.mrb[0].mxu0 %v1831
        %v1904 = vpop.f32.mrb[0].mxu0
        %v1905 = vadd.f32 0.0, %v1904
        %v1906 = vpop.f32.mrb[0].mxu0
        %1907 = vdwg.mxu0
        %v1909 = vsel %vm1073, %v1821, 0
        %v1912 = vsel %vm1073, %v1822, 0
        %1914 = vmatprep.subr.mxu0 0.0
        %1915 = vmatpush1.msra.mxu0 %v1220
        %1916 = vmatprep.subr.mxu0 0.0
        %1917 = vmatpush1.msra.mxu0 %v1222
        %1918 = vmatprep.subr.mxu0 0.0
        %1919 = vmatpush1.msra.mxu0 %v1224
        %1920 = vmatprep.subr.mxu0 0.0
        %1921 = vmatpush1.msra.mxu0 %v1226
        %1922 = vmatprep.subr.mxu0 0.0
        %1923 = vmatpush1.msra.mxu0 0.0
        %1924 = vmatprep.subr.mxu0 0.0
        %1925 = vmatpush1.msra.mxu0 0.0
        %1926 = vmatprep.subr.mxu0 0.0
        %1927 = vmatpush1.msra.mxu0 0.0
        %1928 = vmatprep.subr.mxu0 0.0
        %1929 = vmatpush1.msra.mxu0 0.0
        %1930 = vmatprep.subr.mxu0 0.0
        %1931 = vmatpush1.msra.mxu0 0.0
        %1932 = vmatprep.subr.mxu0 0.0
        %1933 = vmatpush1.msra.mxu0 0.0
        %1934 = vmatprep.subr.mxu0 0.0
        %1935 = vmatpush1.msra.mxu0 0.0
        %1936 = vmatprep.subr.mxu0 0.0
        %1937 = vmatpush1.msra.mxu0 0.0
        %1938 = vmatprep.subr.mxu0 0.0
        %1939 = vmatpush1.msra.mxu0 0.0
        %1940 = vmatprep.subr.mxu0 0.0
        %1941 = vmatpush1.msra.mxu0 0.0
        %1942 = vmatprep.subr.mxu0 0.0
        %1943 = vmatpush1.msra.mxu0 0.0
        %1944 = vmatprep.subr.mxu0 0.0
        %1945 = vmatpush1.msra.mxu0 0.0
        %1946 = vmatprep.subr.mxu0 0.0
        %1947 = vmatpush1.msra.mxu0 0.0
        %1948 = vmatprep.subr.mxu0 0.0
        %1949 = vmatpush1.msra.mxu0 0.0
        %1950 = vmatprep.subr.mxu0 0.0
        %1951 = vmatpush1.msra.mxu0 0.0
        %1952 = vmatprep.subr.mxu0 0.0
        %1953 = vmatpush1.msra.mxu0 0.0
        %1954 = vmatprep.subr.mxu0 0.0
        %1955 = vmatpush1.msra.mxu0 0.0
        %1956 = vmatprep.subr.mxu0 0.0
        %1957 = vmatpush1.msra.mxu0 0.0
        %1958 = vmatprep.subr.mxu0 0.0
        %1959 = vmatpush1.msra.mxu0 0.0
        %1960 = vmatprep.subr.mxu0 0.0
        %1961 = vmatpush1.msra.mxu0 0.0
        %1962 = vmatprep.subr.mxu0 0.0
        %1963 = vmatpush1.msra.mxu0 0.0
        %1964 = vmatprep.subr.mxu0 0.0
        %1965 = vmatpush1.msra.mxu0 0.0
        %1966 = vmatprep.subr.mxu0 0.0
        %1967 = vmatpush1.msra.mxu0 0.0
        %1968 = vmatprep.subr.mxu0 0.0
        %1969 = vmatpush1.msra.mxu0 0.0
        %1970 = vmatprep.subr.mxu0 0.0
        %1971 = vmatpush1.msra.mxu0 0.0
        %1972 = vmatprep.subr.mxu0 0.0
        %1973 = vmatpush1.msra.mxu0 0.0
        %1974 = vmatprep.subr.mxu0 0.0
        %1975 = vmatpush1.msra.mxu0 0.0
        %1976 = vmatprep.subr.mxu0 0.0
        %1977 = vmatpush1.msra.mxu0 0.0
        %1978 = vmatprep.mubr.f32.mxu0 0.0
        %1979 = vmatmul.mubr.f32.gmra.mrb[0].mxu0 %v1909
        %v1980 = vpop.f32.mrb[0].mxu0
        %v1981 = vadd.f32 0.0, %v1980
        %v1982 = vpop.f32.mrb[0].mxu0
        %1983 = vmatprep.mubr.f32.mxu0 0.0
        %1984 = vmatmul.mubr.f32.gmra.mrb[0].mxu0 %v1912
        %v1985 = vpop.f32.mrb[0].mxu0
        %v1986 = vadd.f32 0.0, %v1985
        %v1987 = vpop.f32.mrb[0].mxu0
        %1988 = vdwg.mxu0
        %v1990 = vsel %vm1073, %v1823, 0
        %v1993 = vsel %vm1073, %v1824, 0
        %1995 = vmatprep.subr.mxu0 0.0
        %1996 = vmatpush1.msra.mxu0 %v1244
        %1997 = vmatprep.subr.mxu0 0.0
        %1998 = vmatpush1.msra.mxu0 %v1246
        %1999 = vmatprep.subr.mxu0 0.0
        %2000 = vmatpush1.msra.mxu0 %v1248
        %2001 = vmatprep.subr.mxu0 0.0
        %2002 = vmatpush1.msra.mxu0 %v1250
        %2003 = vmatprep.subr.mxu0 0.0
        %2004 = vmatpush1.msra.mxu0 0.0
        %2005 = vmatprep.subr.mxu0 0.0
        %2006 = vmatpush1.msra.mxu0 0.0
        %2007 = vmatprep.subr.mxu0 0.0
        %2008 = vmatpush1.msra.mxu0 0.0
        %2009 = vmatprep.subr.mxu0 0.0
        %2010 = vmatpush1.msra.mxu0 0.0
        %2011 = vmatprep.subr.mxu0 0.0
        %2012 = vmatpush1.msra.mxu0 0.0
        %2013 = vmatprep.subr.mxu0 0.0
        %2014 = vmatpush1.msra.mxu0 0.0
        %2015 = vmatprep.subr.mxu0 0.0
        %2016 = vmatpush1.msra.mxu0 0.0
        %2017 = vmatprep.subr.mxu0 0.0
        %2018 = vmatpush1.msra.mxu0 0.0
        %2019 = vmatprep.subr.mxu0 0.0
        %2020 = vmatpush1.msra.mxu0 0.0
        %2021 = vmatprep.subr.mxu0 0.0
        %2022 = vmatpush1.msra.mxu0 0.0
        %2023 = vmatprep.subr.mxu0 0.0
        %2024 = vmatpush1.msra.mxu0 0.0
        %2025 = vmatprep.subr.mxu0 0.0
        %2026 = vmatpush1.msra.mxu0 0.0
        %2027 = vmatprep.subr.mxu0 0.0
        %2028 = vmatpush1.msra.mxu0 0.0
        %2029 = vmatprep.subr.mxu0 0.0
        %2030 = vmatpush1.msra.mxu0 0.0
        %2031 = vmatprep.subr.mxu0 0.0
        %2032 = vmatpush1.msra.mxu0 0.0
        %2033 = vmatprep.subr.mxu0 0.0
        %2034 = vmatpush1.msra.mxu0 0.0
        %2035 = vmatprep.subr.mxu0 0.0
        %2036 = vmatpush1.msra.mxu0 0.0
        %2037 = vmatprep.subr.mxu0 0.0
        %2038 = vmatpush1.msra.mxu0 0.0
        %2039 = vmatprep.subr.mxu0 0.0
        %2040 = vmatpush1.msra.mxu0 0.0
        %2041 = vmatprep.subr.mxu0 0.0
        %2042 = vmatpush1.msra.mxu0 0.0
        %2043 = vmatprep.subr.mxu0 0.0
        %2044 = vmatpush1.msra.mxu0 0.0
        %2045 = vmatprep.subr.mxu0 0.0
        %2046 = vmatpush1.msra.mxu0 0.0
        %2047 = vmatprep.subr.mxu0 0.0
        %2048 = vmatpush1.msra.mxu0 0.0
        %2049 = vmatprep.subr.mxu0 0.0
        %2050 = vmatpush1.msra.mxu0 0.0
        %2051 = vmatprep.subr.mxu0 0.0
        %2052 = vmatpush1.msra.mxu0 0.0
        %2053 = vmatprep.subr.mxu0 0.0
        %2054 = vmatpush1.msra.mxu0 0.0
        %2055 = vmatprep.subr.mxu0 0.0
        %2056 = vmatpush1.msra.mxu0 0.0
        %2057 = vmatprep.subr.mxu0 0.0
        %2058 = vmatpush1.msra.mxu0 0.0
        %2059 = vmatprep.mubr.f32.mxu0 0.0
        %2060 = vmatmul.mubr.f32.gmra.mrb[0].mxu0 %v1990
        %v2061 = vpop.f32.mrb[0].mxu0
        %v2062 = vadd.f32 0.0, %v2061
        %v2063 = vpop.f32.mrb[0].mxu0
        %2064 = vmatprep.mubr.f32.mxu0 0.0
        %2065 = vmatmul.mubr.f32.gmra.mrb[0].mxu0 %v1993
        %v2066 = vpop.f32.mrb[0].mxu0
        %v2067 = vadd.f32 0.0, %v2066
        %v2068 = vpop.f32.mrb[0].mxu0
        %2069 = vdwg.mxu0
        %v2071 = vsel %vm1073, %v1825, 0
        %v2074 = vsel %vm1073, %v1826, 0
        %2076 = vmatprep.subr.mxu0 0.0
        %2077 = vmatpush1.msra.mxu0 %v1268
        %2078 = vmatprep.subr.mxu0 0.0
        %2079 = vmatpush1.msra.mxu0 %v1270
        %2080 = vmatprep.subr.mxu0 0.0
        %2081 = vmatpush1.msra.mxu0 %v1272
        %2082 = vmatprep.subr.mxu0 0.0
        %2083 = vmatpush1.msra.mxu0 %v1274
        %2084 = vmatprep.subr.mxu0 0.0
        %2085 = vmatpush1.msra.mxu0 0.0
        %2086 = vmatprep.subr.mxu0 0.0
        %2087 = vmatpush1.msra.mxu0 0.0
        %2088 = vmatprep.subr.mxu0 0.0
        %2089 = vmatpush1.msra.mxu0 0.0
        %2090 = vmatprep.subr.mxu0 0.0
        %2091 = vmatpush1.msra.mxu0 0.0
        %2092 = vmatprep.subr.mxu0 0.0
        %2093 = vmatpush1.msra.mxu0 0.0
        %2094 = vmatprep.subr.mxu0 0.0
        %2095 = vmatpush1.msra.mxu0 0.0
        %2096 = vmatprep.subr.mxu0 0.0
        %2097 = vmatpush1.msra.mxu0 0.0
        %2098 = vmatprep.subr.mxu0 0.0
        %2099 = vmatpush1.msra.mxu0 0.0
        %2100 = vmatprep.subr.mxu0 0.0
        %2101 = vmatpush1.msra.mxu0 0.0
        %2102 = vmatprep.subr.mxu0 0.0
        %2103 = vmatpush1.msra.mxu0 0.0
        %2104 = vmatprep.subr.mxu0 0.0
        %2105 = vmatpush1.msra.mxu0 0.0
        %2106 = vmatprep.subr.mxu0 0.0
        %2107 = vmatpush1.msra.mxu0 0.0
        %2108 = vmatprep.subr.mxu0 0.0
        %2109 = vmatpush1.msra.mxu0 0.0
        %2110 = vmatprep.subr.mxu0 0.0
        %2111 = vmatpush1.msra.mxu0 0.0
        %2112 = vmatprep.subr.mxu0 0.0
        %2113 = vmatpush1.msra.mxu0 0.0
        %2114 = vmatprep.subr.mxu0 0.0
        %2115 = vmatpush1.msra.mxu0 0.0
        %2116 = vmatprep.subr.mxu0 0.0
        %2117 = vmatpush1.msra.mxu0 0.0
        %2118 = vmatprep.subr.mxu0 0.0
        %2119 = vmatpush1.msra.mxu0 0.0
        %2120 = vmatprep.subr.mxu0 0.0
        %2121 = vmatpush1.msra.mxu0 0.0
        %2122 = vmatprep.subr.mxu0 0.0
        %2123 = vmatpush1.msra.mxu0 0.0
        %2124 = vmatprep.subr.mxu0 0.0
        %2125 = vmatpush1.msra.mxu0 0.0
        %2126 = vmatprep.subr.mxu0 0.0
        %2127 = vmatpush1.msra.mxu0 0.0
        %2128 = vmatprep.subr.mxu0 0.0
        %2129 = vmatpush1.msra.mxu0 0.0
        %2130 = vmatprep.subr.mxu0 0.0
        %2131 = vmatpush1.msra.mxu0 0.0
        %2132 = vmatprep.subr.mxu0 0.0
        %2133 = vmatpush1.msra.mxu0 0.0
        %2134 = vmatprep.subr.mxu0 0.0
        %2135 = vmatpush1.msra.mxu0 0.0
        %2136 = vmatprep.subr.mxu0 0.0
        %2137 = vmatpush1.msra.mxu0 0.0
        %2138 = vmatprep.subr.mxu0 0.0
        %2139 = vmatpush1.msra.mxu0 0.0
        %2140 = vmatprep.mubr.f32.mxu0 0.0
        %2141 = vmatmul.mubr.f32.gmra.mrb[0].mxu0 %v2071
        %v2142 = vpop.f32.mrb[0].mxu0
        %v2143 = vadd.f32 0.0, %v2142
        %v2144 = vpop.f32.mrb[0].mxu0
        %2145 = vmatprep.mubr.f32.mxu0 0.0
        %2146 = vmatmul.mubr.f32.gmra.mrb[0].mxu0 %v2074
        %v2147 = vpop.f32.mrb[0].mxu0
        %v2148 = vadd.f32 0.0, %v2147
        %v2149 = vpop.f32.mrb[0].mxu0
        %2150 = vdwg.mxu0
        %v2151 = vadd.f32 %v1147, %v1900
        %v2152 = vadd.f32 %v1152, %v1905
        %v2153 = vadd.f32 %v1374, %v1981
        %v2154 = vadd.f32 %v1376, %v1986
        %v2155 = vadd.f32 %v1380, %v2062
        %v2156 = vadd.f32 %v1382, %v2067
        %v2157 = vadd.f32 %v1386, %v2143
        %v2158 = vadd.f32 %v1388, %v2148
        %v2159 = vsel %vm1073, %v816, 0
        %v2161 = vsel %vm1073, %v821, 0
        %v2163 = vsel %vm1073, %v826, 0
        %v2165 = vsel %vm1073, %v831, 0
        %2167 = vmatprep.subr.mxu0 0.0
        %2168 = vmatpush1.xpose.msra.mxu0 %v2159
        %2169 = vmatprep.subr.mxu0 0.0
        %2170 = vmatpush1.xpose.msra.mxu0 %v2161
        %2171 = vmatprep.subr.mxu0 0.0
        %2172 = vmatpush1.xpose.msra.mxu0 %v2163
        %2173 = vmatprep.subr.mxu0 0.0
        %2174 = vmatpush1.xpose.msra.mxu0 %v2165
        %2175 = vmatprep.subr.mxu0 0.0
        %2176 = vmatpush1.xpose.msra.mxu0 0.0
        %2177 = vmatprep.subr.mxu0 0.0
        %2178 = vmatpush1.xpose.msra.mxu0 0.0
        %2179 = vmatprep.subr.mxu0 0.0
        %2180 = vmatpush1.xpose.msra.mxu0 0.0
        %2181 = vmatprep.subr.mxu0 0.0
        %2182 = vmatpush1.xpose.msra.mxu0 0.0
        %2183 = vmatprep.subr.mxu0 0.0
        %2184 = vmatpush1.xpose.msra.mxu0 0.0
        %2185 = vmatprep.subr.mxu0 0.0
        %2186 = vmatpush1.xpose.msra.mxu0 0.0
        %2187 = vmatprep.subr.mxu0 0.0
        %2188 = vmatpush1.xpose.msra.mxu0 0.0
        %2189 = vmatprep.subr.mxu0 0.0
        %2190 = vmatpush1.xpose.msra.mxu0 0.0
        %2191 = vmatprep.subr.mxu0 0.0
        %2192 = vmatpush1.xpose.msra.mxu0 0.0
        %2193 = vmatprep.subr.mxu0 0.0
        %2194 = vmatpush1.xpose.msra.mxu0 0.0
        %2195 = vmatprep.subr.mxu0 0.0
        %2196 = vmatpush1.xpose.msra.mxu0 0.0
        %2197 = vmatprep.subr.mxu0 0.0
        %2198 = vmatpush1.xpose.msra.mxu0 0.0
        %2199 = vmatprep.subr.mxu0 0.0
        %2200 = vmatpush1.xpose.msra.mxu0 0.0
        %2201 = vmatprep.subr.mxu0 0.0
        %2202 = vmatpush1.xpose.msra.mxu0 0.0
        %2203 = vmatprep.subr.mxu0 0.0
        %2204 = vmatpush1.xpose.msra.mxu0 0.0
        %2205 = vmatprep.subr.mxu0 0.0
        %2206 = vmatpush1.xpose.msra.mxu0 0.0
        %2207 = vmatprep.subr.mxu0 0.0
        %2208 = vmatpush1.xpose.msra.mxu0 0.0
        %2209 = vmatprep.subr.mxu0 0.0
        %2210 = vmatpush1.xpose.msra.mxu0 0.0
        %2211 = vmatprep.subr.mxu0 0.0
        %2212 = vmatpush1.xpose.msra.mxu0 0.0
        %2213 = vmatprep.subr.mxu0 0.0
        %2214 = vmatpush1.xpose.msra.mxu0 0.0
        %2215 = vmatprep.subr.mxu0 0.0
        %2216 = vmatpush1.xpose.msra.mxu0 0.0
        %2217 = vmatprep.subr.mxu0 0.0
        %2218 = vmatpush1.xpose.msra.mxu0 0.0
        %2219 = vmatprep.subr.mxu0 0.0
        %2220 = vmatpush1.xpose.msra.mxu0 0.0
        %2221 = vmatprep.subr.mxu0 0.0
        %2222 = vmatpush1.xpose.msra.mxu0 0.0
        %2223 = vmatprep.subr.mxu0 0.0
        %2224 = vmatpush1.xpose.msra.mxu0 0.0
        %2225 = vmatprep.subr.mxu0 0.0
        %2226 = vmatpush1.xpose.msra.mxu0 0.0
        %2227 = vmatprep.subr.mxu0 0.0
        %2228 = vmatpush1.xpose.msra.mxu0 0.0
        %2229 = vmatprep.subr.mxu0 0.0
        %2230 = vmatpush1.xpose.msra.mxu0 0.0
        %2231 = vmatprep.mubr.f32.mxu0 0.0
        %2232 = vmatmul.mubr.f32.gmra.mrb[0].mxu0 %v1391
        %v2233 = vpop.f32.mrb[0].mxu0
        %v2234 = vadd.f32 0.0, %v2233
        %v2235 = vpop.f32.mrb[0].mxu0
        %2236 = vmatprep.mubr.f32.mxu0 0.0
        %2237 = vmatmul.mubr.f32.gmra.mrb[0].mxu0 %v1393
        %v2238 = vpop.f32.mrb[0].mxu0
        %v2239 = vadd.f32 0.0, %v2238
        %v2240 = vpop.f32.mrb[0].mxu0
        %2241 = vdwg.mxu0
        %v2242 = vsel %vm1073, %v1172, 0
        %v2244 = vsel %vm1073, %v1174, 0
        %v2246 = vsel %vm1073, %v1176, 0
        %v2248 = vsel %vm1073, %v1178, 0
        %2250 = vmatprep.subr.mxu0 0.0
        %2251 = vmatpush1.xpose.msra.mxu0 %v2242
        %2252 = vmatprep.subr.mxu0 0.0
        %2253 = vmatpush1.xpose.msra.mxu0 %v2244
        %2254 = vmatprep.subr.mxu0 0.0
        %2255 = vmatpush1.xpose.msra.mxu0 %v2246
        %2256 = vmatprep.subr.mxu0 0.0
        %2257 = vmatpush1.xpose.msra.mxu0 %v2248
        %2258 = vmatprep.subr.mxu0 0.0
        %2259 = vmatpush1.xpose.msra.mxu0 0.0
        %2260 = vmatprep.subr.mxu0 0.0
        %2261 = vmatpush1.xpose.msra.mxu0 0.0
        %2262 = vmatprep.subr.mxu0 0.0
        %2263 = vmatpush1.xpose.msra.mxu0 0.0
        %2264 = vmatprep.subr.mxu0 0.0
        %2265 = vmatpush1.xpose.msra.mxu0 0.0
        %2266 = vmatprep.subr.mxu0 0.0
        %2267 = vmatpush1.xpose.msra.mxu0 0.0
        %2268 = vmatprep.subr.mxu0 0.0
        %2269 = vmatpush1.xpose.msra.mxu0 0.0
        %2270 = vmatprep.subr.mxu0 0.0
        %2271 = vmatpush1.xpose.msra.mxu0 0.0
        %2272 = vmatprep.subr.mxu0 0.0
        %2273 = vmatpush1.xpose.msra.mxu0 0.0
        %2274 = vmatprep.subr.mxu0 0.0
        %2275 = vmatpush1.xpose.msra.mxu0 0.0
        %2276 = vmatprep.subr.mxu0 0.0
        %2277 = vmatpush1.xpose.msra.mxu0 0.0
        %2278 = vmatprep.subr.mxu0 0.0
        %2279 = vmatpush1.xpose.msra.mxu0 0.0
        %2280 = vmatprep.subr.mxu0 0.0
        %2281 = vmatpush1.xpose.msra.mxu0 0.0
        %2282 = vmatprep.subr.mxu0 0.0
        %2283 = vmatpush1.xpose.msra.mxu0 0.0
        %2284 = vmatprep.subr.mxu0 0.0
        %2285 = vmatpush1.xpose.msra.mxu0 0.0
        %2286 = vmatprep.subr.mxu0 0.0
        %2287 = vmatpush1.xpose.msra.mxu0 0.0
        %2288 = vmatprep.subr.mxu0 0.0
        %2289 = vmatpush1.xpose.msra.mxu0 0.0
        %2290 = vmatprep.subr.mxu0 0.0
        %2291 = vmatpush1.xpose.msra.mxu0 0.0
        %2292 = vmatprep.subr.mxu0 0.0
        %2293 = vmatpush1.xpose.msra.mxu0 0.0
        %2294 = vmatprep.subr.mxu0 0.0
        %2295 = vmatpush1.xpose.msra.mxu0 0.0
        %2296 = vmatprep.subr.mxu0 0.0
        %2297 = vmatpush1.xpose.msra.mxu0 0.0
        %2298 = vmatprep.subr.mxu0 0.0
        %2299 = vmatpush1.xpose.msra.mxu0 0.0
        %2300 = vmatprep.subr.mxu0 0.0
        %2301 = vmatpush1.xpose.msra.mxu0 0.0
        %2302 = vmatprep.subr.mxu0 0.0
        %2303 = vmatpush1.xpose.msra.mxu0 0.0
        %2304 = vmatprep.subr.mxu0 0.0
        %2305 = vmatpush1.xpose.msra.mxu0 0.0
        %2306 = vmatprep.subr.mxu0 0.0
        %2307 = vmatpush1.xpose.msra.mxu0 0.0
        %2308 = vmatprep.subr.mxu0 0.0
        %2309 = vmatpush1.xpose.msra.mxu0 0.0
        %2310 = vmatprep.subr.mxu0 0.0
        %2311 = vmatpush1.xpose.msra.mxu0 0.0
        %2312 = vmatprep.subr.mxu0 0.0
        %2313 = vmatpush1.xpose.msra.mxu0 0.0
        %2314 = vmatprep.mubr.f32.mxu0 0.0
        %2315 = vmatmul.mubr.f32.gmra.mrb[0].mxu0 %v1478
        %v2316 = vpop.f32.mrb[0].mxu0
        %v2317 = vadd.f32 0.0, %v2316
        %v2318 = vpop.f32.mrb[0].mxu0
        %2319 = vmatprep.mubr.f32.mxu0 0.0
        %2320 = vmatmul.mubr.f32.gmra.mrb[0].mxu0 %v1480
        %v2321 = vpop.f32.mrb[0].mxu0
        %v2322 = vadd.f32 0.0, %v2321
        %v2323 = vpop.f32.mrb[0].mxu0
        %2324 = vdwg.mxu0
        %v2325 = vsel %vm1073, %v1188, 0
        %v2327 = vsel %vm1073, %v1190, 0
        %v2329 = vsel %vm1073, %v1192, 0
        %v2331 = vsel %vm1073, %v1194, 0
        %2333 = vmatprep.subr.mxu0 0.0
        %2334 = vmatpush1.xpose.msra.mxu0 %v2325
        %2335 = vmatprep.subr.mxu0 0.0
        %2336 = vmatpush1.xpose.msra.mxu0 %v2327
        %2337 = vmatprep.subr.mxu0 0.0
        %2338 = vmatpush1.xpose.msra.mxu0 %v2329
        %2339 = vmatprep.subr.mxu0 0.0
        %2340 = vmatpush1.xpose.msra.mxu0 %v2331
        %2341 = vmatprep.subr.mxu0 0.0
        %2342 = vmatpush1.xpose.msra.mxu0 0.0
        %2343 = vmatprep.subr.mxu0 0.0
        %2344 = vmatpush1.xpose.msra.mxu0 0.0
        %2345 = vmatprep.subr.mxu0 0.0
        %2346 = vmatpush1.xpose.msra.mxu0 0.0
        %2347 = vmatprep.subr.mxu0 0.0
        %2348 = vmatpush1.xpose.msra.mxu0 0.0
        %2349 = vmatprep.subr.mxu0 0.0
        %2350 = vmatpush1.xpose.msra.mxu0 0.0
        %2351 = vmatprep.subr.mxu0 0.0
        %2352 = vmatpush1.xpose.msra.mxu0 0.0
        %2353 = vmatprep.subr.mxu0 0.0
        %2354 = vmatpush1.xpose.msra.mxu0 0.0
        %2355 = vmatprep.subr.mxu0 0.0
        %2356 = vmatpush1.xpose.msra.mxu0 0.0
        %2357 = vmatprep.subr.mxu0 0.0
        %2358 = vmatpush1.xpose.msra.mxu0 0.0
        %2359 = vmatprep.subr.mxu0 0.0
        %2360 = vmatpush1.xpose.msra.mxu0 0.0
        %2361 = vmatprep.subr.mxu0 0.0
        %2362 = vmatpush1.xpose.msra.mxu0 0.0
        %2363 = vmatprep.subr.mxu0 0.0
        %2364 = vmatpush1.xpose.msra.mxu0 0.0
        %2365 = vmatprep.subr.mxu0 0.0
        %2366 = vmatpush1.xpose.msra.mxu0 0.0
        %2367 = vmatprep.subr.mxu0 0.0
        %2368 = vmatpush1.xpose.msra.mxu0 0.0
        %2369 = vmatprep.subr.mxu0 0.0
        %2370 = vmatpush1.xpose.msra.mxu0 0.0
        %2371 = vmatprep.subr.mxu0 0.0
        %2372 = vmatpush1.xpose.msra.mxu0 0.0
        %2373 = vmatprep.subr.mxu0 0.0
        %2374 = vmatpush1.xpose.msra.mxu0 0.0
        %2375 = vmatprep.subr.mxu0 0.0
        %2376 = vmatpush1.xpose.msra.mxu0 0.0
        %2377 = vmatprep.subr.mxu0 0.0
        %2378 = vmatpush1.xpose.msra.mxu0 0.0
        %2379 = vmatprep.subr.mxu0 0.0
        %2380 = vmatpush1.xpose.msra.mxu0 0.0
        %2381 = vmatprep.subr.mxu0 0.0
        %2382 = vmatpush1.xpose.msra.mxu0 0.0
        %2383 = vmatprep.subr.mxu0 0.0
        %2384 = vmatpush1.xpose.msra.mxu0 0.0
        %2385 = vmatprep.subr.mxu0 0.0
        %2386 = vmatpush1.xpose.msra.mxu0 0.0
        %2387 = vmatprep.subr.mxu0 0.0
        %2388 = vmatpush1.xpose.msra.mxu0 0.0
        %2389 = vmatprep.subr.mxu0 0.0
        %2390 = vmatpush1.xpose.msra.mxu0 0.0
        %2391 = vmatprep.subr.mxu0 0.0
        %2392 = vmatpush1.xpose.msra.mxu0 0.0
        %2393 = vmatprep.subr.mxu0 0.0
        %2394 = vmatpush1.xpose.msra.mxu0 0.0
        %2395 = vmatprep.subr.mxu0 0.0
        %2396 = vmatpush1.xpose.msra.mxu0 0.0
        %2397 = vmatprep.mubr.f32.mxu0 0.0
        %2398 = vmatmul.mubr.f32.gmra.mrb[0].mxu0 %v1565
        %v2399 = vpop.f32.mrb[0].mxu0
        %v2400 = vadd.f32 0.0, %v2399
        %v2401 = vpop.f32.mrb[0].mxu0
        %2402 = vmatprep.mubr.f32.mxu0 0.0
        %2403 = vmatmul.mubr.f32.gmra.mrb[0].mxu0 %v1567
        %v2404 = vpop.f32.mrb[0].mxu0
        %v2405 = vadd.f32 0.0, %v2404
        %v2406 = vpop.f32.mrb[0].mxu0
        %2407 = vdwg.mxu0
        %v2408 = vsel %vm1073, %v1204, 0
        %v2410 = vsel %vm1073, %v1206, 0
        %v2412 = vsel %vm1073, %v1208, 0
        %v2414 = vsel %vm1073, %v1210, 0
        %2416 = vmatprep.subr.mxu0 0.0
        %2417 = vmatpush1.xpose.msra.mxu0 %v2408
        %2418 = vmatprep.subr.mxu0 0.0
        %2419 = vmatpush1.xpose.msra.mxu0 %v2410
        %2420 = vmatprep.subr.mxu0 0.0
        %2421 = vmatpush1.xpose.msra.mxu0 %v2412
        %2422 = vmatprep.subr.mxu0 0.0
        %2423 = vmatpush1.xpose.msra.mxu0 %v2414
        %2424 = vmatprep.subr.mxu0 0.0
        %2425 = vmatpush1.xpose.msra.mxu0 0.0
        %2426 = vmatprep.subr.mxu0 0.0
        %2427 = vmatpush1.xpose.msra.mxu0 0.0
        %2428 = vmatprep.subr.mxu0 0.0
        %2429 = vmatpush1.xpose.msra.mxu0 0.0
        %2430 = vmatprep.subr.mxu0 0.0
        %2431 = vmatpush1.xpose.msra.mxu0 0.0
        %2432 = vmatprep.subr.mxu0 0.0
        %2433 = vmatpush1.xpose.msra.mxu0 0.0
        %2434 = vmatprep.subr.mxu0 0.0
        %2435 = vmatpush1.xpose.msra.mxu0 0.0
        %2436 = vmatprep.subr.mxu0 0.0
        %2437 = vmatpush1.xpose.msra.mxu0 0.0
        %2438 = vmatprep.subr.mxu0 0.0
        %2439 = vmatpush1.xpose.msra.mxu0 0.0
        %2440 = vmatprep.subr.mxu0 0.0
        %2441 = vmatpush1.xpose.msra.mxu0 0.0
        %2442 = vmatprep.subr.mxu0 0.0
        %2443 = vmatpush1.xpose.msra.mxu0 0.0
        %2444 = vmatprep.subr.mxu0 0.0
        %2445 = vmatpush1.xpose.msra.mxu0 0.0
        %2446 = vmatprep.subr.mxu0 0.0
        %2447 = vmatpush1.xpose.msra.mxu0 0.0
        %2448 = vmatprep.subr.mxu0 0.0
        %2449 = vmatpush1.xpose.msra.mxu0 0.0
        %2450 = vmatprep.subr.mxu0 0.0
        %2451 = vmatpush1.xpose.msra.mxu0 0.0
        %2452 = vmatprep.subr.mxu0 0.0
        %2453 = vmatpush1.xpose.msra.mxu0 0.0
        %2454 = vmatprep.subr.mxu0 0.0
        %2455 = vmatpush1.xpose.msra.mxu0 0.0
        %2456 = vmatprep.subr.mxu0 0.0
        %2457 = vmatpush1.xpose.msra.mxu0 0.0
        %2458 = vmatprep.subr.mxu0 0.0
        %2459 = vmatpush1.xpose.msra.mxu0 0.0
        %2460 = vmatprep.subr.mxu0 0.0
        %2461 = vmatpush1.xpose.msra.mxu0 0.0
        %2462 = vmatprep.subr.mxu0 0.0
        %2463 = vmatpush1.xpose.msra.mxu0 0.0
        %2464 = vmatprep.subr.mxu0 0.0
        %2465 = vmatpush1.xpose.msra.mxu0 0.0
        %2466 = vmatprep.subr.mxu0 0.0
        %2467 = vmatpush1.xpose.msra.mxu0 0.0
        %2468 = vmatprep.subr.mxu0 0.0
        %2469 = vmatpush1.xpose.msra.mxu0 0.0
        %2470 = vmatprep.subr.mxu0 0.0
        %2471 = vmatpush1.xpose.msra.mxu0 0.0
        %2472 = vmatprep.subr.mxu0 0.0
        %2473 = vmatpush1.xpose.msra.mxu0 0.0
        %2474 = vmatprep.subr.mxu0 0.0
        %2475 = vmatpush1.xpose.msra.mxu0 0.0
        %2476 = vmatprep.subr.mxu0 0.0
        %2477 = vmatpush1.xpose.msra.mxu0 0.0
        %2478 = vmatprep.subr.mxu0 0.0
        %2479 = vmatpush1.xpose.msra.mxu0 0.0
        %2480 = vmatprep.mubr.f32.mxu0 0.0
        %2481 = vmatmul.mubr.f32.gmra.mrb[0].mxu0 %v1652
        %v2482 = vpop.f32.mrb[0].mxu0
        %v2483 = vadd.f32 0.0, %v2482
        %v2484 = vpop.f32.mrb[0].mxu0
        %2485 = vmatprep.mubr.f32.mxu0 0.0
        %2486 = vmatmul.mubr.f32.gmra.mrb[0].mxu0 %v1654
        %v2487 = vpop.f32.mrb[0].mxu0
        %v2488 = vadd.f32 0.0, %v2487
        %v2489 = vpop.f32.mrb[0].mxu0
        %2490 = vdwg.mxu0
        %v2491 = vsel %vm1073, %v2234, -inf
        %2492 = vmax.xlane.f32.xlu0 %v2491
        %v2493 = vpop.xlane.xlu0 %2492
        %v2494 = vsel %vm1073, %v2239, -inf
        %2495 = vmax.xlane.f32.xlu0 %v2494
        %v2496 = vpop.xlane.xlu0 %2495
        %v2497 = vsel %vm1073, %v2317, -inf
        %2498 = vmax.xlane.f32.xlu0 %v2497
        %v2499 = vpop.xlane.xlu0 %2498
        %v2500 = vsel %vm1073, %v2322, -inf
        %2501 = vmax.xlane.f32.xlu0 %v2500
        %v2502 = vpop.xlane.xlu0 %2501
        %v2503 = vsel %vm1073, %v2400, -inf
        %2504 = vmax.xlane.f32.xlu0 %v2503
        %v2505 = vpop.xlane.xlu0 %2504
        %v2506 = vsel %vm1073, %v2405, -inf
        %2507 = vmax.xlane.f32.xlu0 %v2506
        %v2508 = vpop.xlane.xlu0 %2507
        %v2509 = vsel %vm1073, %v2483, -inf
        %2510 = vmax.xlane.f32.xlu0 %v2509
        %v2511 = vpop.xlane.xlu0 %2510
        %v2512 = vsel %vm1073, %v2488, -inf
        %2513 = vmax.xlane.f32.xlu0 %v2512
        %v2514 = vpop.xlane.xlu0 %2513
        %v2515 = vsub.f32 %v2234, %v2493
        %v2516 = vsub.f32 %v2239, %v2496
        %v2517 = vsub.f32 %v2317, %v2499
        %v2518 = vsub.f32 %v2322, %v2502
        %v2519 = vsub.f32 %v2400, %v2505
        %v2520 = vsub.f32 %v2405, %v2508
        %v2521 = vsub.f32 %v2483, %v2511
        %v2522 = vsub.f32 %v2488, %v2514
        %v2523 = vmul.f32 %v2515, 1.442695
        %v2524 = vpow.pop %v2523
        %v2525 = vmul.f32 %v2516, 1.442695
        %v2526 = vpow.pop %v2525
        %v2527 = vmul.f32 %v2517, 1.442695
        %v2528 = vpow.pop %v2527
        %v2529 = vmul.f32 %v2518, 1.442695
        %v2530 = vpow.pop %v2529
        %v2531 = vmul.f32 %v2519, 1.442695
        %v2532 = vpow.pop %v2531
        %v2533 = vmul.f32 %v2520, 1.442695
        %v2534 = vpow.pop %v2533
        %v2535 = vmul.f32 %v2521, 1.442695
        %v2536 = vpow.pop %v2535
        %v2537 = vmul.f32 %v2522, 1.442695
        %v2538 = vpow.pop %v2537
        %v2539 = vsel %vm1073, %v2524, 0.0
        %2540 = vadd.xlane.f32.xlu0 %v2539
        %v2541 = vpop.xlane.xlu0 %2540
        %v2542 = vsel %vm1073, %v2526, 0.0
        %2543 = vadd.xlane.f32.xlu0 %v2542
        %v2544 = vpop.xlane.xlu0 %2543
        %v2545 = vsel %vm1073, %v2528, 0.0
        %2546 = vadd.xlane.f32.xlu0 %v2545
        %v2547 = vpop.xlane.xlu0 %2546
        %v2548 = vsel %vm1073, %v2530, 0.0
        %2549 = vadd.xlane.f32.xlu0 %v2548
        %v2550 = vpop.xlane.xlu0 %2549
        %v2551 = vsel %vm1073, %v2532, 0.0
        %2552 = vadd.xlane.f32.xlu0 %v2551
        %v2553 = vpop.xlane.xlu0 %2552
        %v2554 = vsel %vm1073, %v2534, 0.0
        %2555 = vadd.xlane.f32.xlu0 %v2554
        %v2556 = vpop.xlane.xlu0 %2555
        %v2557 = vsel %vm1073, %v2536, 0.0
        %2558 = vadd.xlane.f32.xlu0 %v2557
        %v2559 = vpop.xlane.xlu0 %2558
        %v2560 = vsel %vm1073, %v2538, 0.0
        %2561 = vadd.xlane.f32.xlu0 %v2560
        %v2562 = vpop.xlane.xlu0 %2561
        %v2563 = vrcp.pop %v2541
        %v2564 = vrcp.pop %v2544
        %v2565 = vrcp.pop %v2547
        %v2566 = vrcp.pop %v2550
        %v2567 = vrcp.pop %v2553
        %v2568 = vrcp.pop %v2556
        %v2569 = vrcp.pop %v2559
        %v2570 = vrcp.pop %v2562
        %v2571 = vmul.f32 %v2524, %v2563
        %v2572 = vmul.f32 %v2526, %v2564
        %v2573 = vmul.f32 %v2528, %v2565
        %v2574 = vmul.f32 %v2530, %v2566
        %v2575 = vmul.f32 %v2532, %v2567
        %v2576 = vmul.f32 %v2534, %v2568
        %v2577 = vmul.f32 %v2536, %v2569
        %v2578 = vmul.f32 %v2538, %v2570
        %v2580 = vsel %vm1073, %v2571, 0
        %v2583 = vsel %vm1073, %v2572, 0
        %2585 = vmatprep.subr.mxu0 0.0
        %2586 = vmatpush1.msra.mxu0 %v929
        %2587 = vmatprep.subr.mxu0 0.0
        %2588 = vmatpush1.msra.mxu0 %v934
        %2589 = vmatprep.subr.mxu0 0.0
        %2590 = vmatpush1.msra.mxu0 %v939
        %2591 = vmatprep.subr.mxu0 0.0
        %2592 = vmatpush1.msra.mxu0 %v944
        %2593 = vmatprep.subr.mxu0 0.0
        %2594 = vmatpush1.msra.mxu0 0.0
        %2595 = vmatprep.subr.mxu0 0.0
        %2596 = vmatpush1.msra.mxu0 0.0
        %2597 = vmatprep.subr.mxu0 0.0
        %2598 = vmatpush1.msra.mxu0 0.0
        %2599 = vmatprep.subr.mxu0 0.0
        %2600 = vmatpush1.msra.mxu0 0.0
        %2601 = vmatprep.subr.mxu0 0.0
        %2602 = vmatpush1.msra.mxu0 0.0
        %2603 = vmatprep.subr.mxu0 0.0
        %2604 = vmatpush1.msra.mxu0 0.0
        %2605 = vmatprep.subr.mxu0 0.0
        %2606 = vmatpush1.msra.mxu0 0.0
        %2607 = vmatprep.subr.mxu0 0.0
        %2608 = vmatpush1.msra.mxu0 0.0
        %2609 = vmatprep.subr.mxu0 0.0
        %2610 = vmatpush1.msra.mxu0 0.0
        %2611 = vmatprep.subr.mxu0 0.0
        %2612 = vmatpush1.msra.mxu0 0.0
        %2613 = vmatprep.subr.mxu0 0.0
        %2614 = vmatpush1.msra.mxu0 0.0
        %2615 = vmatprep.subr.mxu0 0.0
        %2616 = vmatpush1.msra.mxu0 0.0
        %2617 = vmatprep.subr.mxu0 0.0
        %2618 = vmatpush1.msra.mxu0 0.0
        %2619 = vmatprep.subr.mxu0 0.0
        %2620 = vmatpush1.msra.mxu0 0.0
        %2621 = vmatprep.subr.mxu0 0.0
        %2622 = vmatpush1.msra.mxu0 0.0
        %2623 = vmatprep.subr.mxu0 0.0
        %2624 = vmatpush1.msra.mxu0 0.0
        %2625 = vmatprep.subr.mxu0 0.0
        %2626 = vmatpush1.msra.mxu0 0.0
        %2627 = vmatprep.subr.mxu0 0.0
        %2628 = vmatpush1.msra.mxu0 0.0
        %2629 = vmatprep.subr.mxu0 0.0
        %2630 = vmatpush1.msra.mxu0 0.0
        %2631 = vmatprep.subr.mxu0 0.0
        %2632 = vmatpush1.msra.mxu0 0.0
        %2633 = vmatprep.subr.mxu0 0.0
        %2634 = vmatpush1.msra.mxu0 0.0
        %2635 = vmatprep.subr.mxu0 0.0
        %2636 = vmatpush1.msra.mxu0 0.0
        %2637 = vmatprep.subr.mxu0 0.0
        %2638 = vmatpush1.msra.mxu0 0.0
        %2639 = vmatprep.subr.mxu0 0.0
        %2640 = vmatpush1.msra.mxu0 0.0
        %2641 = vmatprep.subr.mxu0 0.0
        %2642 = vmatpush1.msra.mxu0 0.0
        %2643 = vmatprep.subr.mxu0 0.0
        %2644 = vmatpush1.msra.mxu0 0.0
        %2645 = vmatprep.subr.mxu0 0.0
        %2646 = vmatpush1.msra.mxu0 0.0
        %2647 = vmatprep.subr.mxu0 0.0
        %2648 = vmatpush1.msra.mxu0 0.0
        %2649 = vmatprep.mubr.f32.mxu0 0.0
        %2650 = vmatmul.mubr.f32.gmra.mrb[0].mxu0 %v2580
        %v2651 = vpop.f32.mrb[0].mxu0
        %v2652 = vadd.f32 0.0, %v2651
        %v2653 = vpop.f32.mrb[0].mxu0
        %2654 = vmatprep.mubr.f32.mxu0 0.0
        %2655 = vmatmul.mubr.f32.gmra.mrb[0].mxu0 %v2583
        %v2656 = vpop.f32.mrb[0].mxu0
        %v2657 = vadd.f32 0.0, %v2656
        %v2658 = vpop.f32.mrb[0].mxu0
        %2659 = vdwg.mxu0
        %v2661 = vsel %vm1073, %v2573, 0
        %v2664 = vsel %vm1073, %v2574, 0
        %2666 = vmatprep.subr.mxu0 0.0
        %2667 = vmatpush1.msra.mxu0 %v1228
        %2668 = vmatprep.subr.mxu0 0.0
        %2669 = vmatpush1.msra.mxu0 %v1230
        %2670 = vmatprep.subr.mxu0 0.0
        %2671 = vmatpush1.msra.mxu0 %v1232
        %2672 = vmatprep.subr.mxu0 0.0
        %2673 = vmatpush1.msra.mxu0 %v1234
        %2674 = vmatprep.subr.mxu0 0.0
        %2675 = vmatpush1.msra.mxu0 0.0
        %2676 = vmatprep.subr.mxu0 0.0
        %2677 = vmatpush1.msra.mxu0 0.0
        %2678 = vmatprep.subr.mxu0 0.0
        %2679 = vmatpush1.msra.mxu0 0.0
        %2680 = vmatprep.subr.mxu0 0.0
        %2681 = vmatpush1.msra.mxu0 0.0
        %2682 = vmatprep.subr.mxu0 0.0
        %2683 = vmatpush1.msra.mxu0 0.0
        %2684 = vmatprep.subr.mxu0 0.0
        %2685 = vmatpush1.msra.mxu0 0.0
        %2686 = vmatprep.subr.mxu0 0.0
        %2687 = vmatpush1.msra.mxu0 0.0
        %2688 = vmatprep.subr.mxu0 0.0
        %2689 = vmatpush1.msra.mxu0 0.0
        %2690 = vmatprep.subr.mxu0 0.0
        %2691 = vmatpush1.msra.mxu0 0.0
        %2692 = vmatprep.subr.mxu0 0.0
        %2693 = vmatpush1.msra.mxu0 0.0
        %2694 = vmatprep.subr.mxu0 0.0
        %2695 = vmatpush1.msra.mxu0 0.0
        %2696 = vmatprep.subr.mxu0 0.0
        %2697 = vmatpush1.msra.mxu0 0.0
        %2698 = vmatprep.subr.mxu0 0.0
        %2699 = vmatpush1.msra.mxu0 0.0
        %2700 = vmatprep.subr.mxu0 0.0
        %2701 = vmatpush1.msra.mxu0 0.0
        %2702 = vmatprep.subr.mxu0 0.0
        %2703 = vmatpush1.msra.mxu0 0.0
        %2704 = vmatprep.subr.mxu0 0.0
        %2705 = vmatpush1.msra.mxu0 0.0
        %2706 = vmatprep.subr.mxu0 0.0
        %2707 = vmatpush1.msra.mxu0 0.0
        %2708 = vmatprep.subr.mxu0 0.0
        %2709 = vmatpush1.msra.mxu0 0.0
        %2710 = vmatprep.subr.mxu0 0.0
        %2711 = vmatpush1.msra.mxu0 0.0
        %2712 = vmatprep.subr.mxu0 0.0
        %2713 = vmatpush1.msra.mxu0 0.0
        %2714 = vmatprep.subr.mxu0 0.0
        %2715 = vmatpush1.msra.mxu0 0.0
        %2716 = vmatprep.subr.mxu0 0.0
        %2717 = vmatpush1.msra.mxu0 0.0
        %2718 = vmatprep.subr.mxu0 0.0
        %2719 = vmatpush1.msra.mxu0 0.0
        %2720 = vmatprep.subr.mxu0 0.0
        %2721 = vmatpush1.msra.mxu0 0.0
        %2722 = vmatprep.subr.mxu0 0.0
        %2723 = vmatpush1.msra.mxu0 0.0
        %2724 = vmatprep.subr.mxu0 0.0
        %2725 = vmatpush1.msra.mxu0 0.0
        %2726 = vmatprep.subr.mxu0 0.0
        %2727 = vmatpush1.msra.mxu0 0.0
        %2728 = vmatprep.subr.mxu0 0.0
        %2729 = vmatpush1.msra.mxu0 0.0
        %2730 = vmatprep.mubr.f32.mxu0 0.0
        %2731 = vmatmul.mubr.f32.gmra.mrb[0].mxu0 %v2661
        %v2732 = vpop.f32.mrb[0].mxu0
        %v2733 = vadd.f32 0.0, %v2732
        %v2734 = vpop.f32.mrb[0].mxu0
        %2735 = vmatprep.mubr.f32.mxu0 0.0
        %2736 = vmatmul.mubr.f32.gmra.mrb[0].mxu0 %v2664
        %v2737 = vpop.f32.mrb[0].mxu0
        %v2738 = vadd.f32 0.0, %v2737
        %v2739 = vpop.f32.mrb[0].mxu0
        %2740 = vdwg.mxu0
        %v2742 = vsel %vm1073, %v2575, 0
        %v2745 = vsel %vm1073, %v2576, 0
        %2747 = vmatprep.subr.mxu0 0.0
        %2748 = vmatpush1.msra.mxu0 %v1252
        %2749 = vmatprep.subr.mxu0 0.0
        %2750 = vmatpush1.msra.mxu0 %v1254
        %2751 = vmatprep.subr.mxu0 0.0
        %2752 = vmatpush1.msra.mxu0 %v1256
        %2753 = vmatprep.subr.mxu0 0.0
        %2754 = vmatpush1.msra.mxu0 %v1258
        %2755 = vmatprep.subr.mxu0 0.0
        %2756 = vmatpush1.msra.mxu0 0.0
        %2757 = vmatprep.subr.mxu0 0.0
        %2758 = vmatpush1.msra.mxu0 0.0
        %2759 = vmatprep.subr.mxu0 0.0
        %2760 = vmatpush1.msra.mxu0 0.0
        %2761 = vmatprep.subr.mxu0 0.0
        %2762 = vmatpush1.msra.mxu0 0.0
        %2763 = vmatprep.subr.mxu0 0.0
        %2764 = vmatpush1.msra.mxu0 0.0
        %2765 = vmatprep.subr.mxu0 0.0
        %2766 = vmatpush1.msra.mxu0 0.0
        %2767 = vmatprep.subr.mxu0 0.0
        %2768 = vmatpush1.msra.mxu0 0.0
        %2769 = vmatprep.subr.mxu0 0.0
        %2770 = vmatpush1.msra.mxu0 0.0
        %2771 = vmatprep.subr.mxu0 0.0
        %2772 = vmatpush1.msra.mxu0 0.0
        %2773 = vmatprep.subr.mxu0 0.0
        %2774 = vmatpush1.msra.mxu0 0.0
        %2775 = vmatprep.subr.mxu0 0.0
        %2776 = vmatpush1.msra.mxu0 0.0
        %2777 = vmatprep.subr.mxu0 0.0
        %2778 = vmatpush1.msra.mxu0 0.0
        %2779 = vmatprep.subr.mxu0 0.0
        %2780 = vmatpush1.msra.mxu0 0.0
        %2781 = vmatprep.subr.mxu0 0.0
        %2782 = vmatpush1.msra.mxu0 0.0
        %2783 = vmatprep.subr.mxu0 0.0
        %2784 = vmatpush1.msra.mxu0 0.0
        %2785 = vmatprep.subr.mxu0 0.0
        %2786 = vmatpush1.msra.mxu0 0.0
        %2787 = vmatprep.subr.mxu0 0.0
        %2788 = vmatpush1.msra.mxu0 0.0
        %2789 = vmatprep.subr.mxu0 0.0
        %2790 = vmatpush1.msra.mxu0 0.0
        %2791 = vmatprep.subr.mxu0 0.0
        %2792 = vmatpush1.msra.mxu0 0.0
        %2793 = vmatprep.subr.mxu0 0.0
        %2794 = vmatpush1.msra.mxu0 0.0
        %2795 = vmatprep.subr.mxu0 0.0
        %2796 = vmatpush1.msra.mxu0 0.0
        %2797 = vmatprep.subr.mxu0 0.0
        %2798 = vmatpush1.msra.mxu0 0.0
        %2799 = vmatprep.subr.mxu0 0.0
        %2800 = vmatpush1.msra.mxu0 0.0
        %2801 = vmatprep.subr.mxu0 0.0
        %2802 = vmatpush1.msra.mxu0 0.0
        %2803 = vmatprep.subr.mxu0 0.0
        %2804 = vmatpush1.msra.mxu0 0.0
        %2805 = vmatprep.subr.mxu0 0.0
        %2806 = vmatpush1.msra.mxu0 0.0
        %2807 = vmatprep.subr.mxu0 0.0
        %2808 = vmatpush1.msra.mxu0 0.0
        %2809 = vmatprep.subr.mxu0 0.0
        %2810 = vmatpush1.msra.mxu0 0.0
        %2811 = vmatprep.mubr.f32.mxu0 0.0
        %2812 = vmatmul.mubr.f32.gmra.mrb[0].mxu0 %v2742
        %v2813 = vpop.f32.mrb[0].mxu0
        %v2814 = vadd.f32 0.0, %v2813
        %v2815 = vpop.f32.mrb[0].mxu0
        %2816 = vmatprep.mubr.f32.mxu0 0.0
        %2817 = vmatmul.mubr.f32.gmra.mrb[0].mxu0 %v2745
        %v2818 = vpop.f32.mrb[0].mxu0
        %v2819 = vadd.f32 0.0, %v2818
        %v2820 = vpop.f32.mrb[0].mxu0
        %2821 = vdwg.mxu0
        %v2823 = vsel %vm1073, %v2577, 0
        %v2826 = vsel %vm1073, %v2578, 0
        %2828 = vmatprep.subr.mxu0 0.0
        %2829 = vmatpush1.msra.mxu0 %v1276
        %2830 = vmatprep.subr.mxu0 0.0
        %2831 = vmatpush1.msra.mxu0 %v1278
        %2832 = vmatprep.subr.mxu0 0.0
        %2833 = vmatpush1.msra.mxu0 %v1280
        %2834 = vmatprep.subr.mxu0 0.0
        %2835 = vmatpush1.msra.mxu0 %v1282
        %2836 = vmatprep.subr.mxu0 0.0
        %2837 = vmatpush1.msra.mxu0 0.0
        %2838 = vmatprep.subr.mxu0 0.0
        %2839 = vmatpush1.msra.mxu0 0.0
        %2840 = vmatprep.subr.mxu0 0.0
        %2841 = vmatpush1.msra.mxu0 0.0
        %2842 = vmatprep.subr.mxu0 0.0
        %2843 = vmatpush1.msra.mxu0 0.0
        %2844 = vmatprep.subr.mxu0 0.0
        %2845 = vmatpush1.msra.mxu0 0.0
        %2846 = vmatprep.subr.mxu0 0.0
        %2847 = vmatpush1.msra.mxu0 0.0
        %2848 = vmatprep.subr.mxu0 0.0
        %2849 = vmatpush1.msra.mxu0 0.0
        %2850 = vmatprep.subr.mxu0 0.0
        %2851 = vmatpush1.msra.mxu0 0.0
        %2852 = vmatprep.subr.mxu0 0.0
        %2853 = vmatpush1.msra.mxu0 0.0
        %2854 = vmatprep.subr.mxu0 0.0
        %2855 = vmatpush1.msra.mxu0 0.0
        %2856 = vmatprep.subr.mxu0 0.0
        %2857 = vmatpush1.msra.mxu0 0.0
        %2858 = vmatprep.subr.mxu0 0.0
        %2859 = vmatpush1.msra.mxu0 0.0
        %2860 = vmatprep.subr.mxu0 0.0
        %2861 = vmatpush1.msra.mxu0 0.0
        %2862 = vmatprep.subr.mxu0 0.0
        %2863 = vmatpush1.msra.mxu0 0.0
        %2864 = vmatprep.subr.mxu0 0.0
        %2865 = vmatpush1.msra.mxu0 0.0
        %2866 = vmatprep.subr.mxu0 0.0
        %2867 = vmatpush1.msra.mxu0 0.0
        %2868 = vmatprep.subr.mxu0 0.0
        %2869 = vmatpush1.msra.mxu0 0.0
        %2870 = vmatprep.subr.mxu0 0.0
        %2871 = vmatpush1.msra.mxu0 0.0
        %2872 = vmatprep.subr.mxu0 0.0
        %2873 = vmatpush1.msra.mxu0 0.0
        %2874 = vmatprep.subr.mxu0 0.0
        %2875 = vmatpush1.msra.mxu0 0.0
        %2876 = vmatprep.subr.mxu0 0.0
        %2877 = vmatpush1.msra.mxu0 0.0
        %2878 = vmatprep.subr.mxu0 0.0
        %2879 = vmatpush1.msra.mxu0 0.0
        %2880 = vmatprep.subr.mxu0 0.0
        %2881 = vmatpush1.msra.mxu0 0.0
        %2882 = vmatprep.subr.mxu0 0.0
        %2883 = vmatpush1.msra.mxu0 0.0
        %2884 = vmatprep.subr.mxu0 0.0
        %2885 = vmatpush1.msra.mxu0 0.0
        %2886 = vmatprep.subr.mxu0 0.0
        %2887 = vmatpush1.msra.mxu0 0.0
        %2888 = vmatprep.subr.mxu0 0.0
        %2889 = vmatpush1.msra.mxu0 0.0
        %2890 = vmatprep.subr.mxu0 0.0
        %2891 = vmatpush1.msra.mxu0 0.0
        %2892 = vmatprep.mubr.f32.mxu0 0.0
        %2893 = vmatmul.mubr.f32.gmra.mrb[0].mxu0 %v2823
        %v2894 = vpop.f32.mrb[0].mxu0
        %v2895 = vadd.f32 0.0, %v2894
        %v2896 = vpop.f32.mrb[0].mxu0
        %2897 = vmatprep.mubr.f32.mxu0 0.0
        %2898 = vmatmul.mubr.f32.gmra.mrb[0].mxu0 %v2826
        %v2899 = vpop.f32.mrb[0].mxu0
        %v2900 = vadd.f32 0.0, %v2899
        %v2901 = vpop.f32.mrb[0].mxu0
        %2902 = vdwg.mxu0
        %v2903 = vadd.f32 %v1147, %v2652
        %v2904 = vadd.f32 %v1152, %v2657
        %v2905 = vadd.f32 %v1374, %v2733
        %v2906 = vadd.f32 %v1376, %v2738
        %v2907 = vadd.f32 %v1380, %v2814
        %v2908 = vadd.f32 %v1382, %v2819
        %v2909 = vadd.f32 %v1386, %v2895
        %v2910 = vadd.f32 %v1388, %v2900
        %2915 = vrot.lane.b32.xlu0 %v2153, 32
        %v2916 = vpop.permute.xlu0 %2915
        %2917 = vrot.lane.b32.xlu0 %v2154, 32
        %v2918 = vpop.permute.xlu0 %2917
        %2919 = vrot.lane.b32.xlu0 %v2905, 32
        %v2920 = vpop.permute.xlu0 %2919
        %2921 = vrot.lane.b32.xlu0 %v2906, 32
        %v2922 = vpop.permute.xlu0 %2921
        %2931 = vrot.lane.b32.xlu0 %v2155, 64
        %v2932 = vpop.permute.xlu0 %2931
        %2933 = vrot.lane.b32.xlu0 %v2156, 64
        %v2934 = vpop.permute.xlu0 %2933
        %2935 = vrot.lane.b32.xlu0 %v2907, 64
        %v2936 = vpop.permute.xlu0 %2935
        %2937 = vrot.lane.b32.xlu0 %v2908, 64
        %v2938 = vpop.permute.xlu0 %2937
        %2947 = vrot.lane.b32.xlu0 %v2157, 96
        %v2948 = vpop.permute.xlu0 %2947
        %2949 = vrot.lane.b32.xlu0 %v2158, 96
        %v2950 = vpop.permute.xlu0 %2949
        %2951 = vrot.lane.b32.xlu0 %v2909, 96
        %v2952 = vpop.permute.xlu0 %2951
        %2953 = vrot.lane.b32.xlu0 %v2910, 96
        %v2954 = vpop.permute.xlu0 %2953
        %v2959 = vsel %vm1073, %v2151, %v2916
        %v2960 = vsel %vm1073, %v2152, %v2918
        %v2961 = vsel %vm1073, %v2903, %v2920
        %v2962 = vsel %vm1073, %v2904, %v2922
        %vm2963 = vcmask 523264
        %v2964 = vsel %vm2963, %v2959, %v2932
        %v2965 = vsel %vm2963, %v2960, %v2934
        %v2966 = vsel %vm2963, %v2961, %v2936
        %v2967 = vsel %vm2963, %v2962, %v2938
        %vm2968 = vcmask 785408
        %v2969 = vsel %vm2968, %v2964, %v2948
        %v2970 = vsel %vm2968, %v2965, %v2950
        %v2971 = vsel %vm2968, %v2966, %v2952
        %v2972 = vsel %vm2968, %v2967, %v2954
        %v2973 = vld [vmem:[%s8] sm:$0xff]
        %v2974 = vld [vmem:[%s8 + $0x8] sm:$0xff]
        %v2975 = vld [vmem:[%s8 + $0x10] sm:$0xff]
        %v2976 = vld [vmem:[%s8 + $0x18] sm:$0xff]
        %v2977 = vld [vmem:[%s8 + $0x20] sm:$0xff]
        %v2978 = vld [vmem:[%s8 + $0x28] sm:$0xff]
        %v2979 = vld [vmem:[%s8 + $0x30] sm:$0xff]
        %v2980 = vld [vmem:[%s8 + $0x38] sm:$0xff]
        %v2981 = vld [vmem:[%s8 + $0x40] sm:$0xff]
        %v2982 = vld [vmem:[%s8 + $0x48] sm:$0xff]
        %v2983 = vld [vmem:[%s8 + $0x50] sm:$0xff]
        %v2984 = vld [vmem:[%s8 + $0x58] sm:$0xff]
        %v2985 = vld [vmem:[%s8 + $0x60] sm:$0xff]
        %v2986 = vld [vmem:[%s8 + $0x68] sm:$0xff]
        %v2987 = vld [vmem:[%s8 + $0x70] sm:$0xff]
        %v2988 = vld [vmem:[%s8 + $0x78] sm:$0xff]
        %v2989 = vld [vmem:[#allocation9] sm:$0x1]
        %v2991 = vlaneseq
        %v2992 = vshrl.u32 %v2991, 7
        %v2993 = vsub.s32 0, %v2992
        %v2994 = vrot.slane %v2989, %v2993
        %2996 = vmatprep.subr.mxu0 0.0
        %2997 = vmatpush1.msra.mxu0 %v2973
        %2998 = vmatprep.subr.mxu0 0.0
        %2999 = vmatpush1.msra.mxu0 %v2974
        %3000 = vmatprep.subr.mxu0 0.0
        %3001 = vmatpush1.msra.mxu0 %v2975
        %3002 = vmatprep.subr.mxu0 0.0
        %3003 = vmatpush1.msra.mxu0 %v2976
        %3004 = vmatprep.subr.mxu0 0.0
        %3005 = vmatpush1.msra.mxu0 %v2977
        %3006 = vmatprep.subr.mxu0 0.0
        %3007 = vmatpush1.msra.mxu0 %v2978
        %3008 = vmatprep.subr.mxu0 0.0
        %3009 = vmatpush1.msra.mxu0 %v2979
        %3010 = vmatprep.subr.mxu0 0.0
        %3011 = vmatpush1.msra.mxu0 %v2980
        %3012 = vmatprep.subr.mxu0 0.0
        %3013 = vmatpush1.msra.mxu0 %v2981
        %3014 = vmatprep.subr.mxu0 0.0
        %3015 = vmatpush1.msra.mxu0 %v2982
        %3016 = vmatprep.subr.mxu0 0.0
        %3017 = vmatpush1.msra.mxu0 %v2983
        %3018 = vmatprep.subr.mxu0 0.0
        %3019 = vmatpush1.msra.mxu0 %v2984
        %3020 = vmatprep.subr.mxu0 0.0
        %3021 = vmatpush1.msra.mxu0 %v2985
        %3022 = vmatprep.subr.mxu0 0.0
        %3023 = vmatpush1.msra.mxu0 %v2986
        %3024 = vmatprep.subr.mxu0 0.0
        %3025 = vmatpush1.msra.mxu0 %v2987
        %3026 = vmatprep.subr.mxu0 0.0
        %3027 = vmatpush1.msra.mxu0 %v2988
        %3028 = vmatprep.subr.mxu0 0.0
        %3029 = vmatpush1.msra.mxu0 0.0
        %3030 = vmatprep.subr.mxu0 0.0
        %3031 = vmatpush1.msra.mxu0 0.0
        %3032 = vmatprep.subr.mxu0 0.0
        %3033 = vmatpush1.msra.mxu0 0.0
        %3034 = vmatprep.subr.mxu0 0.0
        %3035 = vmatpush1.msra.mxu0 0.0
        %3036 = vmatprep.subr.mxu0 0.0
        %3037 = vmatpush1.msra.mxu0 0.0
        %3038 = vmatprep.subr.mxu0 0.0
        %3039 = vmatpush1.msra.mxu0 0.0
        %3040 = vmatprep.subr.mxu0 0.0
        %3041 = vmatpush1.msra.mxu0 0.0
        %3042 = vmatprep.subr.mxu0 0.0
        %3043 = vmatpush1.msra.mxu0 0.0
        %3044 = vmatprep.subr.mxu0 0.0
        %3045 = vmatpush1.msra.mxu0 0.0
        %3046 = vmatprep.subr.mxu0 0.0
        %3047 = vmatpush1.msra.mxu0 0.0
        %3048 = vmatprep.subr.mxu0 0.0
        %3049 = vmatpush1.msra.mxu0 0.0
        %3050 = vmatprep.subr.mxu0 0.0
        %3051 = vmatpush1.msra.mxu0 0.0
        %3052 = vmatprep.subr.mxu0 0.0
        %3053 = vmatpush1.msra.mxu0 0.0
        %3054 = vmatprep.subr.mxu0 0.0
        %3055 = vmatpush1.msra.mxu0 0.0
        %3056 = vmatprep.subr.mxu0 0.0
        %3057 = vmatpush1.msra.mxu0 0.0
        %3058 = vmatprep.subr.mxu0 0.0
        %3059 = vmatpush1.msra.mxu0 0.0
        %3060 = vmatprep.mubr.f32.mxu0 0.0
        %3061 = vmatmul.mubr.f32.gmra.mrb[0].mxu0 %v2969
        %v3062 = vpop.f32.mrb[0].mxu0
        %v3063 = vadd.f32 %v2994, %v3062
        %v3064 = vpop.f32.mrb[0].mxu0
        %3065 = vmatprep.mubr.f32.mxu0 0.0
        %3066 = vmatmul.mubr.f32.gmra.mrb[0].mxu0 %v2970
        %v3067 = vpop.f32.mrb[0].mxu0
        %v3068 = vadd.f32 %v2994, %v3067
        %v3069 = vpop.f32.mrb[0].mxu0
        %3070 = vmatprep.mubr.f32.mxu0 0.0
        %3071 = vmatmul.mubr.f32.gmra.mrb[0].mxu0 %v2971
        %v3072 = vpop.f32.mrb[0].mxu0
        %v3073 = vadd.f32 %v2994, %v3072
        %v3074 = vpop.f32.mrb[0].mxu0
        %3075 = vmatprep.mubr.f32.mxu0 0.0
        %3076 = vmatmul.mubr.f32.gmra.mrb[0].mxu0 %v2972
        %v3077 = vpop.f32.mrb[0].mxu0
        %v3078 = vadd.f32 %v2994, %v3077
        %v3079 = vpop.f32.mrb[0].mxu0
        %3080 = vdwg.mxu0
        %v3081 = vmax.f32 %v3063, 0.0
        %v3082 = vmax.f32 %v3068, 0.0
        %v3083 = vmax.f32 %v3073, 0.0
        %v3084 = vmax.f32 %v3078, 0.0
        %v3085 = vadd.f32 %v2969, %v3081
        %v3086 = vadd.f32 %v2970, %v3082
        %v3087 = vadd.f32 %v2971, %v3083
        %v3088 = vadd.f32 %v2972, %v3084
        %v3089 = vld [vmem:[#allocation10] sm:$0xff]
        %v3090 = vld [vmem:[#allocation10 + $0x8] sm:$0xff]
        %v3091 = vld [vmem:[#allocation10 + $0x10] sm:$0xff]
        %v3092 = vld [vmem:[#allocation10 + $0x18] sm:$0xff]
        %v3093 = vld [vmem:[#allocation10 + $0x20] sm:$0xff]
        %v3094 = vld [vmem:[#allocation10 + $0x28] sm:$0xff]
        %v3095 = vld [vmem:[#allocation10 + $0x30] sm:$0xff]
        %v3096 = vld [vmem:[#allocation10 + $0x38] sm:$0xff]
        %v3097 = vld [vmem:[#allocation10 + $0x40] sm:$0xff]
        %v3098 = vld [vmem:[#allocation10 + $0x48] sm:$0xff]
        %v3099 = vld [vmem:[#allocation10 + $0x50] sm:$0xff]
        %v3100 = vld [vmem:[#allocation10 + $0x58] sm:$0xff]
        %v3101 = vld [vmem:[#allocation10 + $0x60] sm:$0xff]
        %v3102 = vld [vmem:[#allocation10 + $0x68] sm:$0xff]
        %v3103 = vld [vmem:[#allocation10 + $0x70] sm:$0xff]
        %v3104 = vld [vmem:[#allocation10 + $0x78] sm:$0xff]
        %v3105 = vld [vmem:[%s13] sm:$0x1]
        %v3107 = vlaneseq
        %v3108 = vshrl.u32 %v3107, 7
        %v3109 = vsub.s32 0, %v3108
        %v3110 = vrot.slane %v3105, %v3109
        %3112 = vmatprep.subr.mxu0 0.0
        %3113 = vmatpush1.msra.mxu0 %v3089
        %3114 = vmatprep.subr.mxu0 0.0
        %3115 = vmatpush1.msra.mxu0 %v3090
        %3116 = vmatprep.subr.mxu0 0.0
        %3117 = vmatpush1.msra.mxu0 %v3091
        %3118 = vmatprep.subr.mxu0 0.0
        %3119 = vmatpush1.msra.mxu0 %v3092
        %3120 = vmatprep.subr.mxu0 0.0
        %3121 = vmatpush1.msra.mxu0 %v3093
        %3122 = vmatprep.subr.mxu0 0.0
        %3123 = vmatpush1.msra.mxu0 %v3094
        %3124 = vmatprep.subr.mxu0 0.0
        %3125 = vmatpush1.msra.mxu0 %v3095
        %3126 = vmatprep.subr.mxu0 0.0
        %3127 = vmatpush1.msra.mxu0 %v3096
        %3128 = vmatprep.subr.mxu0 0.0
        %3129 = vmatpush1.msra.mxu0 %v3097
        %3130 = vmatprep.subr.mxu0 0.0
        %3131 = vmatpush1.msra.mxu0 %v3098
        %3132 = vmatprep.subr.mxu0 0.0
        %3133 = vmatpush1.msra.mxu0 %v3099
        %3134 = vmatprep.subr.mxu0 0.0
        %3135 = vmatpush1.msra.mxu0 %v3100
        %3136 = vmatprep.subr.mxu0 0.0
        %3137 = vmatpush1.msra.mxu0 %v3101
        %3138 = vmatprep.subr.mxu0 0.0
        %3139 = vmatpush1.msra.mxu0 %v3102
        %3140 = vmatprep.subr.mxu0 0.0
        %3141 = vmatpush1.msra.mxu0 %v3103
        %3142 = vmatprep.subr.mxu0 0.0
        %3143 = vmatpush1.msra.mxu0 %v3104
        %3144 = vmatprep.subr.mxu0 0.0
        %3145 = vmatpush1.msra.mxu0 0.0
        %3146 = vmatprep.subr.mxu0 0.0
        %3147 = vmatpush1.msra.mxu0 0.0
        %3148 = vmatprep.subr.mxu0 0.0
        %3149 = vmatpush1.msra.mxu0 0.0
        %3150 = vmatprep.subr.mxu0 0.0
        %3151 = vmatpush1.msra.mxu0 0.0
        %3152 = vmatprep.subr.mxu0 0.0
        %3153 = vmatpush1.msra.mxu0 0.0
        %3154 = vmatprep.subr.mxu0 0.0
        %3155 = vmatpush1.msra.mxu0 0.0
        %3156 = vmatprep.subr.mxu0 0.0
        %3157 = vmatpush1.msra.mxu0 0.0
        %3158 = vmatprep.subr.mxu0 0.0
        %3159 = vmatpush1.msra.mxu0 0.0
        %3160 = vmatprep.subr.mxu0 0.0
        %3161 = vmatpush1.msra.mxu0 0.0
        %3162 = vmatprep.subr.mxu0 0.0
        %3163 = vmatpush1.msra.mxu0 0.0
        %3164 = vmatprep.subr.mxu0 0.0
        %3165 = vmatpush1.msra.mxu0 0.0
        %3166 = vmatprep.subr.mxu0 0.0
        %3167 = vmatpush1.msra.mxu0 0.0
        %3168 = vmatprep.subr.mxu0 0.0
        %3169 = vmatpush1.msra.mxu0 0.0
        %3170 = vmatprep.subr.mxu0 0.0
        %3171 = vmatpush1.msra.mxu0 0.0
        %3172 = vmatprep.subr.mxu0 0.0
        %3173 = vmatpush1.msra.mxu0 0.0
        %3174 = vmatprep.subr.mxu0 0.0
        %3175 = vmatpush1.msra.mxu0 0.0
        %3176 = vmatprep.mubr.f32.mxu0 0.0
        %3177 = vmatmul.mubr.f32.gmra.mrb[0].mxu0 %v3085
        %v3178 = vpop.f32.mrb[0].mxu0
        %v3179 = vadd.f32 %v3110, %v3178
        %v3180 = vpop.f32.mrb[0].mxu0
        %3181 = vmatprep.mubr.f32.mxu0 0.0
        %3182 = vmatmul.mubr.f32.gmra.mrb[0].mxu0 %v3086
        %v3183 = vpop.f32.mrb[0].mxu0
        %v3184 = vadd.f32 %v3110, %v3183
        %v3185 = vpop.f32.mrb[0].mxu0
        %3186 = vmatprep.mubr.f32.mxu0 0.0
        %3187 = vmatmul.mubr.f32.gmra.mrb[0].mxu0 %v3087
        %v3188 = vpop.f32.mrb[0].mxu0
        %v3189 = vadd.f32 %v3110, %v3188
        %v3190 = vpop.f32.mrb[0].mxu0
        %3191 = vmatprep.mubr.f32.mxu0 0.0
        %3192 = vmatmul.mubr.f32.gmra.mrb[0].mxu0 %v3088
        %v3193 = vpop.f32.mrb[0].mxu0
        %v3194 = vadd.f32 %v3110, %v3193
        %v3195 = vpop.f32.mrb[0].mxu0
        %3196 = vdwg.mxu0
        %v3197 = vld [vmem:[#allocation12] sm:$0xff]
        %v3198 = vld [vmem:[#allocation12 + $0x8] sm:$0xff]
        %v3199 = vld [vmem:[#allocation12 + $0x10] sm:$0xff]
        %v3200 = vld [vmem:[#allocation12 + $0x18] sm:$0xff]
        %v3201 = vld [vmem:[#allocation12 + $0x20] sm:$0xff]
        %v3202 = vld [vmem:[#allocation12 + $0x28] sm:$0xff]
        %v3203 = vld [vmem:[#allocation12 + $0x30] sm:$0xff]
        %v3204 = vld [vmem:[#allocation12 + $0x38] sm:$0xff]
        %v3205 = vld [vmem:[#allocation12 + $0x40] sm:$0xff]
        %v3206 = vld [vmem:[#allocation12 + $0x48] sm:$0xff]
        %v3207 = vld [vmem:[#allocation12 + $0x50] sm:$0xff]
        %v3208 = vld [vmem:[#allocation12 + $0x58] sm:$0xff]
        %v3209 = vld [vmem:[#allocation12 + $0x60] sm:$0xff]
        %v3210 = vld [vmem:[#allocation12 + $0x68] sm:$0xff]
        %v3211 = vld [vmem:[#allocation12 + $0x70] sm:$0xff]
        %v3212 = vld [vmem:[#allocation12 + $0x78] sm:$0xff]
        %v3213 = vld [vmem:[%s15] sm:$0x1]
        %v3215 = vlaneseq
        %v3216 = vshrl.u32 %v3215, 7
        %v3217 = vsub.s32 0, %v3216
        %v3218 = vrot.slane %v3213, %v3217
        %3220 = vmatprep.subr.mxu0 0.0
        %3221 = vmatpush1.msra.mxu0 %v3197
        %3222 = vmatprep.subr.mxu0 0.0
        %3223 = vmatpush1.msra.mxu0 %v3198
        %3224 = vmatprep.subr.mxu0 0.0
        %3225 = vmatpush1.msra.mxu0 %v3199
        %3226 = vmatprep.subr.mxu0 0.0
        %3227 = vmatpush1.msra.mxu0 %v3200
        %3228 = vmatprep.subr.mxu0 0.0
        %3229 = vmatpush1.msra.mxu0 %v3201
        %3230 = vmatprep.subr.mxu0 0.0
        %3231 = vmatpush1.msra.mxu0 %v3202
        %3232 = vmatprep.subr.mxu0 0.0
        %3233 = vmatpush1.msra.mxu0 %v3203
        %3234 = vmatprep.subr.mxu0 0.0
        %3235 = vmatpush1.msra.mxu0 %v3204
        %3236 = vmatprep.subr.mxu0 0.0
        %3237 = vmatpush1.msra.mxu0 %v3205
        %3238 = vmatprep.subr.mxu0 0.0
        %3239 = vmatpush1.msra.mxu0 %v3206
        %3240 = vmatprep.subr.mxu0 0.0
        %3241 = vmatpush1.msra.mxu0 %v3207
        %3242 = vmatprep.subr.mxu0 0.0
        %3243 = vmatpush1.msra.mxu0 %v3208
        %3244 = vmatprep.subr.mxu0 0.0
        %3245 = vmatpush1.msra.mxu0 %v3209
        %3246 = vmatprep.subr.mxu0 0.0
        %3247 = vmatpush1.msra.mxu0 %v3210
        %3248 = vmatprep.subr.mxu0 0.0
        %3249 = vmatpush1.msra.mxu0 %v3211
        %3250 = vmatprep.subr.mxu0 0.0
        %3251 = vmatpush1.msra.mxu0 %v3212
        %3252 = vmatprep.subr.mxu0 0.0
        %3253 = vmatpush1.msra.mxu0 0.0
        %3254 = vmatprep.subr.mxu0 0.0
        %3255 = vmatpush1.msra.mxu0 0.0
        %3256 = vmatprep.subr.mxu0 0.0
        %3257 = vmatpush1.msra.mxu0 0.0
        %3258 = vmatprep.subr.mxu0 0.0
        %3259 = vmatpush1.msra.mxu0 0.0
        %3260 = vmatprep.subr.mxu0 0.0
        %3261 = vmatpush1.msra.mxu0 0.0
        %3262 = vmatprep.subr.mxu0 0.0
        %3263 = vmatpush1.msra.mxu0 0.0
        %3264 = vmatprep.subr.mxu0 0.0
        %3265 = vmatpush1.msra.mxu0 0.0
        %3266 = vmatprep.subr.mxu0 0.0
        %3267 = vmatpush1.msra.mxu0 0.0
        %3268 = vmatprep.subr.mxu0 0.0
        %3269 = vmatpush1.msra.mxu0 0.0
        %3270 = vmatprep.subr.mxu0 0.0
        %3271 = vmatpush1.msra.mxu0 0.0
        %3272 = vmatprep.subr.mxu0 0.0
        %3273 = vmatpush1.msra.mxu0 0.0
        %3274 = vmatprep.subr.mxu0 0.0
        %3275 = vmatpush1.msra.mxu0 0.0
        %3276 = vmatprep.subr.mxu0 0.0
        %3277 = vmatpush1.msra.mxu0 0.0
        %3278 = vmatprep.subr.mxu0 0.0
        %3279 = vmatpush1.msra.mxu0 0.0
        %3280 = vmatprep.subr.mxu0 0.0
        %3281 = vmatpush1.msra.mxu0 0.0
        %3282 = vmatprep.subr.mxu0 0.0
        %3283 = vmatpush1.msra.mxu0 0.0
        %3284 = vmatprep.mubr.f32.mxu0 0.0
        %3285 = vmatmul.mubr.f32.gmra.mrb[0].mxu0 %v3085
        %v3286 = vpop.f32.mrb[0].mxu0
        %v3287 = vadd.f32 %v3218, %v3286
        %v3288 = vpop.f32.mrb[0].mxu0
        %3289 = vmatprep.mubr.f32.mxu0 0.0
        %3290 = vmatmul.mubr.f32.gmra.mrb[0].mxu0 %v3086
        %v3291 = vpop.f32.mrb[0].mxu0
        %v3292 = vadd.f32 %v3218, %v3291
        %v3293 = vpop.f32.mrb[0].mxu0
        %3294 = vmatprep.mubr.f32.mxu0 0.0
        %3295 = vmatmul.mubr.f32.gmra.mrb[0].mxu0 %v3087
        %v3296 = vpop.f32.mrb[0].mxu0
        %v3297 = vadd.f32 %v3218, %v3296
        %v3298 = vpop.f32.mrb[0].mxu0
        %3299 = vmatprep.mubr.f32.mxu0 0.0
        %3300 = vmatmul.mubr.f32.gmra.mrb[0].mxu0 %v3088
        %v3301 = vpop.f32.mrb[0].mxu0
        %v3302 = vadd.f32 %v3218, %v3301
        %v3303 = vpop.f32.mrb[0].mxu0
        %3304 = vdwg.mxu0
        %3309 = vrot.lane.b32.xlu0 %v3179, 96
        %v3310 = vpop.permute.xlu0 %3309
        %3311 = vrot.lane.b32.xlu0 %v3184, 96
        %v3312 = vpop.permute.xlu0 %3311
        %3313 = vrot.lane.b32.xlu0 %v3189, 96
        %v3314 = vpop.permute.xlu0 %3313
        %3315 = vrot.lane.b32.xlu0 %v3194, 96
        %v3316 = vpop.permute.xlu0 %3315
        %3317 = vrot.lane.b32.xlu0 %v3179, 64
        %v3318 = vpop.permute.xlu0 %3317
        %3319 = vrot.lane.b32.xlu0 %v3184, 64
        %v3320 = vpop.permute.xlu0 %3319
        %3321 = vrot.lane.b32.xlu0 %v3189, 64
        %v3322 = vpop.permute.xlu0 %3321
        %3323 = vrot.lane.b32.xlu0 %v3194, 64
        %v3324 = vpop.permute.xlu0 %3323
        %3325 = vrot.lane.b32.xlu0 %v3179, 32
        %v3326 = vpop.permute.xlu0 %3325
        %3327 = vrot.lane.b32.xlu0 %v3184, 32
        %v3328 = vpop.permute.xlu0 %3327
        %3329 = vrot.lane.b32.xlu0 %v3189, 32
        %v3330 = vpop.permute.xlu0 %3329
        %3331 = vrot.lane.b32.xlu0 %v3194, 32
        %v3332 = vpop.permute.xlu0 %3331
        %3337 = vrot.lane.b32.xlu0 %v3287, 96
        %v3338 = vpop.permute.xlu0 %3337
        %3339 = vrot.lane.b32.xlu0 %v3292, 96
        %v3340 = vpop.permute.xlu0 %3339
        %3341 = vrot.lane.b32.xlu0 %v3297, 96
        %v3342 = vpop.permute.xlu0 %3341
        %3343 = vrot.lane.b32.xlu0 %v3302, 96
        %v3344 = vpop.permute.xlu0 %3343
        %3349 = vrot.lane.b32.xlu0 %v3287, 64
        %v3350 = vpop.permute.xlu0 %3349
        %3351 = vrot.lane.b32.xlu0 %v3292, 64
        %v3352 = vpop.permute.xlu0 %3351
        %3353 = vrot.lane.b32.xlu0 %v3297, 64
        %v3354 = vpop.permute.xlu0 %3353
        %3355 = vrot.lane.b32.xlu0 %v3302, 64
        %v3356 = vpop.permute.xlu0 %3355
        %3361 = vrot.lane.b32.xlu0 %v3287, 32
        %v3362 = vpop.permute.xlu0 %3361
        %3363 = vrot.lane.b32.xlu0 %v3292, 32
        %v3364 = vpop.permute.xlu0 %3363
        %3365 = vrot.lane.b32.xlu0 %v3297, 32
        %v3366 = vpop.permute.xlu0 %3365
        %3367 = vrot.lane.b32.xlu0 %v3302, 32
        %v3368 = vpop.permute.xlu0 %3367
        %v3373 = vsel %vm1073, %v1022, 0
        %v3375 = vsel %vm1073, %v1027, 0
        %v3377 = vsel %vm1073, %v1032, 0
        %v3379 = vsel %vm1073, %v1037, 0
        %v3381 = vsel %vm1073, %v3179, 0
        %v3383 = vsel %vm1073, %v3184, 0
        %3385 = vmatprep.subr.mxu0 0.0
        %3386 = vmatpush1.xpose.msra.mxu0 %v3381
        %3387 = vmatprep.subr.mxu0 0.0
        %3388 = vmatpush1.xpose.msra.mxu0 %v3383
        %3389 = vmatprep.subr.mxu0 0.0
        %3390 = vmatpush1.xpose.msra.mxu0 0.0
        %3391 = vmatprep.subr.mxu0 0.0
        %3392 = vmatpush1.xpose.msra.mxu0 0.0
        %3393 = vmatprep.subr.mxu0 0.0
        %3394 = vmatpush1.xpose.msra.mxu0 0.0
        %3395 = vmatprep.subr.mxu0 0.0
        %3396 = vmatpush1.xpose.msra.mxu0 0.0
        %3397 = vmatprep.subr.mxu0 0.0
        %3398 = vmatpush1.xpose.msra.mxu0 0.0
        %3399 = vmatprep.subr.mxu0 0.0
        %3400 = vmatpush1.xpose.msra.mxu0 0.0
        %3401 = vmatprep.subr.mxu0 0.0
        %3402 = vmatpush1.xpose.msra.mxu0 0.0
        %3403 = vmatprep.subr.mxu0 0.0
        %3404 = vmatpush1.xpose.msra.mxu0 0.0
        %3405 = vmatprep.subr.mxu0 0.0
        %3406 = vmatpush1.xpose.msra.mxu0 0.0
        %3407 = vmatprep.subr.mxu0 0.0
        %3408 = vmatpush1.xpose.msra.mxu0 0.0
        %3409 = vmatprep.subr.mxu0 0.0
        %3410 = vmatpush1.xpose.msra.mxu0 0.0
        %3411 = vmatprep.subr.mxu0 0.0
        %3412 = vmatpush1.xpose.msra.mxu0 0.0
        %3413 = vmatprep.subr.mxu0 0.0
        %3414 = vmatpush1.xpose.msra.mxu0 0.0
        %3415 = vmatprep.subr.mxu0 0.0
        %3416 = vmatpush1.xpose.msra.mxu0 0.0
        %3417 = vmatprep.subr.mxu0 0.0
        %3418 = vmatpush1.xpose.msra.mxu0 0.0
        %3419 = vmatprep.subr.mxu0 0.0
        %3420 = vmatpush1.xpose.msra.mxu0 0.0
        %3421 = vmatprep.subr.mxu0 0.0
        %3422 = vmatpush1.xpose.msra.mxu0 0.0
        %3423 = vmatprep.subr.mxu0 0.0
        %3424 = vmatpush1.xpose.msra.mxu0 0.0
        %3425 = vmatprep.subr.mxu0 0.0
        %3426 = vmatpush1.xpose.msra.mxu0 0.0
        %3427 = vmatprep.subr.mxu0 0.0
        %3428 = vmatpush1.xpose.msra.mxu0 0.0
        %3429 = vmatprep.subr.mxu0 0.0
        %3430 = vmatpush1.xpose.msra.mxu0 0.0
        %3431 = vmatprep.subr.mxu0 0.0
        %3432 = vmatpush1.xpose.msra.mxu0 0.0
        %3433 = vmatprep.subr.mxu0 0.0
        %3434 = vmatpush1.xpose.msra.mxu0 0.0
        %3435 = vmatprep.subr.mxu0 0.0
        %3436 = vmatpush1.xpose.msra.mxu0 0.0
        %3437 = vmatprep.subr.mxu0 0.0
        %3438 = vmatpush1.xpose.msra.mxu0 0.0
        %3439 = vmatprep.subr.mxu0 0.0
        %3440 = vmatpush1.xpose.msra.mxu0 0.0
        %3441 = vmatprep.subr.mxu0 0.0
        %3442 = vmatpush1.xpose.msra.mxu0 0.0
        %3443 = vmatprep.subr.mxu0 0.0
        %3444 = vmatpush1.xpose.msra.mxu0 0.0
        %3445 = vmatprep.subr.mxu0 0.0
        %3446 = vmatpush1.xpose.msra.mxu0 0.0
        %3447 = vmatprep.subr.mxu0 0.0
        %3448 = vmatpush1.xpose.msra.mxu0 0.0
        %3449 = vmatprep.mubr.f32.mxu0 0.0
        %3450 = vmatmul.mubr.f32.gmra.mrb[0].mxu0 %v3373
        %v3451 = vpop.f32.mrb[0].mxu0
        %v3452 = vadd.f32 0.0, %v3451
        %v3453 = vpop.f32.mrb[0].mxu0
        %3454 = vmatprep.mubr.f32.mxu0 0.0
        %3455 = vmatmul.mubr.f32.gmra.mrb[0].mxu0 %v3375
        %v3456 = vpop.f32.mrb[0].mxu0
        %v3457 = vadd.f32 0.0, %v3456
        %v3458 = vpop.f32.mrb[0].mxu0
        %3459 = vmatprep.mubr.f32.mxu0 0.0
        %3460 = vmatmul.mubr.f32.gmra.mrb[0].mxu0 %v3377
        %v3461 = vpop.f32.mrb[0].mxu0
        %v3462 = vadd.f32 0.0, %v3461
        %v3463 = vpop.f32.mrb[0].mxu0
        %3464 = vmatprep.mubr.f32.mxu0 0.0
        %3465 = vmatmul.mubr.f32.gmra.mrb[0].mxu0 %v3379
        %v3466 = vpop.f32.mrb[0].mxu0
        %v3467 = vadd.f32 0.0, %v3466
        %v3468 = vpop.f32.mrb[0].mxu0
        %3469 = vdwg.mxu0
        %v3470 = vsel %vm1073, %v1300, 0
        %v3472 = vsel %vm1073, %v1302, 0
        %v3474 = vsel %vm1073, %v1304, 0
        %v3476 = vsel %vm1073, %v1306, 0
        %v3478 = vsel %vm1073, %v3310, 0
        %v3480 = vsel %vm1073, %v3312, 0
        %3482 = vmatprep.subr.mxu0 0.0
        %3483 = vmatpush1.xpose.msra.mxu0 %v3478
        %3484 = vmatprep.subr.mxu0 0.0
        %3485 = vmatpush1.xpose.msra.mxu0 %v3480
        %3486 = vmatprep.subr.mxu0 0.0
        %3487 = vmatpush1.xpose.msra.mxu0 0.0
        %3488 = vmatprep.subr.mxu0 0.0
        %3489 = vmatpush1.xpose.msra.mxu0 0.0
        %3490 = vmatprep.subr.mxu0 0.0
        %3491 = vmatpush1.xpose.msra.mxu0 0.0
        %3492 = vmatprep.subr.mxu0 0.0
        %3493 = vmatpush1.xpose.msra.mxu0 0.0
        %3494 = vmatprep.subr.mxu0 0.0
        %3495 = vmatpush1.xpose.msra.mxu0 0.0
        %3496 = vmatprep.subr.mxu0 0.0
        %3497 = vmatpush1.xpose.msra.mxu0 0.0
        %3498 = vmatprep.subr.mxu0 0.0
        %3499 = vmatpush1.xpose.msra.mxu0 0.0
        %3500 = vmatprep.subr.mxu0 0.0
        %3501 = vmatpush1.xpose.msra.mxu0 0.0
        %3502 = vmatprep.subr.mxu0 0.0
        %3503 = vmatpush1.xpose.msra.mxu0 0.0
        %3504 = vmatprep.subr.mxu0 0.0
        %3505 = vmatpush1.xpose.msra.mxu0 0.0
        %3506 = vmatprep.subr.mxu0 0.0
        %3507 = vmatpush1.xpose.msra.mxu0 0.0
        %3508 = vmatprep.subr.mxu0 0.0
        %3509 = vmatpush1.xpose.msra.mxu0 0.0
        %3510 = vmatprep.subr.mxu0 0.0
        %3511 = vmatpush1.xpose.msra.mxu0 0.0
        %3512 = vmatprep.subr.mxu0 0.0
        %3513 = vmatpush1.xpose.msra.mxu0 0.0
        %3514 = vmatprep.subr.mxu0 0.0
        %3515 = vmatpush1.xpose.msra.mxu0 0.0
        %3516 = vmatprep.subr.mxu0 0.0
        %3517 = vmatpush1.xpose.msra.mxu0 0.0
        %3518 = vmatprep.subr.mxu0 0.0
        %3519 = vmatpush1.xpose.msra.mxu0 0.0
        %3520 = vmatprep.subr.mxu0 0.0
        %3521 = vmatpush1.xpose.msra.mxu0 0.0
        %3522 = vmatprep.subr.mxu0 0.0
        %3523 = vmatpush1.xpose.msra.mxu0 0.0
        %3524 = vmatprep.subr.mxu0 0.0
        %3525 = vmatpush1.xpose.msra.mxu0 0.0
        %3526 = vmatprep.subr.mxu0 0.0
        %3527 = vmatpush1.xpose.msra.mxu0 0.0
        %3528 = vmatprep.subr.mxu0 0.0
        %3529 = vmatpush1.xpose.msra.mxu0 0.0
        %3530 = vmatprep.subr.mxu0 0.0
        %3531 = vmatpush1.xpose.msra.mxu0 0.0
        %3532 = vmatprep.subr.mxu0 0.0
        %3533 = vmatpush1.xpose.msra.mxu0 0.0
        %3534 = vmatprep.subr.mxu0 0.0
        %3535 = vmatpush1.xpose.msra.mxu0 0.0
        %3536 = vmatprep.subr.mxu0 0.0
        %3537 = vmatpush1.xpose.msra.mxu0 0.0
        %3538 = vmatprep.subr.mxu0 0.0
        %3539 = vmatpush1.xpose.msra.mxu0 0.0
        %3540 = vmatprep.subr.mxu0 0.0
        %3541 = vmatpush1.xpose.msra.mxu0 0.0
        %3542 = vmatprep.subr.mxu0 0.0
        %3543 = vmatpush1.xpose.msra.mxu0 0.0
        %3544 = vmatprep.subr.mxu0 0.0
        %3545 = vmatpush1.xpose.msra.mxu0 0.0
        %3546 = vmatprep.mubr.f32.mxu0 0.0
        %3547 = vmatmul.mubr.f32.gmra.mrb[0].mxu0 %v3470
        %v3548 = vpop.f32.mrb[0].mxu0
        %v3549 = vadd.f32 0.0, %v3548
        %v3550 = vpop.f32.mrb[0].mxu0
        %3551 = vmatprep.mubr.f32.mxu0 0.0
        %3552 = vmatmul.mubr.f32.gmra.mrb[0].mxu0 %v3472
        %v3553 = vpop.f32.mrb[0].mxu0
        %v3554 = vadd.f32 0.0, %v3553
        %v3555 = vpop.f32.mrb[0].mxu0
        %3556 = vmatprep.mubr.f32.mxu0 0.0
        %3557 = vmatmul.mubr.f32.gmra.mrb[0].mxu0 %v3474
        %v3558 = vpop.f32.mrb[0].mxu0
        %v3559 = vadd.f32 0.0, %v3558
        %v3560 = vpop.f32.mrb[0].mxu0
        %3561 = vmatprep.mubr.f32.mxu0 0.0
        %3562 = vmatmul.mubr.f32.gmra.mrb[0].mxu0 %v3476
        %v3563 = vpop.f32.mrb[0].mxu0
        %v3564 = vadd.f32 0.0, %v3563
        %v3565 = vpop.f32.mrb[0].mxu0
        %3566 = vdwg.mxu0
        %v3567 = vsel %vm1073, %v1324, 0
        %v3569 = vsel %vm1073, %v1326, 0
        %v3571 = vsel %vm1073, %v1328, 0
        %v3573 = vsel %vm1073, %v1330, 0
        %v3575 = vsel %vm1073, %v3318, 0
        %v3577 = vsel %vm1073, %v3320, 0
        %3579 = vmatprep.subr.mxu0 0.0
        %3580 = vmatpush1.xpose.msra.mxu0 %v3575
        %3581 = vmatprep.subr.mxu0 0.0
        %3582 = vmatpush1.xpose.msra.mxu0 %v3577
        %3583 = vmatprep.subr.mxu0 0.0
        %3584 = vmatpush1.xpose.msra.mxu0 0.0
        %3585 = vmatprep.subr.mxu0 0.0
        %3586 = vmatpush1.xpose.msra.mxu0 0.0
        %3587 = vmatprep.subr.mxu0 0.0
        %3588 = vmatpush1.xpose.msra.mxu0 0.0
        %3589 = vmatprep.subr.mxu0 0.0
        %3590 = vmatpush1.xpose.msra.mxu0 0.0
        %3591 = vmatprep.subr.mxu0 0.0
        %3592 = vmatpush1.xpose.msra.mxu0 0.0
        %3593 = vmatprep.subr.mxu0 0.0
        %3594 = vmatpush1.xpose.msra.mxu0 0.0
        %3595 = vmatprep.subr.mxu0 0.0
        %3596 = vmatpush1.xpose.msra.mxu0 0.0
        %3597 = vmatprep.subr.mxu0 0.0
        %3598 = vmatpush1.xpose.msra.mxu0 0.0
        %3599 = vmatprep.subr.mxu0 0.0
        %3600 = vmatpush1.xpose.msra.mxu0 0.0
        %3601 = vmatprep.subr.mxu0 0.0
        %3602 = vmatpush1.xpose.msra.mxu0 0.0
        %3603 = vmatprep.subr.mxu0 0.0
        %3604 = vmatpush1.xpose.msra.mxu0 0.0
        %3605 = vmatprep.subr.mxu0 0.0
        %3606 = vmatpush1.xpose.msra.mxu0 0.0
        %3607 = vmatprep.subr.mxu0 0.0
        %3608 = vmatpush1.xpose.msra.mxu0 0.0
        %3609 = vmatprep.subr.mxu0 0.0
        %3610 = vmatpush1.xpose.msra.mxu0 0.0
        %3611 = vmatprep.subr.mxu0 0.0
        %3612 = vmatpush1.xpose.msra.mxu0 0.0
        %3613 = vmatprep.subr.mxu0 0.0
        %3614 = vmatpush1.xpose.msra.mxu0 0.0
        %3615 = vmatprep.subr.mxu0 0.0
        %3616 = vmatpush1.xpose.msra.mxu0 0.0
        %3617 = vmatprep.subr.mxu0 0.0
        %3618 = vmatpush1.xpose.msra.mxu0 0.0
        %3619 = vmatprep.subr.mxu0 0.0
        %3620 = vmatpush1.xpose.msra.mxu0 0.0
        %3621 = vmatprep.subr.mxu0 0.0
        %3622 = vmatpush1.xpose.msra.mxu0 0.0
        %3623 = vmatprep.subr.mxu0 0.0
        %3624 = vmatpush1.xpose.msra.mxu0 0.0
        %3625 = vmatprep.subr.mxu0 0.0
        %3626 = vmatpush1.xpose.msra.mxu0 0.0
        %3627 = vmatprep.subr.mxu0 0.0
        %3628 = vmatpush1.xpose.msra.mxu0 0.0
        %3629 = vmatprep.subr.mxu0 0.0
        %3630 = vmatpush1.xpose.msra.mxu0 0.0
        %3631 = vmatprep.subr.mxu0 0.0
        %3632 = vmatpush1.xpose.msra.mxu0 0.0
        %3633 = vmatprep.subr.mxu0 0.0
        %3634 = vmatpush1.xpose.msra.mxu0 0.0
        %3635 = vmatprep.subr.mxu0 0.0
        %3636 = vmatpush1.xpose.msra.mxu0 0.0
        %3637 = vmatprep.subr.mxu0 0.0
        %3638 = vmatpush1.xpose.msra.mxu0 0.0
        %3639 = vmatprep.subr.mxu0 0.0
        %3640 = vmatpush1.xpose.msra.mxu0 0.0
        %3641 = vmatprep.subr.mxu0 0.0
        %3642 = vmatpush1.xpose.msra.mxu0 0.0
        %3643 = vmatprep.mubr.f32.mxu0 0.0
        %3644 = vmatmul.mubr.f32.gmra.mrb[0].mxu0 %v3567
        %v3645 = vpop.f32.mrb[0].mxu0
        %v3646 = vadd.f32 0.0, %v3645
        %v3647 = vpop.f32.mrb[0].mxu0
        %3648 = vmatprep.mubr.f32.mxu0 0.0
        %3649 = vmatmul.mubr.f32.gmra.mrb[0].mxu0 %v3569
        %v3650 = vpop.f32.mrb[0].mxu0
        %v3651 = vadd.f32 0.0, %v3650
        %v3652 = vpop.f32.mrb[0].mxu0
        %3653 = vmatprep.mubr.f32.mxu0 0.0
        %3654 = vmatmul.mubr.f32.gmra.mrb[0].mxu0 %v3571
        %v3655 = vpop.f32.mrb[0].mxu0
        %v3656 = vadd.f32 0.0, %v3655
        %v3657 = vpop.f32.mrb[0].mxu0
        %3658 = vmatprep.mubr.f32.mxu0 0.0
        %3659 = vmatmul.mubr.f32.gmra.mrb[0].mxu0 %v3573
        %v3660 = vpop.f32.mrb[0].mxu0
        %v3661 = vadd.f32 0.0, %v3660
        %v3662 = vpop.f32.mrb[0].mxu0
        %3663 = vdwg.mxu0
        %v3664 = vsel %vm1073, %v1348, 0
        %v3666 = vsel %vm1073, %v1350, 0
        %v3668 = vsel %vm1073, %v1352, 0
        %v3670 = vsel %vm1073, %v1354, 0
        %v3672 = vsel %vm1073, %v3326, 0
        %v3674 = vsel %vm1073, %v3328, 0
        %3676 = vmatprep.subr.mxu0 0.0
        %3677 = vmatpush1.xpose.msra.mxu0 %v3672
        %3678 = vmatprep.subr.mxu0 0.0
        %3679 = vmatpush1.xpose.msra.mxu0 %v3674
        %3680 = vmatprep.subr.mxu0 0.0
        %3681 = vmatpush1.xpose.msra.mxu0 0.0
        %3682 = vmatprep.subr.mxu0 0.0
        %3683 = vmatpush1.xpose.msra.mxu0 0.0
        %3684 = vmatprep.subr.mxu0 0.0
        %3685 = vmatpush1.xpose.msra.mxu0 0.0
        %3686 = vmatprep.subr.mxu0 0.0
        %3687 = vmatpush1.xpose.msra.mxu0 0.0
        %3688 = vmatprep.subr.mxu0 0.0
        %3689 = vmatpush1.xpose.msra.mxu0 0.0
        %3690 = vmatprep.subr.mxu0 0.0
        %3691 = vmatpush1.xpose.msra.mxu0 0.0
        %3692 = vmatprep.subr.mxu0 0.0
        %3693 = vmatpush1.xpose.msra.mxu0 0.0
        %3694 = vmatprep.subr.mxu0 0.0
        %3695 = vmatpush1.xpose.msra.mxu0 0.0
        %3696 = vmatprep.subr.mxu0 0.0
        %3697 = vmatpush1.xpose.msra.mxu0 0.0
        %3698 = vmatprep.subr.mxu0 0.0
        %3699 = vmatpush1.xpose.msra.mxu0 0.0
        %3700 = vmatprep.subr.mxu0 0.0
        %3701 = vmatpush1.xpose.msra.mxu0 0.0
        %3702 = vmatprep.subr.mxu0 0.0
        %3703 = vmatpush1.xpose.msra.mxu0 0.0
        %3704 = vmatprep.subr.mxu0 0.0
        %3705 = vmatpush1.xpose.msra.mxu0 0.0
        %3706 = vmatprep.subr.mxu0 0.0
        %3707 = vmatpush1.xpose.msra.mxu0 0.0
        %3708 = vmatprep.subr.mxu0 0.0
        %3709 = vmatpush1.xpose.msra.mxu0 0.0
        %3710 = vmatprep.subr.mxu0 0.0
        %3711 = vmatpush1.xpose.msra.mxu0 0.0
        %3712 = vmatprep.subr.mxu0 0.0
        %3713 = vmatpush1.xpose.msra.mxu0 0.0
        %3714 = vmatprep.subr.mxu0 0.0
        %3715 = vmatpush1.xpose.msra.mxu0 0.0
        %3716 = vmatprep.subr.mxu0 0.0
        %3717 = vmatpush1.xpose.msra.mxu0 0.0
        %3718 = vmatprep.subr.mxu0 0.0
        %3719 = vmatpush1.xpose.msra.mxu0 0.0
        %3720 = vmatprep.subr.mxu0 0.0
        %3721 = vmatpush1.xpose.msra.mxu0 0.0
        %3722 = vmatprep.subr.mxu0 0.0
        %3723 = vmatpush1.xpose.msra.mxu0 0.0
        %3724 = vmatprep.subr.mxu0 0.0
        %3725 = vmatpush1.xpose.msra.mxu0 0.0
        %3726 = vmatprep.subr.mxu0 0.0
        %3727 = vmatpush1.xpose.msra.mxu0 0.0
        %3728 = vmatprep.subr.mxu0 0.0
        %3729 = vmatpush1.xpose.msra.mxu0 0.0
        %3730 = vmatprep.subr.mxu0 0.0
        %3731 = vmatpush1.xpose.msra.mxu0 0.0
        %3732 = vmatprep.subr.mxu0 0.0
        %3733 = vmatpush1.xpose.msra.mxu0 0.0
        %3734 = vmatprep.subr.mxu0 0.0
        %3735 = vmatpush1.xpose.msra.mxu0 0.0
        %3736 = vmatprep.subr.mxu0 0.0
        %3737 = vmatpush1.xpose.msra.mxu0 0.0
        %3738 = vmatprep.subr.mxu0 0.0
        %3739 = vmatpush1.xpose.msra.mxu0 0.0
        %3740 = vmatprep.mubr.f32.mxu0 0.0
        %3741 = vmatmul.mubr.f32.gmra.mrb[0].mxu0 %v3664
        %v3742 = vpop.f32.mrb[0].mxu0
        %v3743 = vadd.f32 0.0, %v3742
        %v3744 = vpop.f32.mrb[0].mxu0
        %3745 = vmatprep.mubr.f32.mxu0 0.0
        %3746 = vmatmul.mubr.f32.gmra.mrb[0].mxu0 %v3666
        %v3747 = vpop.f32.mrb[0].mxu0
        %v3748 = vadd.f32 0.0, %v3747
        %v3749 = vpop.f32.mrb[0].mxu0
        %3750 = vmatprep.mubr.f32.mxu0 0.0
        %3751 = vmatmul.mubr.f32.gmra.mrb[0].mxu0 %v3668
        %v3752 = vpop.f32.mrb[0].mxu0
        %v3753 = vadd.f32 0.0, %v3752
        %v3754 = vpop.f32.mrb[0].mxu0
        %3755 = vmatprep.mubr.f32.mxu0 0.0
        %3756 = vmatmul.mubr.f32.gmra.mrb[0].mxu0 %v3670
        %v3757 = vpop.f32.mrb[0].mxu0
        %v3758 = vadd.f32 0.0, %v3757
        %v3759 = vpop.f32.mrb[0].mxu0
        %3760 = vdwg.mxu0
        %vm3761 = vcmask 130048
        %v3762 = vsel %vm3761, %v3452, -inf
        %3763 = vmax.xlane.f32.xlu0 %v3762
        %v3764 = vpop.xlane.xlu0 %3763
        %v3765 = vsel %vm3761, %v3457, -inf
        %3766 = vmax.xlane.f32.xlu0 %v3765
        %v3767 = vpop.xlane.xlu0 %3766
        %v3768 = vsel %vm3761, %v3462, -inf
        %3769 = vmax.xlane.f32.xlu0 %v3768
        %v3770 = vpop.xlane.xlu0 %3769
        %v3771 = vsel %vm3761, %v3467, -inf
        %3772 = vmax.xlane.f32.xlu0 %v3771
        %v3773 = vpop.xlane.xlu0 %3772
        %v3774 = vsel %vm3761, %v3549, -inf
        %3775 = vmax.xlane.f32.xlu0 %v3774
        %v3776 = vpop.xlane.xlu0 %3775
        %v3777 = vsel %vm3761, %v3554, -inf
        %3778 = vmax.xlane.f32.xlu0 %v3777
        %v3779 = vpop.xlane.xlu0 %3778
        %v3780 = vsel %vm3761, %v3559, -inf
        %3781 = vmax.xlane.f32.xlu0 %v3780
        %v3782 = vpop.xlane.xlu0 %3781
        %v3783 = vsel %vm3761, %v3564, -inf
        %3784 = vmax.xlane.f32.xlu0 %v3783
        %v3785 = vpop.xlane.xlu0 %3784
        %v3786 = vsel %vm3761, %v3646, -inf
        %3787 = vmax.xlane.f32.xlu0 %v3786
        %v3788 = vpop.xlane.xlu0 %3787
        %v3789 = vsel %vm3761, %v3651, -inf
        %3790 = vmax.xlane.f32.xlu0 %v3789
        %v3791 = vpop.xlane.xlu0 %3790
        %v3792 = vsel %vm3761, %v3656, -inf
        %3793 = vmax.xlane.f32.xlu0 %v3792
        %v3794 = vpop.xlane.xlu0 %3793
        %v3795 = vsel %vm3761, %v3661, -inf
        %3796 = vmax.xlane.f32.xlu0 %v3795
        %v3797 = vpop.xlane.xlu0 %3796
        %v3798 = vsel %vm3761, %v3743, -inf
        %3799 = vmax.xlane.f32.xlu0 %v3798
        %v3800 = vpop.xlane.xlu0 %3799
        %v3801 = vsel %vm3761, %v3748, -inf
        %3802 = vmax.xlane.f32.xlu0 %v3801
        %v3803 = vpop.xlane.xlu0 %3802
        %v3804 = vsel %vm3761, %v3753, -inf
        %3805 = vmax.xlane.f32.xlu0 %v3804
        %v3806 = vpop.xlane.xlu0 %3805
        %v3807 = vsel %vm3761, %v3758, -inf
        %3808 = vmax.xlane.f32.xlu0 %v3807
        %v3809 = vpop.xlane.xlu0 %3808
        %v3810 = vsub.f32 %v3452, %v3764
        %v3811 = vsub.f32 %v3457, %v3767
        %v3812 = vsub.f32 %v3462, %v3770
        %v3813 = vsub.f32 %v3467, %v3773
        %v3814 = vsub.f32 %v3549, %v3776
        %v3815 = vsub.f32 %v3554, %v3779
        %v3816 = vsub.f32 %v3559, %v3782
        %v3817 = vsub.f32 %v3564, %v3785
        %v3818 = vsub.f32 %v3646, %v3788
        %v3819 = vsub.f32 %v3651, %v3791
        %v3820 = vsub.f32 %v3656, %v3794
        %v3821 = vsub.f32 %v3661, %v3797
        %v3822 = vsub.f32 %v3743, %v3800
        %v3823 = vsub.f32 %v3748, %v3803
        %v3824 = vsub.f32 %v3753, %v3806
        %v3825 = vsub.f32 %v3758, %v3809
        %v3826 = vmul.f32 %v3810, 1.442695
        %v3827 = vpow.pop %v3826
        %v3828 = vmul.f32 %v3811, 1.442695
        %v3829 = vpow.pop %v3828
        %v3830 = vmul.f32 %v3812, 1.442695
        %v3831 = vpow.pop %v3830
        %v3832 = vmul.f32 %v3813, 1.442695
        %v3833 = vpow.pop %v3832
        %v3834 = vmul.f32 %v3814, 1.442695
        %v3835 = vpow.pop %v3834
        %v3836 = vmul.f32 %v3815, 1.442695
        %v3837 = vpow.pop %v3836
        %v3838 = vmul.f32 %v3816, 1.442695
        %v3839 = vpow.pop %v3838
        %v3840 = vmul.f32 %v3817, 1.442695
        %v3841 = vpow.pop %v3840
        %v3842 = vmul.f32 %v3818, 1.442695
        %v3843 = vpow.pop %v3842
        %v3844 = vmul.f32 %v3819, 1.442695
        %v3845 = vpow.pop %v3844
        %v3846 = vmul.f32 %v3820, 1.442695
        %v3847 = vpow.pop %v3846
        %v3848 = vmul.f32 %v3821, 1.442695
        %v3849 = vpow.pop %v3848
        %v3850 = vmul.f32 %v3822, 1.442695
        %v3851 = vpow.pop %v3850
        %v3852 = vmul.f32 %v3823, 1.442695
        %v3853 = vpow.pop %v3852
        %v3854 = vmul.f32 %v3824, 1.442695
        %v3855 = vpow.pop %v3854
        %v3856 = vmul.f32 %v3825, 1.442695
        %v3857 = vpow.pop %v3856
        %v3858 = vsel %vm3761, %v3827, 0.0
        %3859 = vadd.xlane.f32.xlu0 %v3858
        %v3860 = vpop.xlane.xlu0 %3859
        %v3861 = vsel %vm3761, %v3829, 0.0
        %3862 = vadd.xlane.f32.xlu0 %v3861
        %v3863 = vpop.xlane.xlu0 %3862
        %v3864 = vsel %vm3761, %v3831, 0.0
        %3865 = vadd.xlane.f32.xlu0 %v3864
        %v3866 = vpop.xlane.xlu0 %3865
        %v3867 = vsel %vm3761, %v3833, 0.0
        %3868 = vadd.xlane.f32.xlu0 %v3867
        %v3869 = vpop.xlane.xlu0 %3868
        %v3870 = vsel %vm3761, %v3835, 0.0
        %3871 = vadd.xlane.f32.xlu0 %v3870
        %v3872 = vpop.xlane.xlu0 %3871
        %v3873 = vsel %vm3761, %v3837, 0.0
        %3874 = vadd.xlane.f32.xlu0 %v3873
        %v3875 = vpop.xlane.xlu0 %3874
        %v3876 = vsel %vm3761, %v3839, 0.0
        %3877 = vadd.xlane.f32.xlu0 %v3876
        %v3878 = vpop.xlane.xlu0 %3877
        %v3879 = vsel %vm3761, %v3841, 0.0
        %3880 = vadd.xlane.f32.xlu0 %v3879
        %v3881 = vpop.xlane.xlu0 %3880
        %v3882 = vsel %vm3761, %v3843, 0.0
        %3883 = vadd.xlane.f32.xlu0 %v3882
        %v3884 = vpop.xlane.xlu0 %3883
        %v3885 = vsel %vm3761, %v3845, 0.0
        %3886 = vadd.xlane.f32.xlu0 %v3885
        %v3887 = vpop.xlane.xlu0 %3886
        %v3888 = vsel %vm3761, %v3847, 0.0
        %3889 = vadd.xlane.f32.xlu0 %v3888
        %v3890 = vpop.xlane.xlu0 %3889
        %v3891 = vsel %vm3761, %v3849, 0.0
        %3892 = vadd.xlane.f32.xlu0 %v3891
        %v3893 = vpop.xlane.xlu0 %3892
        %v3894 = vsel %vm3761, %v3851, 0.0
        %3895 = vadd.xlane.f32.xlu0 %v3894
        %v3896 = vpop.xlane.xlu0 %3895
        %v3897 = vsel %vm3761, %v3853, 0.0
        %3898 = vadd.xlane.f32.xlu0 %v3897
        %v3899 = vpop.xlane.xlu0 %3898
        %v3900 = vsel %vm3761, %v3855, 0.0
        %3901 = vadd.xlane.f32.xlu0 %v3900
        %v3902 = vpop.xlane.xlu0 %3901
        %v3903 = vsel %vm3761, %v3857, 0.0
        %3904 = vadd.xlane.f32.xlu0 %v3903
        %v3905 = vpop.xlane.xlu0 %3904
        %v3906 = vrcp.pop %v3860
        %v3907 = vrcp.pop %v3863
        %v3908 = vrcp.pop %v3866
        %v3909 = vrcp.pop %v3869
        %v3910 = vrcp.pop %v3872
        %v3911 = vrcp.pop %v3875
        %v3912 = vrcp.pop %v3878
        %v3913 = vrcp.pop %v3881
        %v3914 = vrcp.pop %v3884
        %v3915 = vrcp.pop %v3887
        %v3916 = vrcp.pop %v3890
        %v3917 = vrcp.pop %v3893
        %v3918 = vrcp.pop %v3896
        %v3919 = vrcp.pop %v3899
        %v3920 = vrcp.pop %v3902
        %v3921 = vrcp.pop %v3905
        %v3922 = vmul.f32 %v3827, %v3906
        %v3923 = vmul.f32 %v3829, %v3907
        %v3924 = vmul.f32 %v3831, %v3908
        %v3925 = vmul.f32 %v3833, %v3909
        %v3926 = vmul.f32 %v3835, %v3910
        %v3927 = vmul.f32 %v3837, %v3911
        %v3928 = vmul.f32 %v3839, %v3912
        %v3929 = vmul.f32 %v3841, %v3913
        %v3930 = vmul.f32 %v3843, %v3914
        %v3931 = vmul.f32 %v3845, %v3915
        %v3932 = vmul.f32 %v3847, %v3916
        %v3933 = vmul.f32 %v3849, %v3917
        %v3934 = vmul.f32 %v3851, %v3918
        %v3935 = vmul.f32 %v3853, %v3919
        %v3936 = vmul.f32 %v3855, %v3920
        %v3937 = vmul.f32 %v3857, %v3921
        %v3939 = vsel %vm3761, %v3922, 0
        %v3942 = vsel %vm3761, %v3923, 0
        %v3945 = vsel %vm3761, %v3924, 0
        %v3948 = vsel %vm3761, %v3925, 0
        %3950 = vmatprep.subr.mxu0 0.0
        %3951 = vmatpush1.msra.mxu0 %v3287
        %3952 = vmatprep.subr.mxu0 0.0
        %3953 = vmatpush1.msra.mxu0 %v3292
        %3954 = vmatprep.subr.mxu0 0.0
        %3955 = vmatpush1.msra.mxu0 0.0
        %3956 = vmatprep.subr.mxu0 0.0
        %3957 = vmatpush1.msra.mxu0 0.0
        %3958 = vmatprep.subr.mxu0 0.0
        %3959 = vmatpush1.msra.mxu0 0.0
        %3960 = vmatprep.subr.mxu0 0.0
        %3961 = vmatpush1.msra.mxu0 0.0
        %3962 = vmatprep.subr.mxu0 0.0
        %3963 = vmatpush1.msra.mxu0 0.0
        %3964 = vmatprep.subr.mxu0 0.0
        %3965 = vmatpush1.msra.mxu0 0.0
        %3966 = vmatprep.subr.mxu0 0.0
        %3967 = vmatpush1.msra.mxu0 0.0
        %3968 = vmatprep.subr.mxu0 0.0
        %3969 = vmatpush1.msra.mxu0 0.0
        %3970 = vmatprep.subr.mxu0 0.0
        %3971 = vmatpush1.msra.mxu0 0.0
        %3972 = vmatprep.subr.mxu0 0.0
        %3973 = vmatpush1.msra.mxu0 0.0
        %3974 = vmatprep.subr.mxu0 0.0
        %3975 = vmatpush1.msra.mxu0 0.0
        %3976 = vmatprep.subr.mxu0 0.0
        %3977 = vmatpush1.msra.mxu0 0.0
        %3978 = vmatprep.subr.mxu0 0.0
        %3979 = vmatpush1.msra.mxu0 0.0
        %3980 = vmatprep.subr.mxu0 0.0
        %3981 = vmatpush1.msra.mxu0 0.0
        %3982 = vmatprep.subr.mxu0 0.0
        %3983 = vmatpush1.msra.mxu0 0.0
        %3984 = vmatprep.subr.mxu0 0.0
        %3985 = vmatpush1.msra.mxu0 0.0
        %3986 = vmatprep.subr.mxu0 0.0
        %3987 = vmatpush1.msra.mxu0 0.0
        %3988 = vmatprep.subr.mxu0 0.0
        %3989 = vmatpush1.msra.mxu0 0.0
        %3990 = vmatprep.subr.mxu0 0.0
        %3991 = vmatpush1.msra.mxu0 0.0
        %3992 = vmatprep.subr.mxu0 0.0
        %3993 = vmatpush1.msra.mxu0 0.0
        %3994 = vmatprep.subr.mxu0 0.0
        %3995 = vmatpush1.msra.mxu0 0.0
        %3996 = vmatprep.subr.mxu0 0.0
        %3997 = vmatpush1.msra.mxu0 0.0
        %3998 = vmatprep.subr.mxu0 0.0
        %3999 = vmatpush1.msra.mxu0 0.0
        %4000 = vmatprep.subr.mxu0 0.0
        %4001 = vmatpush1.msra.mxu0 0.0
        %4002 = vmatprep.subr.mxu0 0.0
        %4003 = vmatpush1.msra.mxu0 0.0
        %4004 = vmatprep.subr.mxu0 0.0
        %4005 = vmatpush1.msra.mxu0 0.0
        %4006 = vmatprep.subr.mxu0 0.0
        %4007 = vmatpush1.msra.mxu0 0.0
        %4008 = vmatprep.subr.mxu0 0.0
        %4009 = vmatpush1.msra.mxu0 0.0
        %4010 = vmatprep.subr.mxu0 0.0
        %4011 = vmatpush1.msra.mxu0 0.0
        %4012 = vmatprep.subr.mxu0 0.0
        %4013 = vmatpush1.msra.mxu0 0.0
        %4014 = vmatprep.mubr.f32.mxu0 0.0
        %4015 = vmatmul.mubr.f32.gmra.mrb[0].mxu0 %v3939
        %v4016 = vpop.f32.mrb[0].mxu0
        %v4017 = vadd.f32 0.0, %v4016
        %v4018 = vpop.f32.mrb[0].mxu0
        %4019 = vmatprep.mubr.f32.mxu0 0.0
        %4020 = vmatmul.mubr.f32.gmra.mrb[0].mxu0 %v3942
        %v4021 = vpop.f32.mrb[0].mxu0
        %v4022 = vadd.f32 0.0, %v4021
        %v4023 = vpop.f32.mrb[0].mxu0
        %4024 = vmatprep.mubr.f32.mxu0 0.0
        %4025 = vmatmul.mubr.f32.gmra.mrb[0].mxu0 %v3945
        %v4026 = vpop.f32.mrb[0].mxu0
        %v4027 = vadd.f32 0.0, %v4026
        %v4028 = vpop.f32.mrb[0].mxu0
        %4029 = vmatprep.mubr.f32.mxu0 0.0
        %4030 = vmatmul.mubr.f32.gmra.mrb[0].mxu0 %v3948
        %v4031 = vpop.f32.mrb[0].mxu0
        %v4032 = vadd.f32 0.0, %v4031
        %v4033 = vpop.f32.mrb[0].mxu0
        %4034 = vdwg.mxu0
        %v4036 = vsel %vm3761, %v3926, 0
        %v4039 = vsel %vm3761, %v3927, 0
        %v4042 = vsel %vm3761, %v3928, 0
        %v4045 = vsel %vm3761, %v3929, 0
        %4047 = vmatprep.subr.mxu0 0.0
        %4048 = vmatpush1.msra.mxu0 %v3338
        %4049 = vmatprep.subr.mxu0 0.0
        %4050 = vmatpush1.msra.mxu0 %v3340
        %4051 = vmatprep.subr.mxu0 0.0
        %4052 = vmatpush1.msra.mxu0 0.0
        %4053 = vmatprep.subr.mxu0 0.0
        %4054 = vmatpush1.msra.mxu0 0.0
        %4055 = vmatprep.subr.mxu0 0.0
        %4056 = vmatpush1.msra.mxu0 0.0
        %4057 = vmatprep.subr.mxu0 0.0
        %4058 = vmatpush1.msra.mxu0 0.0
        %4059 = vmatprep.subr.mxu0 0.0
        %4060 = vmatpush1.msra.mxu0 0.0
        %4061 = vmatprep.subr.mxu0 0.0
        %4062 = vmatpush1.msra.mxu0 0.0
        %4063 = vmatprep.subr.mxu0 0.0
        %4064 = vmatpush1.msra.mxu0 0.0
        %4065 = vmatprep.subr.mxu0 0.0
        %4066 = vmatpush1.msra.mxu0 0.0
        %4067 = vmatprep.subr.mxu0 0.0
        %4068 = vmatpush1.msra.mxu0 0.0
        %4069 = vmatprep.subr.mxu0 0.0
        %4070 = vmatpush1.msra.mxu0 0.0
        %4071 = vmatprep.subr.mxu0 0.0
        %4072 = vmatpush1.msra.mxu0 0.0
        %4073 = vmatprep.subr.mxu0 0.0
        %4074 = vmatpush1.msra.mxu0 0.0
        %4075 = vmatprep.subr.mxu0 0.0
        %4076 = vmatpush1.msra.mxu0 0.0
        %4077 = vmatprep.subr.mxu0 0.0
        %4078 = vmatpush1.msra.mxu0 0.0
        %4079 = vmatprep.subr.mxu0 0.0
        %4080 = vmatpush1.msra.mxu0 0.0
        %4081 = vmatprep.subr.mxu0 0.0
        %4082 = vmatpush1.msra.mxu0 0.0
        %4083 = vmatprep.subr.mxu0 0.0
        %4084 = vmatpush1.msra.mxu0 0.0
        %4085 = vmatprep.subr.mxu0 0.0
        %4086 = vmatpush1.msra.mxu0 0.0
        %4087 = vmatprep.subr.mxu0 0.0
        %4088 = vmatpush1.msra.mxu0 0.0
        %4089 = vmatprep.subr.mxu0 0.0
        %4090 = vmatpush1.msra.mxu0 0.0
        %4091 = vmatprep.subr.mxu0 0.0
        %4092 = vmatpush1.msra.mxu0 0.0
        %4093 = vmatprep.subr.mxu0 0.0
        %4094 = vmatpush1.msra.mxu0 0.0
        %4095 = vmatprep.subr.mxu0 0.0
        %4096 = vmatpush1.msra.mxu0 0.0
        %4097 = vmatprep.subr.mxu0 0.0
        %4098 = vmatpush1.msra.mxu0 0.0
        %4099 = vmatprep.subr.mxu0 0.0
        %4100 = vmatpush1.msra.mxu0 0.0
        %4101 = vmatprep.subr.mxu0 0.0
        %4102 = vmatpush1.msra.mxu0 0.0
        %4103 = vmatprep.subr.mxu0 0.0
        %4104 = vmatpush1.msra.mxu0 0.0
        %4105 = vmatprep.subr.mxu0 0.0
        %4106 = vmatpush1.msra.mxu0 0.0
        %4107 = vmatprep.subr.mxu0 0.0
        %4108 = vmatpush1.msra.mxu0 0.0
        %4109 = vmatprep.subr.mxu0 0.0
        %4110 = vmatpush1.msra.mxu0 0.0
        %4111 = vmatprep.mubr.f32.mxu0 0.0
        %4112 = vmatmul.mubr.f32.gmra.mrb[0].mxu0 %v4036
        %v4113 = vpop.f32.mrb[0].mxu0
        %v4114 = vadd.f32 0.0, %v4113
        %v4115 = vpop.f32.mrb[0].mxu0
        %4116 = vmatprep.mubr.f32.mxu0 0.0
        %4117 = vmatmul.mubr.f32.gmra.mrb[0].mxu0 %v4039
        %v4118 = vpop.f32.mrb[0].mxu0
        %v4119 = vadd.f32 0.0, %v4118
        %v4120 = vpop.f32.mrb[0].mxu0
        %4121 = vmatprep.mubr.f32.mxu0 0.0
        %4122 = vmatmul.mubr.f32.gmra.mrb[0].mxu0 %v4042
        %v4123 = vpop.f32.mrb[0].mxu0
        %v4124 = vadd.f32 0.0, %v4123
        %v4125 = vpop.f32.mrb[0].mxu0
        %4126 = vmatprep.mubr.f32.mxu0 0.0
        %4127 = vmatmul.mubr.f32.gmra.mrb[0].mxu0 %v4045
        %v4128 = vpop.f32.mrb[0].mxu0
        %v4129 = vadd.f32 0.0, %v4128
        %v4130 = vpop.f32.mrb[0].mxu0
        %4131 = vdwg.mxu0
        %v4133 = vsel %vm3761, %v3930, 0
        %v4136 = vsel %vm3761, %v3931, 0
        %v4139 = vsel %vm3761, %v3932, 0
        %v4142 = vsel %vm3761, %v3933, 0
        %4144 = vmatprep.subr.mxu0 0.0
        %4145 = vmatpush1.msra.mxu0 %v3350
        %4146 = vmatprep.subr.mxu0 0.0
        %4147 = vmatpush1.msra.mxu0 %v3352
        %4148 = vmatprep.subr.mxu0 0.0
        %4149 = vmatpush1.msra.mxu0 0.0
        %4150 = vmatprep.subr.mxu0 0.0
        %4151 = vmatpush1.msra.mxu0 0.0
        %4152 = vmatprep.subr.mxu0 0.0
        %4153 = vmatpush1.msra.mxu0 0.0
        %4154 = vmatprep.subr.mxu0 0.0
        %4155 = vmatpush1.msra.mxu0 0.0
        %4156 = vmatprep.subr.mxu0 0.0
        %4157 = vmatpush1.msra.mxu0 0.0
        %4158 = vmatprep.subr.mxu0 0.0
        %4159 = vmatpush1.msra.mxu0 0.0
        %4160 = vmatprep.subr.mxu0 0.0
        %4161 = vmatpush1.msra.mxu0 0.0
        %4162 = vmatprep.subr.mxu0 0.0
        %4163 = vmatpush1.msra.mxu0 0.0
        %4164 = vmatprep.subr.mxu0 0.0
        %4165 = vmatpush1.msra.mxu0 0.0
        %4166 = vmatprep.subr.mxu0 0.0
        %4167 = vmatpush1.msra.mxu0 0.0
        %4168 = vmatprep.subr.mxu0 0.0
        %4169 = vmatpush1.msra.mxu0 0.0
        %4170 = vmatprep.subr.mxu0 0.0
        %4171 = vmatpush1.msra.mxu0 0.0
        %4172 = vmatprep.subr.mxu0 0.0
        %4173 = vmatpush1.msra.mxu0 0.0
        %4174 = vmatprep.subr.mxu0 0.0
        %4175 = vmatpush1.msra.mxu0 0.0
        %4176 = vmatprep.subr.mxu0 0.0
        %4177 = vmatpush1.msra.mxu0 0.0
        %4178 = vmatprep.subr.mxu0 0.0
        %4179 = vmatpush1.msra.mxu0 0.0
        %4180 = vmatprep.subr.mxu0 0.0
        %4181 = vmatpush1.msra.mxu0 0.0
        %4182 = vmatprep.subr.mxu0 0.0
        %4183 = vmatpush1.msra.mxu0 0.0
        %4184 = vmatprep.subr.mxu0 0.0
        %4185 = vmatpush1.msra.mxu0 0.0
        %4186 = vmatprep.subr.mxu0 0.0
        %4187 = vmatpush1.msra.mxu0 0.0
        %4188 = vmatprep.subr.mxu0 0.0
        %4189 = vmatpush1.msra.mxu0 0.0
        %4190 = vmatprep.subr.mxu0 0.0
        %4191 = vmatpush1.msra.mxu0 0.0
        %4192 = vmatprep.subr.mxu0 0.0
        %4193 = vmatpush1.msra.mxu0 0.0
        %4194 = vmatprep.subr.mxu0 0.0
        %4195 = vmatpush1.msra.mxu0 0.0
        %4196 = vmatprep.subr.mxu0 0.0
        %4197 = vmatpush1.msra.mxu0 0.0
        %4198 = vmatprep.subr.mxu0 0.0
        %4199 = vmatpush1.msra.mxu0 0.0
        %4200 = vmatprep.subr.mxu0 0.0
        %4201 = vmatpush1.msra.mxu0 0.0
        %4202 = vmatprep.subr.mxu0 0.0
        %4203 = vmatpush1.msra.mxu0 0.0
        %4204 = vmatprep.subr.mxu0 0.0
        %4205 = vmatpush1.msra.mxu0 0.0
        %4206 = vmatprep.subr.mxu0 0.0
        %4207 = vmatpush1.msra.mxu0 0.0
        %4208 = vmatprep.mubr.f32.mxu0 0.0
        %4209 = vmatmul.mubr.f32.gmra.mrb[0].mxu0 %v4133
        %v4210 = vpop.f32.mrb[0].mxu0
        %v4211 = vadd.f32 0.0, %v4210
        %v4212 = vpop.f32.mrb[0].mxu0
        %4213 = vmatprep.mubr.f32.mxu0 0.0
        %4214 = vmatmul.mubr.f32.gmra.mrb[0].mxu0 %v4136
        %v4215 = vpop.f32.mrb[0].mxu0
        %v4216 = vadd.f32 0.0, %v4215
        %v4217 = vpop.f32.mrb[0].mxu0
        %4218 = vmatprep.mubr.f32.mxu0 0.0
        %4219 = vmatmul.mubr.f32.gmra.mrb[0].mxu0 %v4139
        %v4220 = vpop.f32.mrb[0].mxu0
        %v4221 = vadd.f32 0.0, %v4220
        %v4222 = vpop.f32.mrb[0].mxu0
        %4223 = vmatprep.mubr.f32.mxu0 0.0
        %4224 = vmatmul.mubr.f32.gmra.mrb[0].mxu0 %v4142
        %v4225 = vpop.f32.mrb[0].mxu0
        %v4226 = vadd.f32 0.0, %v4225
        %v4227 = vpop.f32.mrb[0].mxu0
        %4228 = vdwg.mxu0
        %v4230 = vsel %vm3761, %v3934, 0
        %v4233 = vsel %vm3761, %v3935, 0
        %v4236 = vsel %vm3761, %v3936, 0
        %v4239 = vsel %vm3761, %v3937, 0
        %4241 = vmatprep.subr.mxu0 0.0
        %4242 = vmatpush1.msra.mxu0 %v3362
        %4243 = vmatprep.subr.mxu0 0.0
        %4244 = vmatpush1.msra.mxu0 %v3364
        %4245 = vmatprep.subr.mxu0 0.0
        %4246 = vmatpush1.msra.mxu0 0.0
        %4247 = vmatprep.subr.mxu0 0.0
        %4248 = vmatpush1.msra.mxu0 0.0
        %4249 = vmatprep.subr.mxu0 0.0
        %4250 = vmatpush1.msra.mxu0 0.0
        %4251 = vmatprep.subr.mxu0 0.0
        %4252 = vmatpush1.msra.mxu0 0.0
        %4253 = vmatprep.subr.mxu0 0.0
        %4254 = vmatpush1.msra.mxu0 0.0
        %4255 = vmatprep.subr.mxu0 0.0
        %4256 = vmatpush1.msra.mxu0 0.0
        %4257 = vmatprep.subr.mxu0 0.0
        %4258 = vmatpush1.msra.mxu0 0.0
        %4259 = vmatprep.subr.mxu0 0.0
        %4260 = vmatpush1.msra.mxu0 0.0
        %4261 = vmatprep.subr.mxu0 0.0
        %4262 = vmatpush1.msra.mxu0 0.0
        %4263 = vmatprep.subr.mxu0 0.0
        %4264 = vmatpush1.msra.mxu0 0.0
        %4265 = vmatprep.subr.mxu0 0.0
        %4266 = vmatpush1.msra.mxu0 0.0
        %4267 = vmatprep.subr.mxu0 0.0
        %4268 = vmatpush1.msra.mxu0 0.0
        %4269 = vmatprep.subr.mxu0 0.0
        %4270 = vmatpush1.msra.mxu0 0.0
        %4271 = vmatprep.subr.mxu0 0.0
        %4272 = vmatpush1.msra.mxu0 0.0
        %4273 = vmatprep.subr.mxu0 0.0
        %4274 = vmatpush1.msra.mxu0 0.0
        %4275 = vmatprep.subr.mxu0 0.0
        %4276 = vmatpush1.msra.mxu0 0.0
        %4277 = vmatprep.subr.mxu0 0.0
        %4278 = vmatpush1.msra.mxu0 0.0
        %4279 = vmatprep.subr.mxu0 0.0
        %4280 = vmatpush1.msra.mxu0 0.0
        %4281 = vmatprep.subr.mxu0 0.0
        %4282 = vmatpush1.msra.mxu0 0.0
        %4283 = vmatprep.subr.mxu0 0.0
        %4284 = vmatpush1.msra.mxu0 0.0
        %4285 = vmatprep.subr.mxu0 0.0
        %4286 = vmatpush1.msra.mxu0 0.0
        %4287 = vmatprep.subr.mxu0 0.0
        %4288 = vmatpush1.msra.mxu0 0.0
        %4289 = vmatprep.subr.mxu0 0.0
        %4290 = vmatpush1.msra.mxu0 0.0
        %4291 = vmatprep.subr.mxu0 0.0
        %4292 = vmatpush1.msra.mxu0 0.0
        %4293 = vmatprep.subr.mxu0 0.0
        %4294 = vmatpush1.msra.mxu0 0.0
        %4295 = vmatprep.subr.mxu0 0.0
        %4296 = vmatpush1.msra.mxu0 0.0
        %4297 = vmatprep.subr.mxu0 0.0
        %4298 = vmatpush1.msra.mxu0 0.0
        %4299 = vmatprep.subr.mxu0 0.0
        %4300 = vmatpush1.msra.mxu0 0.0
        %4301 = vmatprep.subr.mxu0 0.0
        %4302 = vmatpush1.msra.mxu0 0.0
        %4303 = vmatprep.subr.mxu0 0.0
        %4304 = vmatpush1.msra.mxu0 0.0
        %4305 = vmatprep.mubr.f32.mxu0 0.0
        %4306 = vmatmul.mubr.f32.gmra.mrb[0].mxu0 %v4230
        %v4307 = vpop.f32.mrb[0].mxu0
        %v4308 = vadd.f32 0.0, %v4307
        %v4309 = vpop.f32.mrb[0].mxu0
        %4310 = vmatprep.mubr.f32.mxu0 0.0
        %4311 = vmatmul.mubr.f32.gmra.mrb[0].mxu0 %v4233
        %v4312 = vpop.f32.mrb[0].mxu0
        %v4313 = vadd.f32 0.0, %v4312
        %v4314 = vpop.f32.mrb[0].mxu0
        %4315 = vmatprep.mubr.f32.mxu0 0.0
        %4316 = vmatmul.mubr.f32.gmra.mrb[0].mxu0 %v4236
        %v4317 = vpop.f32.mrb[0].mxu0
        %v4318 = vadd.f32 0.0, %v4317
        %v4319 = vpop.f32.mrb[0].mxu0
        %4320 = vmatprep.mubr.f32.mxu0 0.0
        %4321 = vmatmul.mubr.f32.gmra.mrb[0].mxu0 %v4239
        %v4322 = vpop.f32.mrb[0].mxu0
        %v4323 = vadd.f32 0.0, %v4322
        %v4324 = vpop.f32.mrb[0].mxu0
        %4325 = vdwg.mxu0
        %v4326 = vadd.f32 %v1022, %v4017
        %v4327 = vadd.f32 %v1027, %v4022
        %v4328 = vadd.f32 %v1032, %v4027
        %v4329 = vadd.f32 %v1037, %v4032
        %v4330 = vadd.f32 %v1300, %v4114
        %v4331 = vadd.f32 %v1302, %v4119
        %v4332 = vadd.f32 %v1304, %v4124
        %v4333 = vadd.f32 %v1306, %v4129
        %v4334 = vadd.f32 %v1324, %v4211
        %v4335 = vadd.f32 %v1326, %v4216
        %v4336 = vadd.f32 %v1328, %v4221
        %v4337 = vadd.f32 %v1330, %v4226
        %v4338 = vadd.f32 %v1348, %v4308
        %v4339 = vadd.f32 %v1350, %v4313
        %v4340 = vadd.f32 %v1352, %v4318
        %v4341 = vadd.f32 %v1354, %v4323
        %v4342 = vsel %vm1073, %v1042, 0
        %v4344 = vsel %vm1073, %v1047, 0
        %v4346 = vsel %vm1073, %v1052, 0
        %v4348 = vsel %vm1073, %v1057, 0
        %v4350 = vsel %vm1073, %v3189, 0
        %v4352 = vsel %vm1073, %v3194, 0
        %4354 = vmatprep.subr.mxu0 0.0
        %4355 = vmatpush1.xpose.msra.mxu0 %v4350
        %4356 = vmatprep.subr.mxu0 0.0
        %4357 = vmatpush1.xpose.msra.mxu0 %v4352
        %4358 = vmatprep.subr.mxu0 0.0
        %4359 = vmatpush1.xpose.msra.mxu0 0.0
        %4360 = vmatprep.subr.mxu0 0.0
        %4361 = vmatpush1.xpose.msra.mxu0 0.0
        %4362 = vmatprep.subr.mxu0 0.0
        %4363 = vmatpush1.xpose.msra.mxu0 0.0
        %4364 = vmatprep.subr.mxu0 0.0
        %4365 = vmatpush1.xpose.msra.mxu0 0.0
        %4366 = vmatprep.subr.mxu0 0.0
        %4367 = vmatpush1.xpose.msra.mxu0 0.0
        %4368 = vmatprep.subr.mxu0 0.0
        %4369 = vmatpush1.xpose.msra.mxu0 0.0
        %4370 = vmatprep.subr.mxu0 0.0
        %4371 = vmatpush1.xpose.msra.mxu0 0.0
        %4372 = vmatprep.subr.mxu0 0.0
        %4373 = vmatpush1.xpose.msra.mxu0 0.0
        %4374 = vmatprep.subr.mxu0 0.0
        %4375 = vmatpush1.xpose.msra.mxu0 0.0
        %4376 = vmatprep.subr.mxu0 0.0
        %4377 = vmatpush1.xpose.msra.mxu0 0.0
        %4378 = vmatprep.subr.mxu0 0.0
        %4379 = vmatpush1.xpose.msra.mxu0 0.0
        %4380 = vmatprep.subr.mxu0 0.0
        %4381 = vmatpush1.xpose.msra.mxu0 0.0
        %4382 = vmatprep.subr.mxu0 0.0
        %4383 = vmatpush1.xpose.msra.mxu0 0.0
        %4384 = vmatprep.subr.mxu0 0.0
        %4385 = vmatpush1.xpose.msra.mxu0 0.0
        %4386 = vmatprep.subr.mxu0 0.0
        %4387 = vmatpush1.xpose.msra.mxu0 0.0
        %4388 = vmatprep.subr.mxu0 0.0
        %4389 = vmatpush1.xpose.msra.mxu0 0.0
        %4390 = vmatprep.subr.mxu0 0.0
        %4391 = vmatpush1.xpose.msra.mxu0 0.0
        %4392 = vmatprep.subr.mxu0 0.0
        %4393 = vmatpush1.xpose.msra.mxu0 0.0
        %4394 = vmatprep.subr.mxu0 0.0
        %4395 = vmatpush1.xpose.msra.mxu0 0.0
        %4396 = vmatprep.subr.mxu0 0.0
        %4397 = vmatpush1.xpose.msra.mxu0 0.0
        %4398 = vmatprep.subr.mxu0 0.0
        %4399 = vmatpush1.xpose.msra.mxu0 0.0
        %4400 = vmatprep.subr.mxu0 0.0
        %4401 = vmatpush1.xpose.msra.mxu0 0.0
        %4402 = vmatprep.subr.mxu0 0.0
        %4403 = vmatpush1.xpose.msra.mxu0 0.0
        %4404 = vmatprep.subr.mxu0 0.0
        %4405 = vmatpush1.xpose.msra.mxu0 0.0
        %4406 = vmatprep.subr.mxu0 0.0
        %4407 = vmatpush1.xpose.msra.mxu0 0.0
        %4408 = vmatprep.subr.mxu0 0.0
        %4409 = vmatpush1.xpose.msra.mxu0 0.0
        %4410 = vmatprep.subr.mxu0 0.0
        %4411 = vmatpush1.xpose.msra.mxu0 0.0
        %4412 = vmatprep.subr.mxu0 0.0
        %4413 = vmatpush1.xpose.msra.mxu0 0.0
        %4414 = vmatprep.subr.mxu0 0.0
        %4415 = vmatpush1.xpose.msra.mxu0 0.0
        %4416 = vmatprep.subr.mxu0 0.0
        %4417 = vmatpush1.xpose.msra.mxu0 0.0
        %4418 = vmatprep.mubr.f32.mxu0 0.0
        %4419 = vmatmul.mubr.f32.gmra.mrb[0].mxu0 %v4342
        %v4420 = vpop.f32.mrb[0].mxu0
        %v4421 = vadd.f32 0.0, %v4420
        %v4422 = vpop.f32.mrb[0].mxu0
        %4423 = vmatprep.mubr.f32.mxu0 0.0
        %4424 = vmatmul.mubr.f32.gmra.mrb[0].mxu0 %v4344
        %v4425 = vpop.f32.mrb[0].mxu0
        %v4426 = vadd.f32 0.0, %v4425
        %v4427 = vpop.f32.mrb[0].mxu0
        %4428 = vmatprep.mubr.f32.mxu0 0.0
        %4429 = vmatmul.mubr.f32.gmra.mrb[0].mxu0 %v4346
        %v4430 = vpop.f32.mrb[0].mxu0
        %v4431 = vadd.f32 0.0, %v4430
        %v4432 = vpop.f32.mrb[0].mxu0
        %4433 = vmatprep.mubr.f32.mxu0 0.0
        %4434 = vmatmul.mubr.f32.gmra.mrb[0].mxu0 %v4348
        %v4435 = vpop.f32.mrb[0].mxu0
        %v4436 = vadd.f32 0.0, %v4435
        %v4437 = vpop.f32.mrb[0].mxu0
        %4438 = vdwg.mxu0
        %v4439 = vsel %vm1073, %v1308, 0
        %v4441 = vsel %vm1073, %v1310, 0
        %v4443 = vsel %vm1073, %v1312, 0
        %v4445 = vsel %vm1073, %v1314, 0
        %v4447 = vsel %vm1073, %v3314, 0
        %v4449 = vsel %vm1073, %v3316, 0
        %4451 = vmatprep.subr.mxu0 0.0
        %4452 = vmatpush1.xpose.msra.mxu0 %v4447
        %4453 = vmatprep.subr.mxu0 0.0
        %4454 = vmatpush1.xpose.msra.mxu0 %v4449
        %4455 = vmatprep.subr.mxu0 0.0
        %4456 = vmatpush1.xpose.msra.mxu0 0.0
        %4457 = vmatprep.subr.mxu0 0.0
        %4458 = vmatpush1.xpose.msra.mxu0 0.0
        %4459 = vmatprep.subr.mxu0 0.0
        %4460 = vmatpush1.xpose.msra.mxu0 0.0
        %4461 = vmatprep.subr.mxu0 0.0
        %4462 = vmatpush1.xpose.msra.mxu0 0.0
        %4463 = vmatprep.subr.mxu0 0.0
        %4464 = vmatpush1.xpose.msra.mxu0 0.0
        %4465 = vmatprep.subr.mxu0 0.0
        %4466 = vmatpush1.xpose.msra.mxu0 0.0
        %4467 = vmatprep.subr.mxu0 0.0
        %4468 = vmatpush1.xpose.msra.mxu0 0.0
        %4469 = vmatprep.subr.mxu0 0.0
        %4470 = vmatpush1.xpose.msra.mxu0 0.0
        %4471 = vmatprep.subr.mxu0 0.0
        %4472 = vmatpush1.xpose.msra.mxu0 0.0
        %4473 = vmatprep.subr.mxu0 0.0
        %4474 = vmatpush1.xpose.msra.mxu0 0.0
        %4475 = vmatprep.subr.mxu0 0.0
        %4476 = vmatpush1.xpose.msra.mxu0 0.0
        %4477 = vmatprep.subr.mxu0 0.0
        %4478 = vmatpush1.xpose.msra.mxu0 0.0
        %4479 = vmatprep.subr.mxu0 0.0
        %4480 = vmatpush1.xpose.msra.mxu0 0.0
        %4481 = vmatprep.subr.mxu0 0.0
        %4482 = vmatpush1.xpose.msra.mxu0 0.0
        %4483 = vmatprep.subr.mxu0 0.0
        %4484 = vmatpush1.xpose.msra.mxu0 0.0
        %4485 = vmatprep.subr.mxu0 0.0
        %4486 = vmatpush1.xpose.msra.mxu0 0.0
        %4487 = vmatprep.subr.mxu0 0.0
        %4488 = vmatpush1.xpose.msra.mxu0 0.0
        %4489 = vmatprep.subr.mxu0 0.0
        %4490 = vmatpush1.xpose.msra.mxu0 0.0
        %4491 = vmatprep.subr.mxu0 0.0
        %4492 = vmatpush1.xpose.msra.mxu0 0.0
        %4493 = vmatprep.subr.mxu0 0.0
        %4494 = vmatpush1.xpose.msra.mxu0 0.0
        %4495 = vmatprep.subr.mxu0 0.0
        %4496 = vmatpush1.xpose.msra.mxu0 0.0
        %4497 = vmatprep.subr.mxu0 0.0
        %4498 = vmatpush1.xpose.msra.mxu0 0.0
        %4499 = vmatprep.subr.mxu0 0.0
        %4500 = vmatpush1.xpose.msra.mxu0 0.0
        %4501 = vmatprep.subr.mxu0 0.0
        %4502 = vmatpush1.xpose.msra.mxu0 0.0
        %4503 = vmatprep.subr.mxu0 0.0
        %4504 = vmatpush1.xpose.msra.mxu0 0.0
        %4505 = vmatprep.subr.mxu0 0.0
        %4506 = vmatpush1.xpose.msra.mxu0 0.0
        %4507 = vmatprep.subr.mxu0 0.0
        %4508 = vmatpush1.xpose.msra.mxu0 0.0
        %4509 = vmatprep.subr.mxu0 0.0
        %4510 = vmatpush1.xpose.msra.mxu0 0.0
        %4511 = vmatprep.subr.mxu0 0.0
        %4512 = vmatpush1.xpose.msra.mxu0 0.0
        %4513 = vmatprep.subr.mxu0 0.0
        %4514 = vmatpush1.xpose.msra.mxu0 0.0
        %4515 = vmatprep.mubr.f32.mxu0 0.0
        %4516 = vmatmul.mubr.f32.gmra.mrb[0].mxu0 %v4439
        %v4517 = vpop.f32.mrb[0].mxu0
        %v4518 = vadd.f32 0.0, %v4517
        %v4519 = vpop.f32.mrb[0].mxu0
        %4520 = vmatprep.mubr.f32.mxu0 0.0
        %4521 = vmatmul.mubr.f32.gmra.mrb[0].mxu0 %v4441
        %v4522 = vpop.f32.mrb[0].mxu0
        %v4523 = vadd.f32 0.0, %v4522
        %v4524 = vpop.f32.mrb[0].mxu0
        %4525 = vmatprep.mubr.f32.mxu0 0.0
        %4526 = vmatmul.mubr.f32.gmra.mrb[0].mxu0 %v4443
        %v4527 = vpop.f32.mrb[0].mxu0
        %v4528 = vadd.f32 0.0, %v4527
        %v4529 = vpop.f32.mrb[0].mxu0
        %4530 = vmatprep.mubr.f32.mxu0 0.0
        %4531 = vmatmul.mubr.f32.gmra.mrb[0].mxu0 %v4445
        %v4532 = vpop.f32.mrb[0].mxu0
        %v4533 = vadd.f32 0.0, %v4532
        %v4534 = vpop.f32.mrb[0].mxu0
        %4535 = vdwg.mxu0
        %v4536 = vsel %vm1073, %v1332, 0
        %v4538 = vsel %vm1073, %v1334, 0
        %v4540 = vsel %vm1073, %v1336, 0
        %v4542 = vsel %vm1073, %v1338, 0
        %v4544 = vsel %vm1073, %v3322, 0
        %v4546 = vsel %vm1073, %v3324, 0
        %4548 = vmatprep.subr.mxu0 0.0
        %4549 = vmatpush1.xpose.msra.mxu0 %v4544
        %4550 = vmatprep.subr.mxu0 0.0
        %4551 = vmatpush1.xpose.msra.mxu0 %v4546
        %4552 = vmatprep.subr.mxu0 0.0
        %4553 = vmatpush1.xpose.msra.mxu0 0.0
        %4554 = vmatprep.subr.mxu0 0.0
        %4555 = vmatpush1.xpose.msra.mxu0 0.0
        %4556 = vmatprep.subr.mxu0 0.0
        %4557 = vmatpush1.xpose.msra.mxu0 0.0
        %4558 = vmatprep.subr.mxu0 0.0
        %4559 = vmatpush1.xpose.msra.mxu0 0.0
        %4560 = vmatprep.subr.mxu0 0.0
        %4561 = vmatpush1.xpose.msra.mxu0 0.0
        %4562 = vmatprep.subr.mxu0 0.0
        %4563 = vmatpush1.xpose.msra.mxu0 0.0
        %4564 = vmatprep.subr.mxu0 0.0
        %4565 = vmatpush1.xpose.msra.mxu0 0.0
        %4566 = vmatprep.subr.mxu0 0.0
        %4567 = vmatpush1.xpose.msra.mxu0 0.0
        %4568 = vmatprep.subr.mxu0 0.0
        %4569 = vmatpush1.xpose.msra.mxu0 0.0
        %4570 = vmatprep.subr.mxu0 0.0
        %4571 = vmatpush1.xpose.msra.mxu0 0.0
        %4572 = vmatprep.subr.mxu0 0.0
        %4573 = vmatpush1.xpose.msra.mxu0 0.0
        %4574 = vmatprep.subr.mxu0 0.0
        %4575 = vmatpush1.xpose.msra.mxu0 0.0
        %4576 = vmatprep.subr.mxu0 0.0
        %4577 = vmatpush1.xpose.msra.mxu0 0.0
        %4578 = vmatprep.subr.mxu0 0.0
        %4579 = vmatpush1.xpose.msra.mxu0 0.0
        %4580 = vmatprep.subr.mxu0 0.0
        %4581 = vmatpush1.xpose.msra.mxu0 0.0
        %4582 = vmatprep.subr.mxu0 0.0
        %4583 = vmatpush1.xpose.msra.mxu0 0.0
        %4584 = vmatprep.subr.mxu0 0.0
        %4585 = vmatpush1.xpose.msra.mxu0 0.0
        %4586 = vmatprep.subr.mxu0 0.0
        %4587 = vmatpush1.xpose.msra.mxu0 0.0
        %4588 = vmatprep.subr.mxu0 0.0
        %4589 = vmatpush1.xpose.msra.mxu0 0.0
        %4590 = vmatprep.subr.mxu0 0.0
        %4591 = vmatpush1.xpose.msra.mxu0 0.0
        %4592 = vmatprep.subr.mxu0 0.0
        %4593 = vmatpush1.xpose.msra.mxu0 0.0
        %4594 = vmatprep.subr.mxu0 0.0
        %4595 = vmatpush1.xpose.msra.mxu0 0.0
        %4596 = vmatprep.subr.mxu0 0.0
        %4597 = vmatpush1.xpose.msra.mxu0 0.0
        %4598 = vmatprep.subr.mxu0 0.0
        %4599 = vmatpush1.xpose.msra.mxu0 0.0
        %4600 = vmatprep.subr.mxu0 0.0
        %4601 = vmatpush1.xpose.msra.mxu0 0.0
        %4602 = vmatprep.subr.mxu0 0.0
        %4603 = vmatpush1.xpose.msra.mxu0 0.0
        %4604 = vmatprep.subr.mxu0 0.0
        %4605 = vmatpush1.xpose.msra.mxu0 0.0
        %4606 = vmatprep.subr.mxu0 0.0
        %4607 = vmatpush1.xpose.msra.mxu0 0.0
        %4608 = vmatprep.subr.mxu0 0.0
        %4609 = vmatpush1.xpose.msra.mxu0 0.0
        %4610 = vmatprep.subr.mxu0 0.0
        %4611 = vmatpush1.xpose.msra.mxu0 0.0
        %4612 = vmatprep.mubr.f32.mxu0 0.0
        %4613 = vmatmul.mubr.f32.gmra.mrb[0].mxu0 %v4536
        %v4614 = vpop.f32.mrb[0].mxu0
        %v4615 = vadd.f32 0.0, %v4614
        %v4616 = vpop.f32.mrb[0].mxu0
        %4617 = vmatprep.mubr.f32.mxu0 0.0
        %4618 = vmatmul.mubr.f32.gmra.mrb[0].mxu0 %v4538
        %v4619 = vpop.f32.mrb[0].mxu0
        %v4620 = vadd.f32 0.0, %v4619
        %v4621 = vpop.f32.mrb[0].mxu0
        %4622 = vmatprep.mubr.f32.mxu0 0.0
        %4623 = vmatmul.mubr.f32.gmra.mrb[0].mxu0 %v4540
        %v4624 = vpop.f32.mrb[0].mxu0
        %v4625 = vadd.f32 0.0, %v4624
        %v4626 = vpop.f32.mrb[0].mxu0
        %4627 = vmatprep.mubr.f32.mxu0 0.0
        %4628 = vmatmul.mubr.f32.gmra.mrb[0].mxu0 %v4542
        %v4629 = vpop.f32.mrb[0].mxu0
        %v4630 = vadd.f32 0.0, %v4629
        %v4631 = vpop.f32.mrb[0].mxu0
        %4632 = vdwg.mxu0
        %v4633 = vsel %vm1073, %v1356, 0
        %v4635 = vsel %vm1073, %v1358, 0
        %v4637 = vsel %vm1073, %v1360, 0
        %v4639 = vsel %vm1073, %v1362, 0
        %v4641 = vsel %vm1073, %v3330, 0
        %v4643 = vsel %vm1073, %v3332, 0
        %4645 = vmatprep.subr.mxu0 0.0
        %4646 = vmatpush1.xpose.msra.mxu0 %v4641
        %4647 = vmatprep.subr.mxu0 0.0
        %4648 = vmatpush1.xpose.msra.mxu0 %v4643
        %4649 = vmatprep.subr.mxu0 0.0
        %4650 = vmatpush1.xpose.msra.mxu0 0.0
        %4651 = vmatprep.subr.mxu0 0.0
        %4652 = vmatpush1.xpose.msra.mxu0 0.0
        %4653 = vmatprep.subr.mxu0 0.0
        %4654 = vmatpush1.xpose.msra.mxu0 0.0
        %4655 = vmatprep.subr.mxu0 0.0
        %4656 = vmatpush1.xpose.msra.mxu0 0.0
        %4657 = vmatprep.subr.mxu0 0.0
        %4658 = vmatpush1.xpose.msra.mxu0 0.0
        %4659 = vmatprep.subr.mxu0 0.0
        %4660 = vmatpush1.xpose.msra.mxu0 0.0
        %4661 = vmatprep.subr.mxu0 0.0
        %4662 = vmatpush1.xpose.msra.mxu0 0.0
        %4663 = vmatprep.subr.mxu0 0.0
        %4664 = vmatpush1.xpose.msra.mxu0 0.0
        %4665 = vmatprep.subr.mxu0 0.0
        %4666 = vmatpush1.xpose.msra.mxu0 0.0
        %4667 = vmatprep.subr.mxu0 0.0
        %4668 = vmatpush1.xpose.msra.mxu0 0.0
        %4669 = vmatprep.subr.mxu0 0.0
        %4670 = vmatpush1.xpose.msra.mxu0 0.0
        %4671 = vmatprep.subr.mxu0 0.0
        %4672 = vmatpush1.xpose.msra.mxu0 0.0
        %4673 = vmatprep.subr.mxu0 0.0
        %4674 = vmatpush1.xpose.msra.mxu0 0.0
        %4675 = vmatprep.subr.mxu0 0.0
        %4676 = vmatpush1.xpose.msra.mxu0 0.0
        %4677 = vmatprep.subr.mxu0 0.0
        %4678 = vmatpush1.xpose.msra.mxu0 0.0
        %4679 = vmatprep.subr.mxu0 0.0
        %4680 = vmatpush1.xpose.msra.mxu0 0.0
        %4681 = vmatprep.subr.mxu0 0.0
        %4682 = vmatpush1.xpose.msra.mxu0 0.0
        %4683 = vmatprep.subr.mxu0 0.0
        %4684 = vmatpush1.xpose.msra.mxu0 0.0
        %4685 = vmatprep.subr.mxu0 0.0
        %4686 = vmatpush1.xpose.msra.mxu0 0.0
        %4687 = vmatprep.subr.mxu0 0.0
        %4688 = vmatpush1.xpose.msra.mxu0 0.0
        %4689 = vmatprep.subr.mxu0 0.0
        %4690 = vmatpush1.xpose.msra.mxu0 0.0
        %4691 = vmatprep.subr.mxu0 0.0
        %4692 = vmatpush1.xpose.msra.mxu0 0.0
        %4693 = vmatprep.subr.mxu0 0.0
        %4694 = vmatpush1.xpose.msra.mxu0 0.0
        %4695 = vmatprep.subr.mxu0 0.0
        %4696 = vmatpush1.xpose.msra.mxu0 0.0
        %4697 = vmatprep.subr.mxu0 0.0
        %4698 = vmatpush1.xpose.msra.mxu0 0.0
        %4699 = vmatprep.subr.mxu0 0.0
        %4700 = vmatpush1.xpose.msra.mxu0 0.0
        %4701 = vmatprep.subr.mxu0 0.0
        %4702 = vmatpush1.xpose.msra.mxu0 0.0
        %4703 = vmatprep.subr.mxu0 0.0
        %4704 = vmatpush1.xpose.msra.mxu0 0.0
        %4705 = vmatprep.subr.mxu0 0.0
        %4706 = vmatpush1.xpose.msra.mxu0 0.0
        %4707 = vmatprep.subr.mxu0 0.0
        %4708 = vmatpush1.xpose.msra.mxu0 0.0
        %4709 = vmatprep.mubr.f32.mxu0 0.0
        %4710 = vmatmul.mubr.f32.gmra.mrb[0].mxu0 %v4633
        %v4711 = vpop.f32.mrb[0].mxu0
        %v4712 = vadd.f32 0.0, %v4711
        %v4713 = vpop.f32.mrb[0].mxu0
        %4714 = vmatprep.mubr.f32.mxu0 0.0
        %4715 = vmatmul.mubr.f32.gmra.mrb[0].mxu0 %v4635
        %v4716 = vpop.f32.mrb[0].mxu0
        %v4717 = vadd.f32 0.0, %v4716
        %v4718 = vpop.f32.mrb[0].mxu0
        %4719 = vmatprep.mubr.f32.mxu0 0.0
        %4720 = vmatmul.mubr.f32.gmra.mrb[0].mxu0 %v4637
        %v4721 = vpop.f32.mrb[0].mxu0
        %v4722 = vadd.f32 0.0, %v4721
        %v4723 = vpop.f32.mrb[0].mxu0
        %4724 = vmatprep.mubr.f32.mxu0 0.0
        %4725 = vmatmul.mubr.f32.gmra.mrb[0].mxu0 %v4639
        %v4726 = vpop.f32.mrb[0].mxu0
        %v4727 = vadd.f32 0.0, %v4726
        %v4728 = vpop.f32.mrb[0].mxu0
        %4729 = vdwg.mxu0
        %v4730 = vsel %vm3761, %v4421, -inf
        %4731 = vmax.xlane.f32.xlu0 %v4730
        %v4732 = vpop.xlane.xlu0 %4731
        %v4733 = vsel %vm3761, %v4426, -inf
        %4734 = vmax.xlane.f32.xlu0 %v4733
        %v4735 = vpop.xlane.xlu0 %4734
        %v4736 = vsel %vm3761, %v4431, -inf
        %4737 = vmax.xlane.f32.xlu0 %v4736
        %v4738 = vpop.xlane.xlu0 %4737
        %v4739 = vsel %vm3761, %v4436, -inf
        %4740 = vmax.xlane.f32.xlu0 %v4739
        %v4741 = vpop.xlane.xlu0 %4740
        %v4742 = vsel %vm3761, %v4518, -inf
        %4743 = vmax.xlane.f32.xlu0 %v4742
        %v4744 = vpop.xlane.xlu0 %4743
        %v4745 = vsel %vm3761, %v4523, -inf
        %4746 = vmax.xlane.f32.xlu0 %v4745
        %v4747 = vpop.xlane.xlu0 %4746
        %v4748 = vsel %vm3761, %v4528, -inf
        %4749 = vmax.xlane.f32.xlu0 %v4748
        %v4750 = vpop.xlane.xlu0 %4749
        %v4751 = vsel %vm3761, %v4533, -inf
        %4752 = vmax.xlane.f32.xlu0 %v4751
        %v4753 = vpop.xlane.xlu0 %4752
        %v4754 = vsel %vm3761, %v4615, -inf
        %4755 = vmax.xlane.f32.xlu0 %v4754
        %v4756 = vpop.xlane.xlu0 %4755
        %v4757 = vsel %vm3761, %v4620, -inf
        %4758 = vmax.xlane.f32.xlu0 %v4757
        %v4759 = vpop.xlane.xlu0 %4758
        %v4760 = vsel %vm3761, %v4625, -inf
        %4761 = vmax.xlane.f32.xlu0 %v4760
        %v4762 = vpop.xlane.xlu0 %4761
        %v4763 = vsel %vm3761, %v4630, -inf
        %4764 = vmax.xlane.f32.xlu0 %v4763
        %v4765 = vpop.xlane.xlu0 %4764
        %v4766 = vsel %vm3761, %v4712, -inf
        %4767 = vmax.xlane.f32.xlu0 %v4766
        %v4768 = vpop.xlane.xlu0 %4767
        %v4769 = vsel %vm3761, %v4717, -inf
        %4770 = vmax.xlane.f32.xlu0 %v4769
        %v4771 = vpop.xlane.xlu0 %4770
        %v4772 = vsel %vm3761, %v4722, -inf
        %4773 = vmax.xlane.f32.xlu0 %v4772
        %v4774 = vpop.xlane.xlu0 %4773
        %v4775 = vsel %vm3761, %v4727, -inf
        %4776 = vmax.xlane.f32.xlu0 %v4775
        %v4777 = vpop.xlane.xlu0 %4776
        %v4778 = vsub.f32 %v4421, %v4732
        %v4779 = vsub.f32 %v4426, %v4735
        %v4780 = vsub.f32 %v4431, %v4738
        %v4781 = vsub.f32 %v4436, %v4741
        %v4782 = vsub.f32 %v4518, %v4744
        %v4783 = vsub.f32 %v4523, %v4747
        %v4784 = vsub.f32 %v4528, %v4750
        %v4785 = vsub.f32 %v4533, %v4753
        %v4786 = vsub.f32 %v4615, %v4756
        %v4787 = vsub.f32 %v4620, %v4759
        %v4788 = vsub.f32 %v4625, %v4762
        %v4789 = vsub.f32 %v4630, %v4765
        %v4790 = vsub.f32 %v4712, %v4768
        %v4791 = vsub.f32 %v4717, %v4771
        %v4792 = vsub.f32 %v4722, %v4774
        %v4793 = vsub.f32 %v4727, %v4777
        %v4794 = vmul.f32 %v4778, 1.442695
        %v4795 = vpow.pop %v4794
        %v4796 = vmul.f32 %v4779, 1.442695
        %v4797 = vpow.pop %v4796
        %v4798 = vmul.f32 %v4780, 1.442695
        %v4799 = vpow.pop %v4798
        %v4800 = vmul.f32 %v4781, 1.442695
        %v4801 = vpow.pop %v4800
        %v4802 = vmul.f32 %v4782, 1.442695
        %v4803 = vpow.pop %v4802
        %v4804 = vmul.f32 %v4783, 1.442695
        %v4805 = vpow.pop %v4804
        %v4806 = vmul.f32 %v4784, 1.442695
        %v4807 = vpow.pop %v4806
        %v4808 = vmul.f32 %v4785, 1.442695
        %v4809 = vpow.pop %v4808
        %v4810 = vmul.f32 %v4786, 1.442695
        %v4811 = vpow.pop %v4810
        %v4812 = vmul.f32 %v4787, 1.442695
        %v4813 = vpow.pop %v4812
        %v4814 = vmul.f32 %v4788, 1.442695
        %v4815 = vpow.pop %v4814
        %v4816 = vmul.f32 %v4789, 1.442695
        %v4817 = vpow.pop %v4816
        %v4818 = vmul.f32 %v4790, 1.442695
        %v4819 = vpow.pop %v4818
        %v4820 = vmul.f32 %v4791, 1.442695
        %v4821 = vpow.pop %v4820
        %v4822 = vmul.f32 %v4792, 1.442695
        %v4823 = vpow.pop %v4822
        %v4824 = vmul.f32 %v4793, 1.442695
        %v4825 = vpow.pop %v4824
        %v4826 = vsel %vm3761, %v4795, 0.0
        %4827 = vadd.xlane.f32.xlu0 %v4826
        %v4828 = vpop.xlane.xlu0 %4827
        %v4829 = vsel %vm3761, %v4797, 0.0
        %4830 = vadd.xlane.f32.xlu0 %v4829
        %v4831 = vpop.xlane.xlu0 %4830
        %v4832 = vsel %vm3761, %v4799, 0.0
        %4833 = vadd.xlane.f32.xlu0 %v4832
        %v4834 = vpop.xlane.xlu0 %4833
        %v4835 = vsel %vm3761, %v4801, 0.0
        %4836 = vadd.xlane.f32.xlu0 %v4835
        %v4837 = vpop.xlane.xlu0 %4836
        %v4838 = vsel %vm3761, %v4803, 0.0
        %4839 = vadd.xlane.f32.xlu0 %v4838
        %v4840 = vpop.xlane.xlu0 %4839
        %v4841 = vsel %vm3761, %v4805, 0.0
        %4842 = vadd.xlane.f32.xlu0 %v4841
        %v4843 = vpop.xlane.xlu0 %4842
        %v4844 = vsel %vm3761, %v4807, 0.0
        %4845 = vadd.xlane.f32.xlu0 %v4844
        %v4846 = vpop.xlane.xlu0 %4845
        %v4847 = vsel %vm3761, %v4809, 0.0
        %4848 = vadd.xlane.f32.xlu0 %v4847
        %v4849 = vpop.xlane.xlu0 %4848
        %v4850 = vsel %vm3761, %v4811, 0.0
        %4851 = vadd.xlane.f32.xlu0 %v4850
        %v4852 = vpop.xlane.xlu0 %4851
        %v4853 = vsel %vm3761, %v4813, 0.0
        %4854 = vadd.xlane.f32.xlu0 %v4853
        %v4855 = vpop.xlane.xlu0 %4854
        %v4856 = vsel %vm3761, %v4815, 0.0
        %4857 = vadd.xlane.f32.xlu0 %v4856
        %v4858 = vpop.xlane.xlu0 %4857
        %v4859 = vsel %vm3761, %v4817, 0.0
        %4860 = vadd.xlane.f32.xlu0 %v4859
        %v4861 = vpop.xlane.xlu0 %4860
        %v4862 = vsel %vm3761, %v4819, 0.0
        %4863 = vadd.xlane.f32.xlu0 %v4862
        %v4864 = vpop.xlane.xlu0 %4863
        %v4865 = vsel %vm3761, %v4821, 0.0
        %4866 = vadd.xlane.f32.xlu0 %v4865
        %v4867 = vpop.xlane.xlu0 %4866
        %v4868 = vsel %vm3761, %v4823, 0.0
        %4869 = vadd.xlane.f32.xlu0 %v4868
        %v4870 = vpop.xlane.xlu0 %4869
        %v4871 = vsel %vm3761, %v4825, 0.0
        %4872 = vadd.xlane.f32.xlu0 %v4871
        %v4873 = vpop.xlane.xlu0 %4872
        %v4874 = vrcp.pop %v4828
        %v4875 = vrcp.pop %v4831
        %v4876 = vrcp.pop %v4834
        %v4877 = vrcp.pop %v4837
        %v4878 = vrcp.pop %v4840
        %v4879 = vrcp.pop %v4843
        %v4880 = vrcp.pop %v4846
        %v4881 = vrcp.pop %v4849
        %v4882 = vrcp.pop %v4852
        %v4883 = vrcp.pop %v4855
        %v4884 = vrcp.pop %v4858
        %v4885 = vrcp.pop %v4861
        %v4886 = vrcp.pop %v4864
        %v4887 = vrcp.pop %v4867
        %v4888 = vrcp.pop %v4870
        %v4889 = vrcp.pop %v4873
        %v4890 = vmul.f32 %v4795, %v4874
        %v4891 = vmul.f32 %v4797, %v4875
        %v4892 = vmul.f32 %v4799, %v4876
        %v4893 = vmul.f32 %v4801, %v4877
        %v4894 = vmul.f32 %v4803, %v4878
        %v4895 = vmul.f32 %v4805, %v4879
        %v4896 = vmul.f32 %v4807, %v4880
        %v4897 = vmul.f32 %v4809, %v4881
        %v4898 = vmul.f32 %v4811, %v4882
        %v4899 = vmul.f32 %v4813, %v4883
        %v4900 = vmul.f32 %v4815, %v4884
        %v4901 = vmul.f32 %v4817, %v4885
        %v4902 = vmul.f32 %v4819, %v4886
        %v4903 = vmul.f32 %v4821, %v4887
        %v4904 = vmul.f32 %v4823, %v4888
        %v4905 = vmul.f32 %v4825, %v4889
        %v4907 = vsel %vm3761, %v4890, 0
        %v4910 = vsel %vm3761, %v4891, 0
        %v4913 = vsel %vm3761, %v4892, 0
        %v4916 = vsel %vm3761, %v4893, 0
        %4918 = vmatprep.subr.mxu0 0.0
        %4919 = vmatpush1.msra.mxu0 %v3297
        %4920 = vmatprep.subr.mxu0 0.0
        %4921 = vmatpush1.msra.mxu0 %v3302
        %4922 = vmatprep.subr.mxu0 0.0
        %4923 = vmatpush1.msra.mxu0 0.0
        %4924 = vmatprep.subr.mxu0 0.0
        %4925 = vmatpush1.msra.mxu0 0.0
        %4926 = vmatprep.subr.mxu0 0.0
        %4927 = vmatpush1.msra.mxu0 0.0
        %4928 = vmatprep.subr.mxu0 0.0
        %4929 = vmatpush1.msra.mxu0 0.0
        %4930 = vmatprep.subr.mxu0 0.0
        %4931 = vmatpush1.msra.mxu0 0.0
        %4932 = vmatprep.subr.mxu0 0.0
        %4933 = vmatpush1.msra.mxu0 0.0
        %4934 = vmatprep.subr.mxu0 0.0
        %4935 = vmatpush1.msra.mxu0 0.0
        %4936 = vmatprep.subr.mxu0 0.0
        %4937 = vmatpush1.msra.mxu0 0.0
        %4938 = vmatprep.subr.mxu0 0.0
        %4939 = vmatpush1.msra.mxu0 0.0
        %4940 = vmatprep.subr.mxu0 0.0
        %4941 = vmatpush1.msra.mxu0 0.0
        %4942 = vmatprep.subr.mxu0 0.0
        %4943 = vmatpush1.msra.mxu0 0.0
        %4944 = vmatprep.subr.mxu0 0.0
        %4945 = vmatpush1.msra.mxu0 0.0
        %4946 = vmatprep.subr.mxu0 0.0
        %4947 = vmatpush1.msra.mxu0 0.0
        %4948 = vmatprep.subr.mxu0 0.0
        %4949 = vmatpush1.msra.mxu0 0.0
        %4950 = vmatprep.subr.mxu0 0.0
        %4951 = vmatpush1.msra.mxu0 0.0
        %4952 = vmatprep.subr.mxu0 0.0
        %4953 = vmatpush1.msra.mxu0 0.0
        %4954 = vmatprep.subr.mxu0 0.0
        %4955 = vmatpush1.msra.mxu0 0.0
        %4956 = vmatprep.subr.mxu0 0.0
        %4957 = vmatpush1.msra.mxu0 0.0
        %4958 = vmatprep.subr.mxu0 0.0
        %4959 = vmatpush1.msra.mxu0 0.0
        %4960 = vmatprep.subr.mxu0 0.0
        %4961 = vmatpush1.msra.mxu0 0.0
        %4962 = vmatprep.subr.mxu0 0.0
        %4963 = vmatpush1.msra.mxu0 0.0
        %4964 = vmatprep.subr.mxu0 0.0
        %4965 = vmatpush1.msra.mxu0 0.0
        %4966 = vmatprep.subr.mxu0 0.0
        %4967 = vmatpush1.msra.mxu0 0.0
        %4968 = vmatprep.subr.mxu0 0.0
        %4969 = vmatpush1.msra.mxu0 0.0
        %4970 = vmatprep.subr.mxu0 0.0
        %4971 = vmatpush1.msra.mxu0 0.0
        %4972 = vmatprep.subr.mxu0 0.0
        %4973 = vmatpush1.msra.mxu0 0.0
        %4974 = vmatprep.subr.mxu0 0.0
        %4975 = vmatpush1.msra.mxu0 0.0
        %4976 = vmatprep.subr.mxu0 0.0
        %4977 = vmatpush1.msra.mxu0 0.0
        %4978 = vmatprep.subr.mxu0 0.0
        %4979 = vmatpush1.msra.mxu0 0.0
        %4980 = vmatprep.subr.mxu0 0.0
        %4981 = vmatpush1.msra.mxu0 0.0
        %4982 = vmatprep.mubr.f32.mxu0 0.0
        %4983 = vmatmul.mubr.f32.gmra.mrb[0].mxu0 %v4907
        %v4984 = vpop.f32.mrb[0].mxu0
        %v4985 = vadd.f32 0.0, %v4984
        %v4986 = vpop.f32.mrb[0].mxu0
        %4987 = vmatprep.mubr.f32.mxu0 0.0
        %4988 = vmatmul.mubr.f32.gmra.mrb[0].mxu0 %v4910
        %v4989 = vpop.f32.mrb[0].mxu0
        %v4990 = vadd.f32 0.0, %v4989
        %v4991 = vpop.f32.mrb[0].mxu0
        %4992 = vmatprep.mubr.f32.mxu0 0.0
        %4993 = vmatmul.mubr.f32.gmra.mrb[0].mxu0 %v4913
        %v4994 = vpop.f32.mrb[0].mxu0
        %v4995 = vadd.f32 0.0, %v4994
        %v4996 = vpop.f32.mrb[0].mxu0
        %4997 = vmatprep.mubr.f32.mxu0 0.0
        %4998 = vmatmul.mubr.f32.gmra.mrb[0].mxu0 %v4916
        %v4999 = vpop.f32.mrb[0].mxu0
        %v5000 = vadd.f32 0.0, %v4999
        %v5001 = vpop.f32.mrb[0].mxu0
        %5002 = vdwg.mxu0
        %v5004 = vsel %vm3761, %v4894, 0
        %v5007 = vsel %vm3761, %v4895, 0
        %v5010 = vsel %vm3761, %v4896, 0
        %v5013 = vsel %vm3761, %v4897, 0
        %5015 = vmatprep.subr.mxu0 0.0
        %5016 = vmatpush1.msra.mxu0 %v3342
        %5017 = vmatprep.subr.mxu0 0.0
        %5018 = vmatpush1.msra.mxu0 %v3344
        %5019 = vmatprep.subr.mxu0 0.0
        %5020 = vmatpush1.msra.mxu0 0.0
        %5021 = vmatprep.subr.mxu0 0.0
        %5022 = vmatpush1.msra.mxu0 0.0
        %5023 = vmatprep.subr.mxu0 0.0
        %5024 = vmatpush1.msra.mxu0 0.0
        %5025 = vmatprep.subr.mxu0 0.0
        %5026 = vmatpush1.msra.mxu0 0.0
        %5027 = vmatprep.subr.mxu0 0.0
        %5028 = vmatpush1.msra.mxu0 0.0
        %5029 = vmatprep.subr.mxu0 0.0
        %5030 = vmatpush1.msra.mxu0 0.0
        %5031 = vmatprep.subr.mxu0 0.0
        %5032 = vmatpush1.msra.mxu0 0.0
        %5033 = vmatprep.subr.mxu0 0.0
        %5034 = vmatpush1.msra.mxu0 0.0
        %5035 = vmatprep.subr.mxu0 0.0
        %5036 = vmatpush1.msra.mxu0 0.0
        %5037 = vmatprep.subr.mxu0 0.0
        %5038 = vmatpush1.msra.mxu0 0.0
        %5039 = vmatprep.subr.mxu0 0.0
        %5040 = vmatpush1.msra.mxu0 0.0
        %5041 = vmatprep.subr.mxu0 0.0
        %5042 = vmatpush1.msra.mxu0 0.0
        %5043 = vmatprep.subr.mxu0 0.0
        %5044 = vmatpush1.msra.mxu0 0.0
        %5045 = vmatprep.subr.mxu0 0.0
        %5046 = vmatpush1.msra.mxu0 0.0
        %5047 = vmatprep.subr.mxu0 0.0
        %5048 = vmatpush1.msra.mxu0 0.0
        %5049 = vmatprep.subr.mxu0 0.0
        %5050 = vmatpush1.msra.mxu0 0.0
        %5051 = vmatprep.subr.mxu0 0.0
        %5052 = vmatpush1.msra.mxu0 0.0
        %5053 = vmatprep.subr.mxu0 0.0
        %5054 = vmatpush1.msra.mxu0 0.0
        %5055 = vmatprep.subr.mxu0 0.0
        %5056 = vmatpush1.msra.mxu0 0.0
        %5057 = vmatprep.subr.mxu0 0.0
        %5058 = vmatpush1.msra.mxu0 0.0
        %5059 = vmatprep.subr.mxu0 0.0
        %5060 = vmatpush1.msra.mxu0 0.0
        %5061 = vmatprep.subr.mxu0 0.0
        %5062 = vmatpush1.msra.mxu0 0.0
        %5063 = vmatprep.subr.mxu0 0.0
        %5064 = vmatpush1.msra.mxu0 0.0
        %5065 = vmatprep.subr.mxu0 0.0
        %5066 = vmatpush1.msra.mxu0 0.0
        %5067 = vmatprep.subr.mxu0 0.0
        %5068 = vmatpush1.msra.mxu0 0.0
        %5069 = vmatprep.subr.mxu0 0.0
        %5070 = vmatpush1.msra.mxu0 0.0
        %5071 = vmatprep.subr.mxu0 0.0
        %5072 = vmatpush1.msra.mxu0 0.0
        %5073 = vmatprep.subr.mxu0 0.0
        %5074 = vmatpush1.msra.mxu0 0.0
        %5075 = vmatprep.subr.mxu0 0.0
        %5076 = vmatpush1.msra.mxu0 0.0
        %5077 = vmatprep.subr.mxu0 0.0
        %5078 = vmatpush1.msra.mxu0 0.0
        %5079 = vmatprep.mubr.f32.mxu0 0.0
        %5080 = vmatmul.mubr.f32.gmra.mrb[0].mxu0 %v5004
        %v5081 = vpop.f32.mrb[0].mxu0
        %v5082 = vadd.f32 0.0, %v5081
        %v5083 = vpop.f32.mrb[0].mxu0
        %5084 = vmatprep.mubr.f32.mxu0 0.0
        %5085 = vmatmul.mubr.f32.gmra.mrb[0].mxu0 %v5007
        %v5086 = vpop.f32.mrb[0].mxu0
        %v5087 = vadd.f32 0.0, %v5086
        %v5088 = vpop.f32.mrb[0].mxu0
        %5089 = vmatprep.mubr.f32.mxu0 0.0
        %5090 = vmatmul.mubr.f32.gmra.mrb[0].mxu0 %v5010
        %v5091 = vpop.f32.mrb[0].mxu0
        %v5092 = vadd.f32 0.0, %v5091
        %v5093 = vpop.f32.mrb[0].mxu0
        %5094 = vmatprep.mubr.f32.mxu0 0.0
        %5095 = vmatmul.mubr.f32.gmra.mrb[0].mxu0 %v5013
        %v5096 = vpop.f32.mrb[0].mxu0
        %v5097 = vadd.f32 0.0, %v5096
        %v5098 = vpop.f32.mrb[0].mxu0
        %5099 = vdwg.mxu0
        %v5101 = vsel %vm3761, %v4898, 0
        %v5104 = vsel %vm3761, %v4899, 0
        %v5107 = vsel %vm3761, %v4900, 0
        %v5110 = vsel %vm3761, %v4901, 0
        %5112 = vmatprep.subr.mxu0 0.0
        %5113 = vmatpush1.msra.mxu0 %v3354
        %5114 = vmatprep.subr.mxu0 0.0
        %5115 = vmatpush1.msra.mxu0 %v3356
        %5116 = vmatprep.subr.mxu0 0.0
        %5117 = vmatpush1.msra.mxu0 0.0
        %5118 = vmatprep.subr.mxu0 0.0
        %5119 = vmatpush1.msra.mxu0 0.0
        %5120 = vmatprep.subr.mxu0 0.0
        %5121 = vmatpush1.msra.mxu0 0.0
        %5122 = vmatprep.subr.mxu0 0.0
        %5123 = vmatpush1.msra.mxu0 0.0
        %5124 = vmatprep.subr.mxu0 0.0
        %5125 = vmatpush1.msra.mxu0 0.0
        %5126 = vmatprep.subr.mxu0 0.0
        %5127 = vmatpush1.msra.mxu0 0.0
        %5128 = vmatprep.subr.mxu0 0.0
        %5129 = vmatpush1.msra.mxu0 0.0
        %5130 = vmatprep.subr.mxu0 0.0
        %5131 = vmatpush1.msra.mxu0 0.0
        %5132 = vmatprep.subr.mxu0 0.0
        %5133 = vmatpush1.msra.mxu0 0.0
        %5134 = vmatprep.subr.mxu0 0.0
        %5135 = vmatpush1.msra.mxu0 0.0
        %5136 = vmatprep.subr.mxu0 0.0
        %5137 = vmatpush1.msra.mxu0 0.0
        %5138 = vmatprep.subr.mxu0 0.0
        %5139 = vmatpush1.msra.mxu0 0.0
        %5140 = vmatprep.subr.mxu0 0.0
        %5141 = vmatpush1.msra.mxu0 0.0
        %5142 = vmatprep.subr.mxu0 0.0
        %5143 = vmatpush1.msra.mxu0 0.0
        %5144 = vmatprep.subr.mxu0 0.0
        %5145 = vmatpush1.msra.mxu0 0.0
        %5146 = vmatprep.subr.mxu0 0.0
        %5147 = vmatpush1.msra.mxu0 0.0
        %5148 = vmatprep.subr.mxu0 0.0
        %5149 = vmatpush1.msra.mxu0 0.0
        %5150 = vmatprep.subr.mxu0 0.0
        %5151 = vmatpush1.msra.mxu0 0.0
        %5152 = vmatprep.subr.mxu0 0.0
        %5153 = vmatpush1.msra.mxu0 0.0
        %5154 = vmatprep.subr.mxu0 0.0
        %5155 = vmatpush1.msra.mxu0 0.0
        %5156 = vmatprep.subr.mxu0 0.0
        %5157 = vmatpush1.msra.mxu0 0.0
        %5158 = vmatprep.subr.mxu0 0.0
        %5159 = vmatpush1.msra.mxu0 0.0
        %5160 = vmatprep.subr.mxu0 0.0
        %5161 = vmatpush1.msra.mxu0 0.0
        %5162 = vmatprep.subr.mxu0 0.0
        %5163 = vmatpush1.msra.mxu0 0.0
        %5164 = vmatprep.subr.mxu0 0.0
        %5165 = vmatpush1.msra.mxu0 0.0
        %5166 = vmatprep.subr.mxu0 0.0
        %5167 = vmatpush1.msra.mxu0 0.0
        %5168 = vmatprep.subr.mxu0 0.0
        %5169 = vmatpush1.msra.mxu0 0.0
        %5170 = vmatprep.subr.mxu0 0.0
        %5171 = vmatpush1.msra.mxu0 0.0
        %5172 = vmatprep.subr.mxu0 0.0
        %5173 = vmatpush1.msra.mxu0 0.0
        %5174 = vmatprep.subr.mxu0 0.0
        %5175 = vmatpush1.msra.mxu0 0.0
        %5176 = vmatprep.mubr.f32.mxu0 0.0
        %5177 = vmatmul.mubr.f32.gmra.mrb[0].mxu0 %v5101
        %v5178 = vpop.f32.mrb[0].mxu0
        %v5179 = vadd.f32 0.0, %v5178
        %v5180 = vpop.f32.mrb[0].mxu0
        %5181 = vmatprep.mubr.f32.mxu0 0.0
        %5182 = vmatmul.mubr.f32.gmra.mrb[0].mxu0 %v5104
        %v5183 = vpop.f32.mrb[0].mxu0
        %v5184 = vadd.f32 0.0, %v5183
        %v5185 = vpop.f32.mrb[0].mxu0
        %5186 = vmatprep.mubr.f32.mxu0 0.0
        %5187 = vmatmul.mubr.f32.gmra.mrb[0].mxu0 %v5107
        %v5188 = vpop.f32.mrb[0].mxu0
        %v5189 = vadd.f32 0.0, %v5188
        %v5190 = vpop.f32.mrb[0].mxu0
        %5191 = vmatprep.mubr.f32.mxu0 0.0
        %5192 = vmatmul.mubr.f32.gmra.mrb[0].mxu0 %v5110
        %v5193 = vpop.f32.mrb[0].mxu0
        %v5194 = vadd.f32 0.0, %v5193
        %v5195 = vpop.f32.mrb[0].mxu0
        %5196 = vdwg.mxu0
        %v5198 = vsel %vm3761, %v4902, 0
        %v5201 = vsel %vm3761, %v4903, 0
        %v5204 = vsel %vm3761, %v4904, 0
        %v5207 = vsel %vm3761, %v4905, 0
        %5209 = vmatprep.subr.mxu0 0.0
        %5210 = vmatpush1.msra.mxu0 %v3366
        %5211 = vmatprep.subr.mxu0 0.0
        %5212 = vmatpush1.msra.mxu0 %v3368
        %5213 = vmatprep.subr.mxu0 0.0
        %5214 = vmatpush1.msra.mxu0 0.0
        %5215 = vmatprep.subr.mxu0 0.0
        %5216 = vmatpush1.msra.mxu0 0.0
        %5217 = vmatprep.subr.mxu0 0.0
        %5218 = vmatpush1.msra.mxu0 0.0
        %5219 = vmatprep.subr.mxu0 0.0
        %5220 = vmatpush1.msra.mxu0 0.0
        %5221 = vmatprep.subr.mxu0 0.0
        %5222 = vmatpush1.msra.mxu0 0.0
        %5223 = vmatprep.subr.mxu0 0.0
        %5224 = vmatpush1.msra.mxu0 0.0
        %5225 = vmatprep.subr.mxu0 0.0
        %5226 = vmatpush1.msra.mxu0 0.0
        %5227 = vmatprep.subr.mxu0 0.0
        %5228 = vmatpush1.msra.mxu0 0.0
        %5229 = vmatprep.subr.mxu0 0.0
        %5230 = vmatpush1.msra.mxu0 0.0
        %5231 = vmatprep.subr.mxu0 0.0
        %5232 = vmatpush1.msra.mxu0 0.0
        %5233 = vmatprep.subr.mxu0 0.0
        %5234 = vmatpush1.msra.mxu0 0.0
        %5235 = vmatprep.subr.mxu0 0.0
        %5236 = vmatpush1.msra.mxu0 0.0
        %5237 = vmatprep.subr.mxu0 0.0
        %5238 = vmatpush1.msra.mxu0 0.0
        %5239 = vmatprep.subr.mxu0 0.0
        %5240 = vmatpush1.msra.mxu0 0.0
        %5241 = vmatprep.subr.mxu0 0.0
        %5242 = vmatpush1.msra.mxu0 0.0
        %5243 = vmatprep.subr.mxu0 0.0
        %5244 = vmatpush1.msra.mxu0 0.0
        %5245 = vmatprep.subr.mxu0 0.0
        %5246 = vmatpush1.msra.mxu0 0.0
        %5247 = vmatprep.subr.mxu0 0.0
        %5248 = vmatpush1.msra.mxu0 0.0
        %5249 = vmatprep.subr.mxu0 0.0
        %5250 = vmatpush1.msra.mxu0 0.0
        %5251 = vmatprep.subr.mxu0 0.0
        %5252 = vmatpush1.msra.mxu0 0.0
        %5253 = vmatprep.subr.mxu0 0.0
        %5254 = vmatpush1.msra.mxu0 0.0
        %5255 = vmatprep.subr.mxu0 0.0
        %5256 = vmatpush1.msra.mxu0 0.0
        %5257 = vmatprep.subr.mxu0 0.0
        %5258 = vmatpush1.msra.mxu0 0.0
        %5259 = vmatprep.subr.mxu0 0.0
        %5260 = vmatpush1.msra.mxu0 0.0
        %5261 = vmatprep.subr.mxu0 0.0
        %5262 = vmatpush1.msra.mxu0 0.0
        %5263 = vmatprep.subr.mxu0 0.0
        %5264 = vmatpush1.msra.mxu0 0.0
        %5265 = vmatprep.subr.mxu0 0.0
        %5266 = vmatpush1.msra.mxu0 0.0
        %5267 = vmatprep.subr.mxu0 0.0
        %5268 = vmatpush1.msra.mxu0 0.0
        %5269 = vmatprep.subr.mxu0 0.0
        %5270 = vmatpush1.msra.mxu0 0.0
        %5271 = vmatprep.subr.mxu0 0.0
        %5272 = vmatpush1.msra.mxu0 0.0
        %5273 = vmatprep.mubr.f32.mxu0 0.0
        %5274 = vmatmul.mubr.f32.gmra.mrb[0].mxu0 %v5198
        %v5275 = vpop.f32.mrb[0].mxu0
        %v5276 = vadd.f32 0.0, %v5275
        %v5277 = vpop.f32.mrb[0].mxu0
        %5278 = vmatprep.mubr.f32.mxu0 0.0
        %5279 = vmatmul.mubr.f32.gmra.mrb[0].mxu0 %v5201
        %v5280 = vpop.f32.mrb[0].mxu0
        %v5281 = vadd.f32 0.0, %v5280
        %v5282 = vpop.f32.mrb[0].mxu0
        %5283 = vmatprep.mubr.f32.mxu0 0.0
        %5284 = vmatmul.mubr.f32.gmra.mrb[0].mxu0 %v5204
        %v5285 = vpop.f32.mrb[0].mxu0
        %v5286 = vadd.f32 0.0, %v5285
        %v5287 = vpop.f32.mrb[0].mxu0
        %5288 = vmatprep.mubr.f32.mxu0 0.0
        %5289 = vmatmul.mubr.f32.gmra.mrb[0].mxu0 %v5207
        %v5290 = vpop.f32.mrb[0].mxu0
        %v5291 = vadd.f32 0.0, %v5290
        %v5292 = vpop.f32.mrb[0].mxu0
        %5293 = vdwg.mxu0
        %v5294 = vadd.f32 %v1042, %v4985
        %v5295 = vadd.f32 %v1047, %v4990
        %v5296 = vadd.f32 %v1052, %v4995
        %v5297 = vadd.f32 %v1057, %v5000
        %v5298 = vadd.f32 %v1308, %v5082
        %v5299 = vadd.f32 %v1310, %v5087
        %v5300 = vadd.f32 %v1312, %v5092
        %v5301 = vadd.f32 %v1314, %v5097
        %v5302 = vadd.f32 %v1332, %v5179
        %v5303 = vadd.f32 %v1334, %v5184
        %v5304 = vadd.f32 %v1336, %v5189
        %v5305 = vadd.f32 %v1338, %v5194
        %v5306 = vadd.f32 %v1356, %v5276
        %v5307 = vadd.f32 %v1358, %v5281
        %v5308 = vadd.f32 %v1360, %v5286
        %v5309 = vadd.f32 %v1362, %v5291
        %5318 = vrot.lane.b32.xlu0 %v4330, 32
        %v5319 = vpop.permute.xlu0 %5318
        %5320 = vrot.lane.b32.xlu0 %v4331, 32
        %v5321 = vpop.permute.xlu0 %5320
        %5322 = vrot.lane.b32.xlu0 %v4332, 32
        %v5323 = vpop.permute.xlu0 %5322
        %5324 = vrot.lane.b32.xlu0 %v4333, 32
        %v5325 = vpop.permute.xlu0 %5324
        %5326 = vrot.lane.b32.xlu0 %v5298, 32
        %v5327 = vpop.permute.xlu0 %5326
        %5328 = vrot.lane.b32.xlu0 %v5299, 32
        %v5329 = vpop.permute.xlu0 %5328
        %5330 = vrot.lane.b32.xlu0 %v5300, 32
        %v5331 = vpop.permute.xlu0 %5330
        %5332 = vrot.lane.b32.xlu0 %v5301, 32
        %v5333 = vpop.permute.xlu0 %5332
        %5350 = vrot.lane.b32.xlu0 %v4334, 64
        %v5351 = vpop.permute.xlu0 %5350
        %5352 = vrot.lane.b32.xlu0 %v4335, 64
        %v5353 = vpop.permute.xlu0 %5352
        %5354 = vrot.lane.b32.xlu0 %v4336, 64
        %v5355 = vpop.permute.xlu0 %5354
        %5356 = vrot.lane.b32.xlu0 %v4337, 64
        %v5357 = vpop.permute.xlu0 %5356
        %5358 = vrot.lane.b32.xlu0 %v5302, 64
        %v5359 = vpop.permute.xlu0 %5358
        %5360 = vrot.lane.b32.xlu0 %v5303, 64
        %v5361 = vpop.permute.xlu0 %5360
        %5362 = vrot.lane.b32.xlu0 %v5304, 64
        %v5363 = vpop.permute.xlu0 %5362
        %5364 = vrot.lane.b32.xlu0 %v5305, 64
        %v5365 = vpop.permute.xlu0 %5364
        %5382 = vrot.lane.b32.xlu0 %v4338, 96
        %v5383 = vpop.permute.xlu0 %5382
        %5384 = vrot.lane.b32.xlu0 %v4339, 96
        %v5385 = vpop.permute.xlu0 %5384
        %5386 = vrot.lane.b32.xlu0 %v4340, 96
        %v5387 = vpop.permute.xlu0 %5386
        %5388 = vrot.lane.b32.xlu0 %v4341, 96
        %v5389 = vpop.permute.xlu0 %5388
        %5390 = vrot.lane.b32.xlu0 %v5306, 96
        %v5391 = vpop.permute.xlu0 %5390
        %5392 = vrot.lane.b32.xlu0 %v5307, 96
        %v5393 = vpop.permute.xlu0 %5392
        %5394 = vrot.lane.b32.xlu0 %v5308, 96
        %v5395 = vpop.permute.xlu0 %5394
        %5396 = vrot.lane.b32.xlu0 %v5309, 96
        %v5397 = vpop.permute.xlu0 %5396
        %v5406 = vsel %vm1073, %v4326, %v5319
        %v5407 = vsel %vm1073, %v4327, %v5321
        %v5408 = vsel %vm1073, %v4328, %v5323
        %v5409 = vsel %vm1073, %v4329, %v5325
        %v5410 = vsel %vm1073, %v5294, %v5327
        %v5411 = vsel %vm1073, %v5295, %v5329
        %v5412 = vsel %vm1073, %v5296, %v5331
        %v5413 = vsel %vm1073, %v5297, %v5333
        %v5414 = vsel %vm2963, %v5406, %v5351
        %v5415 = vsel %vm2963, %v5407, %v5353
        %v5416 = vsel %vm2963, %v5408, %v5355
        %v5417 = vsel %vm2963, %v5409, %v5357
        %v5418 = vsel %vm2963, %v5410, %v5359
        %v5419 = vsel %vm2963, %v5411, %v5361
        %v5420 = vsel %vm2963, %v5412, %v5363
        %v5421 = vsel %vm2963, %v5413, %v5365
        %v5422 = vsel %vm2968, %v5414, %v5383
        %v5423 = vsel %vm2968, %v5415, %v5385
        %v5424 = vsel %vm2968, %v5416, %v5387
        %v5425 = vsel %vm2968, %v5417, %v5389
        %v5426 = vsel %vm2968, %v5418, %v5391
        %v5427 = vsel %vm2968, %v5419, %v5393
        %v5428 = vsel %vm2968, %v5420, %v5395
        %v5429 = vsel %vm2968, %v5421, %v5397
        %v5430 = vld [vmem:[#allocation13] sm:$0xff]
        %v5431 = vld [vmem:[#allocation13 + $0x8] sm:$0xff]
        %v5432 = vld [vmem:[#allocation13 + $0x10] sm:$0xff]
        %v5433 = vld [vmem:[#allocation13 + $0x18] sm:$0xff]
        %v5434 = vld [vmem:[#allocation13 + $0x20] sm:$0xff]
        %v5435 = vld [vmem:[#allocation13 + $0x28] sm:$0xff]
        %v5436 = vld [vmem:[#allocation13 + $0x30] sm:$0xff]
        %v5437 = vld [vmem:[#allocation13 + $0x38] sm:$0xff]
        %v5438 = vld [vmem:[#allocation13 + $0x40] sm:$0xff]
        %v5439 = vld [vmem:[#allocation13 + $0x48] sm:$0xff]
        %v5440 = vld [vmem:[#allocation13 + $0x50] sm:$0xff]
        %v5441 = vld [vmem:[#allocation13 + $0x58] sm:$0xff]
        %v5442 = vld [vmem:[#allocation13 + $0x60] sm:$0xff]
        %v5443 = vld [vmem:[#allocation13 + $0x68] sm:$0xff]
        %v5444 = vld [vmem:[#allocation13 + $0x70] sm:$0xff]
        %v5445 = vld [vmem:[#allocation13 + $0x78] sm:$0xff]
        %v5446 = vld [vmem:[%s17] sm:$0x1]
        %v5448 = vlaneseq
        %v5449 = vshrl.u32 %v5448, 7
        %v5450 = vsub.s32 0, %v5449
        %v5451 = vrot.slane %v5446, %v5450
        %5453 = vmatprep.subr.mxu0 0.0
        %5454 = vmatpush1.msra.mxu0 %v5430
        %5455 = vmatprep.subr.mxu0 0.0
        %5456 = vmatpush1.msra.mxu0 %v5431
        %5457 = vmatprep.subr.mxu0 0.0
        %5458 = vmatpush1.msra.mxu0 %v5432
        %5459 = vmatprep.subr.mxu0 0.0
        %5460 = vmatpush1.msra.mxu0 %v5433
        %5461 = vmatprep.subr.mxu0 0.0
        %5462 = vmatpush1.msra.mxu0 %v5434
        %5463 = vmatprep.subr.mxu0 0.0
        %5464 = vmatpush1.msra.mxu0 %v5435
        %5465 = vmatprep.subr.mxu0 0.0
        %5466 = vmatpush1.msra.mxu0 %v5436
        %5467 = vmatprep.subr.mxu0 0.0
        %5468 = vmatpush1.msra.mxu0 %v5437
        %5469 = vmatprep.subr.mxu0 0.0
        %5470 = vmatpush1.msra.mxu0 %v5438
        %5471 = vmatprep.subr.mxu0 0.0
        %5472 = vmatpush1.msra.mxu0 %v5439
        %5473 = vmatprep.subr.mxu0 0.0
        %5474 = vmatpush1.msra.mxu0 %v5440
        %5475 = vmatprep.subr.mxu0 0.0
        %5476 = vmatpush1.msra.mxu0 %v5441
        %5477 = vmatprep.subr.mxu0 0.0
        %5478 = vmatpush1.msra.mxu0 %v5442
        %5479 = vmatprep.subr.mxu0 0.0
        %5480 = vmatpush1.msra.mxu0 %v5443
        %5481 = vmatprep.subr.mxu0 0.0
        %5482 = vmatpush1.msra.mxu0 %v5444
        %5483 = vmatprep.subr.mxu0 0.0
        %5484 = vmatpush1.msra.mxu0 %v5445
        %5485 = vmatprep.subr.mxu0 0.0
        %5486 = vmatpush1.msra.mxu0 0.0
        %5487 = vmatprep.subr.mxu0 0.0
        %5488 = vmatpush1.msra.mxu0 0.0
        %5489 = vmatprep.subr.mxu0 0.0
        %5490 = vmatpush1.msra.mxu0 0.0
        %5491 = vmatprep.subr.mxu0 0.0
        %5492 = vmatpush1.msra.mxu0 0.0
        %5493 = vmatprep.subr.mxu0 0.0
        %5494 = vmatpush1.msra.mxu0 0.0
        %5495 = vmatprep.subr.mxu0 0.0
        %5496 = vmatpush1.msra.mxu0 0.0
        %5497 = vmatprep.subr.mxu0 0.0
        %5498 = vmatpush1.msra.mxu0 0.0
        %5499 = vmatprep.subr.mxu0 0.0
        %5500 = vmatpush1.msra.mxu0 0.0
        %5501 = vmatprep.subr.mxu0 0.0
        %5502 = vmatpush1.msra.mxu0 0.0
        %5503 = vmatprep.subr.mxu0 0.0
        %5504 = vmatpush1.msra.mxu0 0.0
        %5505 = vmatprep.subr.mxu0 0.0
        %5506 = vmatpush1.msra.mxu0 0.0
        %5507 = vmatprep.subr.mxu0 0.0
        %5508 = vmatpush1.msra.mxu0 0.0
        %5509 = vmatprep.subr.mxu0 0.0
        %5510 = vmatpush1.msra.mxu0 0.0
        %5511 = vmatprep.subr.mxu0 0.0
        %5512 = vmatpush1.msra.mxu0 0.0
        %5513 = vmatprep.subr.mxu0 0.0
        %5514 = vmatpush1.msra.mxu0 0.0
        %5515 = vmatprep.subr.mxu0 0.0
        %5516 = vmatpush1.msra.mxu0 0.0
        %5517 = vmatprep.mubr.f32.mxu0 0.0
        %5518 = vmatmul.mubr.f32.gmra.mrb[0].mxu0 %v5422
        %v5519 = vpop.f32.mrb[0].mxu0
        %v5520 = vadd.f32 %v5451, %v5519
        %v5521 = vpop.f32.mrb[0].mxu0
        %5522 = vmatprep.mubr.f32.mxu0 0.0
        %5523 = vmatmul.mubr.f32.gmra.mrb[0].mxu0 %v5423
        %v5524 = vpop.f32.mrb[0].mxu0
        %v5525 = vadd.f32 %v5451, %v5524
        %v5526 = vpop.f32.mrb[0].mxu0
        %5527 = vmatprep.mubr.f32.mxu0 0.0
        %5528 = vmatmul.mubr.f32.gmra.mrb[0].mxu0 %v5424
        %v5529 = vpop.f32.mrb[0].mxu0
        %v5530 = vadd.f32 %v5451, %v5529
        %v5531 = vpop.f32.mrb[0].mxu0
        %5532 = vmatprep.mubr.f32.mxu0 0.0
        %5533 = vmatmul.mubr.f32.gmra.mrb[0].mxu0 %v5425
        %v5534 = vpop.f32.mrb[0].mxu0
        %v5535 = vadd.f32 %v5451, %v5534
        %v5536 = vpop.f32.mrb[0].mxu0
        %5537 = vmatprep.mubr.f32.mxu0 0.0
        %5538 = vmatmul.mubr.f32.gmra.mrb[0].mxu0 %v5426
        %v5539 = vpop.f32.mrb[0].mxu0
        %v5540 = vadd.f32 %v5451, %v5539
        %v5541 = vpop.f32.mrb[0].mxu0
        %5542 = vmatprep.mubr.f32.mxu0 0.0
        %5543 = vmatmul.mubr.f32.gmra.mrb[0].mxu0 %v5427
        %v5544 = vpop.f32.mrb[0].mxu0
        %v5545 = vadd.f32 %v5451, %v5544
        %v5546 = vpop.f32.mrb[0].mxu0
        %5547 = vmatprep.mubr.f32.mxu0 0.0
        %5548 = vmatmul.mubr.f32.gmra.mrb[0].mxu0 %v5428
        %v5549 = vpop.f32.mrb[0].mxu0
        %v5550 = vadd.f32 %v5451, %v5549
        %v5551 = vpop.f32.mrb[0].mxu0
        %5552 = vmatprep.mubr.f32.mxu0 0.0
        %5553 = vmatmul.mubr.f32.gmra.mrb[0].mxu0 %v5429
        %v5554 = vpop.f32.mrb[0].mxu0
        %v5555 = vadd.f32 %v5451, %v5554
        %v5556 = vpop.f32.mrb[0].mxu0
        %5557 = vdwg.mxu0
        %v5558 = vmax.f32 %v5520, 0.0
        %v5559 = vmax.f32 %v5525, 0.0
        %v5560 = vmax.f32 %v5530, 0.0
        %v5561 = vmax.f32 %v5535, 0.0
        %v5562 = vmax.f32 %v5540, 0.0
        %v5563 = vmax.f32 %v5545, 0.0
        %v5564 = vmax.f32 %v5550, 0.0
        %v5565 = vmax.f32 %v5555, 0.0
        %v5566 = vadd.f32 %v5422, %v5558
        %v5567 = vadd.f32 %v5423, %v5559
        %v5568 = vadd.f32 %v5424, %v5560
        %v5569 = vadd.f32 %v5425, %v5561
        %v5570 = vadd.f32 %v5426, %v5562
        %v5571 = vadd.f32 %v5427, %v5563
        %v5572 = vadd.f32 %v5428, %v5564
        %v5573 = vadd.f32 %v5429, %v5565
        %5582 = vrot.lane.b32.xlu0 %v5566, 104
        %v5583 = vpop.permute.xlu0 %5582
        %5584 = vrot.lane.b32.xlu0 %v5567, 104
        %v5585 = vpop.permute.xlu0 %5584
        %5586 = vrot.lane.b32.xlu0 %v5568, 104
        %v5587 = vpop.permute.xlu0 %5586
        %5588 = vrot.lane.b32.xlu0 %v5569, 104
        %v5589 = vpop.permute.xlu0 %5588
        %5590 = vrot.lane.b32.xlu0 %v5570, 104
        %v5591 = vpop.permute.xlu0 %5590
        %5592 = vrot.lane.b32.xlu0 %v5571, 104
        %v5593 = vpop.permute.xlu0 %5592
        %5594 = vrot.lane.b32.xlu0 %v5572, 104
        %v5595 = vpop.permute.xlu0 %5594
        %5596 = vrot.lane.b32.xlu0 %v5573, 104
        %v5597 = vpop.permute.xlu0 %5596
        %5606 = vrot.lane.b32.xlu0 %v5566, 80
        %v5607 = vpop.permute.xlu0 %5606
        %5608 = vrot.lane.b32.xlu0 %v5567, 80
        %v5609 = vpop.permute.xlu0 %5608
        %5610 = vrot.lane.b32.xlu0 %v5568, 80
        %v5611 = vpop.permute.xlu0 %5610
        %5612 = vrot.lane.b32.xlu0 %v5569, 80
        %v5613 = vpop.permute.xlu0 %5612
        %5614 = vrot.lane.b32.xlu0 %v5570, 80
        %v5615 = vpop.permute.xlu0 %5614
        %5616 = vrot.lane.b32.xlu0 %v5571, 80
        %v5617 = vpop.permute.xlu0 %5616
        %5618 = vrot.lane.b32.xlu0 %v5572, 80
        %v5619 = vpop.permute.xlu0 %5618
        %5620 = vrot.lane.b32.xlu0 %v5573, 80
        %v5621 = vpop.permute.xlu0 %5620
        %5630 = vrot.lane.b32.xlu0 %v5566, 56
        %v5631 = vpop.permute.xlu0 %5630
        %5632 = vrot.lane.b32.xlu0 %v5567, 56
        %v5633 = vpop.permute.xlu0 %5632
        %5634 = vrot.lane.b32.xlu0 %v5568, 56
        %v5635 = vpop.permute.xlu0 %5634
        %5636 = vrot.lane.b32.xlu0 %v5569, 56
        %v5637 = vpop.permute.xlu0 %5636
        %5638 = vrot.lane.b32.xlu0 %v5570, 56
        %v5639 = vpop.permute.xlu0 %5638
        %5640 = vrot.lane.b32.xlu0 %v5571, 56
        %v5641 = vpop.permute.xlu0 %5640
        %5642 = vrot.lane.b32.xlu0 %v5572, 56
        %v5643 = vpop.permute.xlu0 %5642
        %5644 = vrot.lane.b32.xlu0 %v5573, 56
        %v5645 = vpop.permute.xlu0 %5644
        %v5654 = vsel %vm704, %v5566, %v5583
        %v5655 = vsel %vm704, %v5567, %v5585
        %v5656 = vsel %vm704, %v5568, %v5587
        %v5657 = vsel %vm704, %v5569, %v5589
        %v5658 = vsel %vm704, %v5570, %v5591
        %v5659 = vsel %vm704, %v5571, %v5593
        %v5660 = vsel %vm704, %v5572, %v5595
        %v5661 = vsel %vm704, %v5573, %v5597
        %v5662 = vsel %vm3761, %v5654, %v5607
        %v5663 = vsel %vm3761, %v5655, %v5609
        %v5664 = vsel %vm3761, %v5656, %v5611
        %v5665 = vsel %vm3761, %v5657, %v5613
        %v5666 = vsel %vm3761, %v5658, %v5615
        %v5667 = vsel %vm3761, %v5659, %v5617
        %v5668 = vsel %vm3761, %v5660, %v5619
        %v5669 = vsel %vm3761, %v5661, %v5621
        %vm5670 = vcmask 195584
        %v5671 = vsel %vm5670, %v5662, %v5631
        %v5672 = vsel %vm5670, %v5663, %v5633
        %v5673 = vsel %vm5670, %v5664, %v5635
        %v5674 = vsel %vm5670, %v5665, %v5637
        %v5675 = vsel %vm5670, %v5666, %v5639
        %v5676 = vsel %vm5670, %v5667, %v5641
        %v5677 = vsel %vm5670, %v5668, %v5643
        %v5678 = vsel %vm5670, %v5669, %v5645
        %5679 = vst.msk [vmem:[%s686] sm:$0xff] %vm1073, %v5671
        %5680 = vst.msk [vmem:[%s686 + $0x8] sm:$0xff] %vm1073, %v5672
        %5681 = vst.msk [vmem:[%s686 + $0x10] sm:$0xff] %vm1073, %v5673
        %5682 = vst.msk [vmem:[%s686 + $0x18] sm:$0xff] %vm1073, %v5674
        %5683 = vst.msk [vmem:[%s686 + $0x20] sm:$0xff] %vm1073, %v5675
        %5684 = vst.msk [vmem:[%s686 + $0x28] sm:$0xff] %vm1073, %v5676
        %5685 = vst.msk [vmem:[%s686 + $0x30] sm:$0xff] %vm1073, %v5677
        %5686 = vst.msk [vmem:[%s686 + $0x38] sm:$0xff] %vm1073, %v5678
        %s5687 = smul.u32 8, %s34
        %p5688 = scmp.lt.s32.totalorder %s5687, 15
        %s5689 = scalar_select %p5688, %s5687, 15
        %s5690 = smul.addr %s5689, 8
        %s5691 = scalar_lea.vmem %s18, %s5690
        // Predicated region
        $region125: #{tpu_custom_call.1} parent=91 // pred_check
          %p5692 = pneg %p435
        $region126: #{tpu_custom_call.1} parent=91 // pred_check_branch
          %5694 = sbr.rel (%p5692) target = $region128
        $region127: #{tpu_custom_call.1} parent=91 // pred_region
          %s5695 = smul.u32 8, %s34
        $region128: #{tpu_custom_call.1} parent=91 // pred_fallthru
          _
      $region92: #{tpu_custom_call.1} parent=5 // pred_fallthru
        _
      %p5696 = scmp.le.s32.totalorder 2, %s29
      // Predicated region
      $region129: #{tpu_custom_call.1} parent=5 // pred_check
        %p5697 = pneg %p5696
      $region130: #{tpu_custom_call.1} parent=5 // pred_check_branch
        %5699 = sbr.rel (%p5697) target = $region132
      $region131: #{tpu_custom_call.1} parent=5 // pred_region
        %s5700 = ssub.s32 %s29, 2
        // Predicated region
        $region133: #{tpu_custom_call.1} parent=131 // pred_check
          %p5701 = pneg %p441
        $region134: #{tpu_custom_call.1} parent=131 // pred_check_branch
          %5703 = sbr.rel (%p5701) target = $region136
        $region135: #{tpu_custom_call.1} parent=131 // pred_region
          %s5704 = smul.u32 8, %s35
          %p5705 = scmp.lt.s32.totalorder %s5704, 15
          %s5706 = scalar_select %p5705, %s5704, 15
          %s5707 = smul.addr %s5706, 8
          %s5708 = scalar_lea.vmem %s18, %s5707
        $region136: #{tpu_custom_call.1} parent=131 // pred_fallthru
          _
      $region132: #{tpu_custom_call.1} parent=5 // pred_fallthru
        _
    $region6: #{tpu_custom_call.1} parent=1 // loop_footer
      %s33 = sadd.s32 1, %s29
    $region7: #{tpu_custom_call.1} parent=1 // loop_footer_branch
      %28 = sbr.rel target = $region3
    $region8: #{tpu_custom_call.1} parent=1 // loop_exit
      _
    %5709 = vsyncpa [#allocation3], 1
    %s5710 = scalar_lea.sflag [#allocation3], 1
    %5711 = vsyncpa %s5710, 1
    %5712 = vsyncpa [#allocation5], 1
    %5713 = vsyncpa [#allocation8], 1
    %5714 = vsyncpa [#allocation11], 1
    %5715 = vsyncpa [#allocation14], 1

</llo_original>
